<compile_context>
chip_gen: v7x
topology: tpu7x:2x2x1
jax: 0.10.0
libtpu: 0.0.40
codegen_flags: <defaults>
</compile_context>

<pallas_src>
import functools

import jax
import jax.numpy as jnp
from jax import lax
from jax.experimental import pallas as pl
from jax.experimental.pallas import tpu as pltpu


# Optional MXU speedup: set to jnp.bfloat16 to feed all matmuls bf16 operands
# (f32 accumulation). ~3x MXU throughput + half the weight DMA bytes, but no
# longer bit-matches the reference f32 math.  Default keeps f32 numerics.
MATMUL_DTYPE = None


# ---------------------------------------------------------------------------
# capability probes (run once, eagerly, at import -- never under tracing)
# ---------------------------------------------------------------------------

def _probe(fn):
    try:
        return bool(fn())
    except Exception:
        return False


def _probe_single_buffering():
    # Is pipeline_mode=pl.Buffered(1) accepted (single-buffer constant operands)?
    def _k(x_ref, o_ref):
        o_ref[...] = x_ref[...] + 1.0

    f = pl.pallas_call(
        _k,
        out_shape=jax.ShapeDtypeStruct((8, 128), jnp.float32),
        grid=(2,),
        in_specs=[pl.BlockSpec((8, 128), lambda i: (0, 0),
                               pipeline_mode=pl.Buffered(1))],
        out_specs=pl.BlockSpec((8, 128), lambda i: (0, 0)),
    )
    out = jax.block_until_ready(f(jnp.ones((8, 128), jnp.float32)))
    return bool(jnp.allclose(out, 2.0))


def _probe_ref_lane_slice():
    # Can we load narrow, lane-offset head slices straight off a VMEM ref?
    def _k(x_ref, o_ref):
        start = pl.multiple_of(pl.program_id(0) * 8, 8)
        o_ref[0] = x_ref[0, pl.ds(start, 8), 40:48]

    f = pl.pallas_call(
        _k,
        out_shape=jax.ShapeDtypeStruct((1, 8, 8), jnp.float32),
        grid=(1,),
        in_specs=[pl.BlockSpec((1, 8, 96), lambda i: (0, 0, 0))],
        out_specs=pl.BlockSpec((1, 8, 8), lambda i: (0, 0, 0)),
    )
    x = jnp.arange(8 * 96, dtype=jnp.float32).reshape(1, 8, 96)
    out = jax.block_until_ready(f(x))
    return bool(jnp.allclose(out, x[:, 0:8, 40:48]))


_SINGLE_BUFFER_OK = _probe(_probe_single_buffering)
_REF_LANE_SLICE_OK = _probe(_probe_ref_lane_slice)


# ---------------------------------------------------------------------------
# helpers
# ---------------------------------------------------------------------------

def _round_up(x, m):
    return ((x + m - 1) // m) * m


def _row_tile(m, max_tile=512):
    """Row tile up to 512; grids are padded (pl.cdiv style), never TM=8 fallback."""
    if m <= max_tile:
        return _round_up(m, 8)
    n_tiles = pl.cdiv(m, max_tile)
    return _round_up(pl.cdiv(m, n_tiles), 8)


def _col_tile(f, max_tile=512):
    """F (=4E) tile for the MLP weight stream; 128-lane multiples, else full F."""
    for t in (max_tile, 384, 256, 128):
        if f % t == 0:
            return t
    return f


def _seq_tile(l, max_tile=256):
    """Query-row tile for attention kernels (keys/values stay full-length)."""
    for t in (max_tile, 128, 64):
        if l % t == 0:
            return t
    return l


@functools.lru_cache(maxsize=None)
def _vmem_limit_bytes():
    """Generation-aware VMEM budget: ~75% of physical VMEM, capped at 112 MiB.

    v5e/v6e (128 MiB physical) -> 96 MiB; v7x (64 MiB physical) -> 48 MiB.
    Falls back to the conservative v7x-safe 48 MiB if the query fails."""
    try:
        cap = int(pltpu.get_tpu_info().vmem_capacity_bytes)
    except Exception:
        cap = 0
    if cap <= 0:
        cap = 64 * 1024 * 1024
    return int(min(cap - cap // 4, 112 * 1024 * 1024))


def _cparams(semantics):
    return pltpu.CompilerParams(
        dimension_semantics=tuple(semantics),
        vmem_limit_bytes=_vmem_limit_bytes(),
    )


def _const_spec(shape):
    """BlockSpec for a grid-invariant operand (weights / biases / LN params).

    Single-buffered (pl.Buffered(1)) when supported: these blocks never change
    across grid steps, so double-buffering them only wastes VMEM."""
    ndim = len(shape)
    index_map = lambda *_: (0,) * ndim
    if _SINGLE_BUFFER_OK:
        return pl.BlockSpec(shape, index_map, pipeline_mode=pl.Buffered(1))
    return pl.BlockSpec(shape, index_map)


def _matmul(a, b, mm_dtype):
    if mm_dtype is not None:
        a = a.astype(mm_dtype)
        b = b.astype(mm_dtype)
    return jnp.dot(a, b, preferred_element_type=jnp.float32)


def _matmul_t(a, b, mm_dtype):
    # a @ b.T via dot_general (contract last dims) -- no explicit transpose.
    if mm_dtype is not None:
        a = a.astype(mm_dtype)
        b = b.astype(mm_dtype)
    return lax.dot_general(a, b, (((1,), (1,)), ((), ())),
                           preferred_element_type=jnp.float32)


# ---------------------------------------------------------------------------
# Pallas kernels
# ---------------------------------------------------------------------------

def _ln_proj_kernel(x_ref, g_ref, b_ref, w_ref, pb_ref, xln_ref, y_ref, *,
                    eps, mm_dtype):
    # Fused LayerNorm (f32) + Linear.  x: (TM, E), w: (E, F) pre-transposed.
    x = x_ref[...].astype(jnp.float32)
    mean = jnp.mean(x, axis=-1, keepdims=True)
    var = jnp.mean((x - mean) ** 2, axis=-1, keepdims=True)
    xln = (x - mean) * lax.rsqrt(var + eps)
    xln = xln * g_ref[...].astype(jnp.float32) + b_ref[...].astype(jnp.float32)
    xln_ref[...] = xln.astype(xln_ref.dtype)
    y = _matmul(xln, w_ref[...].astype(jnp.float32), mm_dtype)
    y = y + pb_ref[...].astype(jnp.float32)
    y_ref[...] = y.astype(y_ref.dtype)


def _self_attn_kernel(qkv_ref, res_ref, wo_ref, bo_ref, o_ref, *,
                      n_head, scale, mm_dtype, ref_slice):
    # One (batch element, query tile) per grid step.
    #   qkv_ref: (1, L, 3E) full keys/values; queries row-sliced below.
    #   res_ref: (1, TL, E) residual (post-LN x) for this query tile.
    E = res_ref.shape[-1]
    TL = res_ref.shape[-2]
    L = qkv_ref.shape[-2]
    Dh = E // n_head

    q_start = pl.program_id(1) * TL
    if TL % 8 == 0:
        q_start = pl.multiple_of(q_start, 8)

    if not ref_slice:
        # Fallback path: load the whole block once and slice the value.
        kv_val = qkv_ref[0].astype(jnp.float32)                     # (L, 3E)
        if TL == L:
            q_val = kv_val
        else:
            q_val = qkv_ref[0, pl.ds(q_start, TL), :].astype(jnp.float32)

    heads = []
    for h in range(n_head):                                         # static unroll
        lo = h * Dh
        if ref_slice:
            # Ref slices: only one head's q/k/v strips live in vregs at a time.
            qh = qkv_ref[0, pl.ds(q_start, TL), lo:lo + Dh].astype(jnp.float32)
            kh = qkv_ref[0, :, E + lo:E + lo + Dh].astype(jnp.float32)
            vh = qkv_ref[0, :, 2 * E + lo:2 * E + lo + Dh].astype(jnp.float32)
        else:
            qh = q_val[:, lo:lo + Dh]
            kh = kv_val[:, E + lo:E + lo + Dh]
            vh = kv_val[:, 2 * E + lo:2 * E + lo + Dh]
        qh = qh * scale
        s = _matmul_t(qh, kh, mm_dtype)                             # (TL, L)
        s = s - jnp.max(s, axis=-1, keepdims=True)
        p = jnp.exp(s)
        p = p / jnp.sum(p, axis=-1, keepdims=True)                  # exact softmax
        heads.append(_matmul(p, vh, mm_dtype))                      # (TL, Dh)

    attn = heads[0] if n_head == 1 else jnp.concatenate(heads, axis=-1)  # (TL, E)
    # ONE full-contraction (K=E) out_proj matmul instead of n_head K=Dh matmuls.
    out = _matmul(attn, wo_ref[...].astype(jnp.float32), mm_dtype)
    out = out + bo_ref[...].astype(jnp.float32) + res_ref[0].astype(jnp.float32)
    o_ref[0] = out.astype(o_ref.dtype)


def _cross_attn_kernel(q_ref, mem_ref, res_ref, wk_ref, bk_ref, wv_ref, bv_ref,
                       o_ref, k_sc, v_sc, *, scale, mm_dtype):
    # Single-head cross-attention (head_dim == E, no out_proj) + residual.
    # Memory K/V projected ONCE per batch element (first query tile) into VMEM.
    @pl.when(pl.program_id(1) == 0)
    def _():
        mem = mem_ref[0].astype(jnp.float32)                        # (S, E)
        k_sc[...] = (_matmul(mem, wk_ref[...].astype(jnp.float32), mm_dtype)
                     + bk_ref[...].astype(jnp.float32))
        v_sc[...] = (_matmul(mem, wv_ref[...].astype(jnp.float32), mm_dtype)
                     + bv_ref[...].astype(jnp.float32))

    q = q_ref[0].astype(jnp.float32) * scale                        # (TL, E)
    s = _matmul_t(q, k_sc[...], mm_dtype)                           # (TL, S)
    s = s - jnp.max(s, axis=-1, keepdims=True)
    p = jnp.exp(s)
    p = p / jnp.sum(p, axis=-1, keepdims=True)                      # exact softmax
    attn = _matmul(p, v_sc[...], mm_dtype)                          # (TL, E)
    o_ref[0] = (res_ref[0].astype(jnp.float32) + attn).astype(o_ref.dtype)


def _mlp_kernel(x_ref, g_ref, b_ref, wfc_ref, bfc_ref, wpr_ref, bpr_ref,
                o_ref, xln_sc, acc_sc, *, eps, mm_dtype):
    # Fused ln_2 -> c_fc -> QuickGELU -> c_proj -> + residual, F-tiled.
    # Grid: (row tiles, F tiles); the F axis streams weight slabs and is the
    # accumulation ('arbitrary') axis; residual + c_proj bias seed the accumulator.
    f = pl.program_id(1)

    @pl.when(f == 0)
    def _():
        x = x_ref[...].astype(jnp.float32)
        mean = jnp.mean(x, axis=-1, keepdims=True)
        var = jnp.mean((x - mean) ** 2, axis=-1, keepdims=True)
        xln = (x - mean) * lax.rsqrt(var + eps)
        xln_sc[...] = (xln * g_ref[...].astype(jnp.float32)
                       + b_ref[...].astype(jnp.float32))
        acc_sc[...] = x + bpr_ref[...].astype(jnp.float32)          # residual + c_proj bias

    h = _matmul(xln_sc[...], wfc_ref[...].astype(jnp.float32), mm_dtype)
    h = h + bfc_ref[...].astype(jnp.float32)                        # (TM, TF)
    h = h * jax.nn.sigmoid(1.702 * h)                               # QuickGELU
    acc_sc[...] = acc_sc[...] + _matmul(h, wpr_ref[...].astype(jnp.float32),
                                        mm_dtype)

    @pl.when(f == pl.num_programs(1) - 1)
    def _():
        o_ref[...] = acc_sc[...].astype(o_ref.dtype)


# ---------------------------------------------------------------------------
# Pallas wrappers
# ---------------------------------------------------------------------------

def ln_proj(x2d, gamma, beta, w, b, eps=1e-5):
    """x2d: (M, E); w: (E, F) pre-transposed. Returns (ln(x) (M,E), ln(x)@w+b (M,F))."""
    M, E = x2d.shape
    F = w.shape[1]
    TM = _row_tile(M)
    Mp = _round_up(M, TM)
    xp = jnp.pad(x2d, ((0, Mp - M), (0, 0))) if Mp != M else x2d
    kern = functools.partial(_ln_proj_kernel, eps=eps, mm_dtype=MATMUL_DTYPE)
    xln, y = pl.pallas_call(
        kern,
        out_shape=(jax.ShapeDtypeStruct((Mp, E), x2d.dtype),
                   jax.ShapeDtypeStruct((Mp, F), x2d.dtype)),
        grid=(Mp // TM,),
        in_specs=[
            pl.BlockSpec((TM, E), lambda i: (i, 0)),
            _const_spec((1, E)),
            _const_spec((1, E)),
            _const_spec((E, F)),
            _const_spec((1, F)),
        ],
        out_specs=(
            pl.BlockSpec((TM, E), lambda i: (i, 0)),
            pl.BlockSpec((TM, F), lambda i: (i, 0)),
        ),
        compiler_params=_cparams(("parallel",)),
    )(xp, gamma.reshape(1, E), beta.reshape(1, E), w, b.reshape(1, F))
    if Mp != M:
        xln, y = xln[:M], y[:M]
    return xln, y


def self_attention(qkv, res, w_out, b_out, n_head):
    """qkv: (N, L, 3E), res: (N, L, E) post-LN x. Returns res + out_proj(MHA)."""
    N, L, E3 = qkv.shape
    E = res.shape[-1]
    scale = float(E // n_head) ** -0.5
    TL = _seq_tile(L)
    n_qt = L // TL
    kern = functools.partial(_self_attn_kernel, n_head=n_head, scale=scale,
                             mm_dtype=MATMUL_DTYPE, ref_slice=_REF_LANE_SLICE_OK)
    # TODO(synk): for very long L a flash-style KV-tiled variant would avoid the
    # full (TL, L) score block; not needed at decoder-scale L.
    return pl.pallas_call(
        kern,
        out_shape=jax.ShapeDtypeStruct((N, L, E), res.dtype),
        grid=(N, n_qt),
        in_specs=[
            pl.BlockSpec((1, L, E3), lambda n, q: (n, 0, 0)),   # full K/V (re-DMA elided over q)
            pl.BlockSpec((1, TL, E), lambda n, q: (n, q, 0)),   # residual (post-LN x) tile
            _const_spec((E, E)),                                # out_proj weight
            _const_spec((1, E)),                                # out_proj bias
        ],
        out_specs=pl.BlockSpec((1, TL, E), lambda n, q: (n, q, 0)),
        compiler_params=_cparams(("parallel", "parallel")),
    )(qkv, res, w_out, b_out.reshape(1, E))


def cross_attention(q, memory, res, w_k, b_k, w_v, b_v):
    """q/res: (N, L, E), memory: (N, S, E). Returns res + single-head attn(q, memory)."""
    N, L, E = q.shape
    S = memory.shape[1]
    scale = float(E) ** -0.5
    TL = _seq_tile(L)
    n_qt = L // TL
    kern = functools.partial(_cross_attn_kernel, scale=scale, mm_dtype=MATMUL_DTYPE)
    return pl.pallas_call(
        kern,
        out_shape=jax.ShapeDtypeStruct((N, L, E), q.dtype),
        grid=(N, n_qt),
        in_specs=[
            pl.BlockSpec((1, TL, E), lambda n, qi: (n, qi, 0)),  # projected query tile
            pl.BlockSpec((1, S, E), lambda n, qi: (n, 0, 0)),    # memory (full)
            pl.BlockSpec((1, TL, E), lambda n, qi: (n, qi, 0)),  # residual tile
            _const_spec((E, E)),                                 # k proj weight
            _const_spec((1, E)),                                 # k proj bias
            _const_spec((E, E)),                                 # v proj weight
            _const_spec((1, E)),                                 # v proj bias
        ],
        out_specs=pl.BlockSpec((1, TL, E), lambda n, qi: (n, qi, 0)),
        scratch_shapes=[pltpu.VMEM((S, E), jnp.float32),         # projected K
                        pltpu.VMEM((S, E), jnp.float32)],        # projected V
        compiler_params=_cparams(("parallel", "arbitrary")),
    )(q, memory, res, w_k, b_k.reshape(1, E), w_v, b_v.reshape(1, E))


def mlp_block(x2d, gamma, beta, w_fc, b_fc, w_proj, b_proj, eps=1e-5):
    """Fused ln_2 + MLP + residual over flat rows; 4E hidden dim streamed in tiles."""
    M, E = x2d.shape
    F = w_fc.shape[1]
    TM = _row_tile(M)
    TF = _col_tile(F)
    Mp = _round_up(M, TM)
    xp = jnp.pad(x2d, ((0, Mp - M), (0, 0))) if Mp != M else x2d
    kern = functools.partial(_mlp_kernel, eps=eps, mm_dtype=MATMUL_DTYPE)
    out = pl.pallas_call(
        kern,
        out_shape=jax.ShapeDtypeStruct((Mp, E), x2d.dtype),
        grid=(Mp // TM, F // TF),
        in_specs=[
            pl.BlockSpec((TM, E), lambda i, f: (i, 0)),
            _const_spec((1, E)),
            _const_spec((1, E)),
            pl.BlockSpec((E, TF), lambda i, f: (0, f)),          # c_fc weight slab (streamed)
            pl.BlockSpec((1, TF), lambda i, f: (0, f)),          # c_fc bias slab
            pl.BlockSpec((TF, E), lambda i, f: (f, 0)),          # c_proj weight slab (streamed)
            _const_spec((1, E)),                                 # c_proj bias
        ],
        out_specs=pl.BlockSpec((TM, E), lambda i, f: (i, 0)),
        scratch_shapes=[pltpu.VMEM((TM, E), jnp.float32),        # cached ln_2(x)
                        pltpu.VMEM((TM, E), jnp.float32)],       # c_proj accumulator
        compiler_params=_cparams(("parallel", "arbitrary")),
    )(xp, gamma.reshape(1, E), beta.reshape(1, E),
      w_fc, b_fc.reshape(1, F), w_proj, b_proj.reshape(1, E))
    return out[:M] if Mp != M else out


# ---------------------------------------------------------------------------
# Decoder (batch-first (N, L, E) internally; no per-layer transposes)
# ---------------------------------------------------------------------------

def decoder_layer(x, memory, p, n_head):
    # x: (N, L, E), memory: (N, S, E)
    N, L, E = x.shape
    M = N * L

    # A) ln_1 + packed QKV projection (residual for self-attn is the post-LN x).
    x_ln, qkv = ln_proj(x.reshape(M, E), p["ln_1_g"], p["ln_1_b"],
                        p["attn_in_proj_wT"], p["attn_in_proj_b"])

    # B) multi-head self-attention + full-K out_proj + residual.
    x = self_attention(qkv.reshape(N, L, 3 * E), x_ln.reshape(N, L, E),
                       p["attn_out_proj_wT"], p["attn_out_proj_b"], n_head)

    # C) ln_cross_attn + Q projection (residual is the post-LN x again).
    x2_ln, q_ca = ln_proj(x.reshape(M, E), p["ln_ca_g"], p["ln_ca_b"],
                          p["ca_q_wT"], p["ca_q_b"])

    # D) single-head cross-attention (memory K/V projected in-kernel) + residual.
    x = cross_attention(q_ca.reshape(N, L, E), memory, x2_ln.reshape(N, L, E),
                        p["ca_k_wT"], p["ca_k_b"], p["ca_v_wT"], p["ca_v_b"])

    # E) fused ln_2 + MLP + residual (residual is the pre-LN x here).
    x = mlp_block(x.reshape(M, E), p["ln_2_g"], p["ln_2_b"],
                  p["c_fc_wT"], p["c_fc_b"], p["c_proj_wT"], p["c_proj_b"])
    return x.reshape(N, L, E)


def transformer_decoder(x, memory, params, n_head):
    """x: (L, N, E), memory: (S, N, E) in PyTorch layout. Masks are None (defaults)."""
    # TODO(synk): optional attn_mask / memory_mask / key_padding_mask paths not wired
    # in (all None in this configuration); dropout_p == 0.0 so dropout is a no-op.
    xb = jnp.transpose(x, (1, 0, 2))        # (N, L, E)  -- single transpose at entry
    mb = jnp.transpose(memory, (1, 0, 2))   # (N, S, E)
    for p in params:
        xb = decoder_layer(xb, mb, p, n_head)
    return jnp.transpose(xb, (1, 0, 2))     # back to (L, N, E)


# ---------------------------------------------------------------------------
# Deterministic parameter init (xavier-uniform weights, zero biases),
# stored pre-transposed (in, out) so no transposes happen per forward pass.
# ---------------------------------------------------------------------------

def _xavier(key, shape):
    fan_out, fan_in = shape
    bound = (6.0 / (fan_in + fan_out)) ** 0.5
    return jax.random.uniform(key, shape, jnp.float32, -bound, bound)


def init_params(key, width, layers):
    E = width
    params = []
    for _ in range(layers):
        keys = jax.random.split(key, 9)
        key = keys[0]
        attn_in_proj_w = _xavier(keys[1], (3 * E, E))     # torch (out, in) layout
        attn_out_proj_w = _xavier(keys[2], (E, E))
        ca_q_w = _xavier(keys[3], (E, E))
        ca_k_w = _xavier(keys[4], (E, E))
        ca_v_w = _xavier(keys[5], (E, E))
        c_fc_w = _xavier(keys[6], (4 * E, E))
        c_proj_w = _xavier(keys[7], (E, 4 * E))
        ca_in_proj_b = jnp.zeros((3 * E,), jnp.float32)
        p = {
            # self-attention (nn.MultiheadAttention), weights pre-transposed to (in, out)
            "attn_in_proj_wT": jnp.transpose(attn_in_proj_w),       # (E, 3E)
            "attn_in_proj_b": jnp.zeros((3 * E,), jnp.float32),
            "attn_out_proj_wT": jnp.transpose(attn_out_proj_w),     # (E, E)
            "attn_out_proj_b": jnp.zeros((E,), jnp.float32),
            # cross-attention (SingleheadAttention): q / k / v projections
            "ca_q_wT": jnp.transpose(ca_q_w),                       # (E, E)
            "ca_q_b": ca_in_proj_b[:E],
            "ca_k_wT": jnp.transpose(ca_k_w),                       # (E, E)
            "ca_k_b": ca_in_proj_b[E:2 * E],
            "ca_v_wT": jnp.transpose(ca_v_w),                       # (E, E)
            "ca_v_b": ca_in_proj_b[2 * E:],
            # MLP
            "c_fc_wT": jnp.transpose(c_fc_w),                       # (E, 4E)
            "c_fc_b": jnp.zeros((4 * E,), jnp.float32),
            "c_proj_wT": jnp.transpose(c_proj_w),                   # (4E, E)
            "c_proj_b": jnp.zeros((E,), jnp.float32),
            # LayerNorms
            "ln_1_g": jnp.ones((E,), jnp.float32),
            "ln_1_b": jnp.zeros((E,), jnp.float32),
            "ln_ca_g": jnp.ones((E,), jnp.float32),
            "ln_ca_b": jnp.zeros((E,), jnp.float32),
            "ln_2_g": jnp.ones((E,), jnp.float32),
            "ln_2_b": jnp.zeros((E,), jnp.float32),
        }
        params.append(p)
    return params


# ---------------------------------------------------------------------------

if __name__ == "__main__":
    L, S, N, E, H, LAYERS = 8, 8, 2, 32, 4, 2   # tgt_len, src_len, batch, width, heads, layers
    key = jax.random.PRNGKey(0)
    kx, km, kp = jax.random.split(key, 3)
    x = jax.random.normal(kx, (L, N, E), jnp.float32)        # (L, N, E) like PyTorch
    memory = jax.random.normal(km, (S, N, E), jnp.float32)   # (S, N, E)
    params = init_params(kp, E, LAYERS)

    fwd = jax.jit(functools.partial(transformer_decoder, n_head=H))
    out = jax.block_until_ready(fwd(x, memory, params))
    assert out.shape == (L, N, E)
    assert bool(jnp.all(jnp.isfinite(out)))
    print("KERNEL_OK")
</pallas_src>

<mosaic_0001>
module attributes {stable_mosaic.version = 11 : i64} {
  func.func @_k(%arg0: i32, %arg1: memref<8x128xf32, #tpu.memory_space<vmem>>, %arg2: memref<8x128xf32, #tpu.memory_space<vmem>>) attributes {dimension_semantics = [#tpu.dimension_semantics<arbitrary>], iteration_bounds = array<i64: 2>, scalar_prefetch = 0 : i64, scratch_operands = 0 : i64, tpu.core_type = #tpu.core_type<tc>, window_params = [{pipeline_mode = #tpu.pipeline_mode<synchronous>, transform_indices = @transform_0, window_bounds = array<i64: 8, 128>}, {pipeline_mode = #tpu.pipeline_mode<synchronous>, transform_indices = @transform_1, window_bounds = array<i64: 8, 128>}]} {
    %c0 = arith.constant 0 : index
    %c0_0 = arith.constant 0 : index
    %0 = vector.load %arg1[%c0, %c0_0] : memref<8x128xf32, #tpu.memory_space<vmem>>, vector<8x128xf32>
    %cst = arith.constant 1.000000e+00 : f32
    %1 = vector.broadcast %cst : f32 to vector<8x128xf32>
    %2 = arith.addf %0, %1 : vector<8x128xf32>
    %c0_1 = arith.constant 0 : index
    %c0_2 = arith.constant 0 : index
    %3 = vector.load %arg2[%c0_1, %c0_2] : memref<8x128xf32, #tpu.memory_space<vmem>>, vector<8x128xf32>
    tpu.vector_store %arg2[%c0_1, %c0_2], %2 {strides = array<i32>} : memref<8x128xf32, #tpu.memory_space<vmem>>, vector<8x128xf32>,
    return
  }
  func.func @transform_0(%arg0: i32) -> (i32, i32) {
    %c0_i32 = arith.constant 0 : i32
    %c0_i32_0 = arith.constant 0 : i32
    %c0_i32_1 = arith.constant 0 : i32
    return %c0_i32, %c0_i32_0 : i32, i32
  }
  func.func @transform_1(%arg0: i32) -> (i32, i32) {
    %c0_i32 = arith.constant 0 : i32
    %c0_i32_0 = arith.constant 0 : i32
    %c0_i32_1 = arith.constant 0 : i32
    return %c0_i32, %c0_i32_0 : i32, i32
  }
}

module attributes {stable_mosaic.version = 11 : i64} {
  func.func @_k(%arg0: i32, %arg1: memref<1x8x96xf32, #tpu.memory_space<vmem>>, %arg2: memref<1x8x8xf32, #tpu.memory_space<vmem>>) attributes {dimension_semantics = [#tpu.dimension_semantics<arbitrary>], iteration_bounds = array<i64: 1>, scalar_prefetch = 0 : i64, scratch_operands = 0 : i64, tpu.core_type = #tpu.core_type<tc>, window_params = [{pipeline_mode = #tpu.pipeline_mode<synchronous>, transform_indices = @transform_0, window_bounds = array<i64: 1, 8, 96>}, {pipeline_mode = #tpu.pipeline_mode<synchronous>, transform_indices = @transform_1, window_bounds = array<i64: 1, 8, 8>}]} {
    %c8_i32 = arith.constant 8 : i32
    %0 = arith.muli %arg0, %c8_i32 : i32
    %1 = tpu.assume_multiple %0, 8 : i32
    %c0 = arith.constant 0 : index
    %2 = arith.index_cast %1 : i32 to index
    %c40 = arith.constant 40 : index
    %3 = vector.load %arg1[%c0, %2, %c40] : memref<1x8x96xf32, #tpu.memory_space<vmem>>, vector<1x8x8xf32>
    %4 = vector.shape_cast %3 : vector<1x8x8xf32> to vector<8x8xf32>
    %c0_0 = arith.constant 0 : index
    %c0_1 = arith.constant 0 : index
    %c0_2 = arith.constant 0 : index
    %5 = vector.load %arg2[%c0_0, %c0_1, %c0_2] : memref<1x8x8xf32, #tpu.memory_space<vmem>>, vector<1x8x8xf32>
    %6 = vector.shape_cast %5 : vector<1x8x8xf32> to vector<8x8xf32>
    %7 = vector.shape_cast %4 : vector<8x8xf32> to vector<1x8x8xf32>
    tpu.vector_store %arg2[%c0_0, %c0_1, %c0_2], %7 {strides = array<i32>} : memref<1x8x8xf32, #tpu.memory_space<vmem>>, vector<1x8x8xf32>,
    return
  }
  func.func @transform_0(%arg0: i32) -> (i32, i32, i32) {
    %c0_i32 = arith.constant 0 : i32
    %c0_i32_0 = arith.constant 0 : i32
    %c0_i32_1 = arith.constant 0 : i32
    %c0_i32_2 = arith.constant 0 : i32
    return %c0_i32, %c0_i32_0, %c0_i32_1 : i32, i32, i32
  }
  func.func @transform_1(%arg0: i32) -> (i32, i32, i32) {
    %c0_i32 = arith.constant 0 : i32
    %c0_i32_0 = arith.constant 0 : i32
    %c0_i32_1 = arith.constant 0 : i32
    %c0_i32_2 = arith.constant 0 : i32
    return %c0_i32, %c0_i32_0, %c0_i32_1 : i32, i32, i32
  }
}

module attributes {stable_mosaic.version = 11 : i64} {
  func.func @_ln_proj_kernel(%arg0: i32, %arg1: memref<16x32xf32, #tpu.memory_space<vmem>>, %arg2: memref<1x32xf32, #tpu.memory_space<vmem>>, %arg3: memref<1x32xf32, #tpu.memory_space<vmem>>, %arg4: memref<32x96xf32, #tpu.memory_space<vmem>>, %arg5: memref<1x96xf32, #tpu.memory_space<vmem>>, %arg6: memref<16x32xf32, #tpu.memory_space<vmem>>, %arg7: memref<16x96xf32, #tpu.memory_space<vmem>>) attributes {dimension_semantics = [#tpu.dimension_semantics<parallel>], iteration_bounds = array<i64: 1>, scalar_prefetch = 0 : i64, scratch_operands = 0 : i64, tpu.core_type = #tpu.core_type<tc>, window_params = [{transform_indices = @transform_0, window_bounds = array<i64: 16, 32>}, {pipeline_mode = #tpu.pipeline_mode<synchronous>, transform_indices = @transform_1, window_bounds = array<i64: 1, 32>}, {pipeline_mode = #tpu.pipeline_mode<synchronous>, transform_indices = @transform_2, window_bounds = array<i64: 1, 32>}, {pipeline_mode = #tpu.pipeline_mode<synchronous>, transform_indices = @transform_3, window_bounds = array<i64: 32, 96>}, {pipeline_mode = #tpu.pipeline_mode<synchronous>, transform_indices = @transform_4, window_bounds = array<i64: 1, 96>}, {transform_indices = @transform_5, window_bounds = array<i64: 16, 32>}, {transform_indices = @transform_6, window_bounds = array<i64: 16, 96>}]} {
    %c0 = arith.constant 0 : index
    %c0_0 = arith.constant 0 : index
    %0 = vector.load %arg1[%c0, %c0_0] : memref<16x32xf32, #tpu.memory_space<vmem>>, vector<16x32xf32>
    %cst = arith.constant dense<0.000000e+00> : vector<16xf32>
    %1 = vector.multi_reduction <add>, %0, %cst [1] : vector<16x32xf32> to vector<16xf32>
    %2 = vector.shape_cast %1 : vector<16xf32> to vector<16x1xf32>
    %cst_1 = arith.constant 3.200000e+01 : f32
    %3 = vector.broadcast %cst_1 : f32 to vector<16x1xf32>
    %4 = arith.divf %2, %3 : vector<16x1xf32>
    %5 = vector.broadcast %4 : vector<16x1xf32> to vector<16x32xf32>
    %6 = arith.subf %0, %5 : vector<16x32xf32>
    %7 = arith.mulf %6, %6 : vector<16x32xf32>
    %cst_2 = arith.constant dense<0.000000e+00> : vector<16xf32>
    %8 = vector.multi_reduction <add>, %7, %cst_2 [1] : vector<16x32xf32> to vector<16xf32>
    %9 = vector.shape_cast %8 : vector<16xf32> to vector<16x1xf32>
    %cst_3 = arith.constant 3.200000e+01 : f32
    %10 = vector.broadcast %cst_3 : f32 to vector<16x1xf32>
    %11 = arith.divf %9, %10 : vector<16x1xf32>
    %12 = vector.broadcast %4 : vector<16x1xf32> to vector<16x32xf32>
    %13 = arith.subf %0, %12 : vector<16x32xf32>
    %cst_4 = arith.constant 9.99999974E-6 : f32
    %14 = vector.broadcast %cst_4 : f32 to vector<16x1xf32>
    %15 = arith.addf %11, %14 : vector<16x1xf32>
    %16 = math.rsqrt %15 : vector<16x1xf32>
    %17 = vector.broadcast %16 : vector<16x1xf32> to vector<16x32xf32>
    %18 = arith.mulf %13, %17 : vector<16x32xf32>
    %c0_5 = arith.constant 0 : index
    %c0_6 = arith.constant 0 : index
    %19 = vector.load %arg2[%c0_5, %c0_6] : memref<1x32xf32, #tpu.memory_space<vmem>>, vector<1x32xf32>
    %20 = vector.broadcast %19 : vector<1x32xf32> to vector<16x32xf32>
    %21 = arith.mulf %18, %20 : vector<16x32xf32>
    %c0_7 = arith.constant 0 : index
    %c0_8 = arith.constant 0 : index
    %22 = vector.load %arg3[%c0_7, %c0_8] : memref<1x32xf32, #tpu.memory_space<vmem>>, vector<1x32xf32>
    %23 = vector.broadcast %22 : vector<1x32xf32> to vector<16x32xf32>
    %24 = arith.addf %21, %23 : vector<16x32xf32>
    %c0_9 = arith.constant 0 : index
    %c0_10 = arith.constant 0 : index
    %25 = vector.load %arg6[%c0_9, %c0_10] : memref<16x32xf32, #tpu.memory_space<vmem>>, vector<16x32xf32>
    tpu.vector_store %arg6[%c0_9, %c0_10], %24 {strides = array<i32>} : memref<16x32xf32, #tpu.memory_space<vmem>>, vector<16x32xf32>,
    %c0_11 = arith.constant 0 : index
    %c0_12 = arith.constant 0 : index
    %26 = vector.load %arg4[%c0_11, %c0_12] : memref<32x96xf32, #tpu.memory_space<vmem>>, vector<32x96xf32>
    %cst_13 = arith.constant dense<0.000000e+00> : vector<16x96xf32>
    %27 = tpu.matmul %24, %26, %cst_13 {dimension_numbers = #tpu.dot_dimension_numbers<[1], [0], [0], [1], [0, 0, 1, 1], [], []>} : vector<16x32xf32>, vector<32x96xf32>, vector<16x96xf32> -> vector<16x96xf32>
    %c0_14 = arith.constant 0 : index
    %c0_15 = arith.constant 0 : index
    %28 = vector.load %arg5[%c0_14, %c0_15] : memref<1x96xf32, #tpu.memory_space<vmem>>, vector<1x96xf32>
    %29 = vector.broadcast %28 : vector<1x96xf32> to vector<16x96xf32>
    %30 = arith.addf %27, %29 : vector<16x96xf32>
    %c0_16 = arith.constant 0 : index
    %c0_17 = arith.constant 0 : index
    %31 = vector.load %arg7[%c0_16, %c0_17] : memref<16x96xf32, #tpu.memory_space<vmem>>, vector<16x96xf32>
    tpu.vector_store %arg7[%c0_16, %c0_17], %30 {strides = array<i32>} : memref<16x96xf32, #tpu.memory_space<vmem>>, vector<16x96xf32>,
    return
  }
  func.func @transform_0(%arg0: i32) -> (i32, i32) {
    %c0_i32 = arith.constant 0 : i32
    %c0_i32_0 = arith.constant 0 : i32
    return %arg0, %c0_i32 : i32, i32
  }
  func.func @transform_1(%arg0: i32) -> (i32, i32) {
    %c0_i32 = arith.constant 0 : i32
    %c0_i32_0 = arith.constant 0 : i32
    %c0_i32_1 = arith.constant 0 : i32
    return %c0_i32, %c0_i32_0 : i32, i32
  }
  func.func @transform_2(%arg0: i32) -> (i32, i32) {
    %c0_i32 = arith.constant 0 : i32
    %c0_i32_0 = arith.constant 0 : i32
    %c0_i32_1 = arith.constant 0 : i32
    return %c0_i32, %c0_i32_0 : i32, i32
  }
  func.func @transform_3(%arg0: i32) -> (i32, i32) {
    %c0_i32 = arith.constant 0 : i32
    %c0_i32_0 = arith.constant 0 : i32
    %c0_i32_1 = arith.constant 0 : i32
    return %c0_i32, %c0_i32_0 : i32, i32
  }
  func.func @transform_4(%arg0: i32) -> (i32, i32) {
    %c0_i32 = arith.constant 0 : i32
    %c0_i32_0 = arith.constant 0 : i32
    %c0_i32_1 = arith.constant 0 : i32
    return %c0_i32, %c0_i32_0 : i32, i32
  }
  func.func @transform_5(%arg0: i32) -> (i32, i32) {
    %c0_i32 = arith.constant 0 : i32
    %c0_i32_0 = arith.constant 0 : i32
    return %arg0, %c0_i32 : i32, i32
  }
  func.func @transform_6(%arg0: i32) -> (i32, i32) {
    %c0_i32 = arith.constant 0 : i32
    %c0_i32_0 = arith.constant 0 : i32
    return %arg0, %c0_i32 : i32, i32
  }
}

module attributes {stable_mosaic.version = 11 : i64} {
  func.func @_self_attn_kernel(%arg0: i32, %arg1: i32, %arg2: memref<1x8x96xf32, #tpu.memory_space<vmem>>, %arg3: memref<1x8x32xf32, #tpu.memory_space<vmem>>, %arg4: memref<32x32xf32, #tpu.memory_space<vmem>>, %arg5: memref<1x32xf32, #tpu.memory_space<vmem>>, %arg6: memref<1x8x32xf32, #tpu.memory_space<vmem>>) attributes {dimension_semantics = [#tpu.dimension_semantics<parallel>, #tpu.dimension_semantics<parallel>], iteration_bounds = array<i64: 2, 1>, scalar_prefetch = 0 : i64, scratch_operands = 0 : i64, tpu.core_type = #tpu.core_type<tc>, window_params = [{transform_indices = @transform_0, window_bounds = array<i64: 1, 8, 96>}, {transform_indices = @transform_1, window_bounds = array<i64: 1, 8, 32>}, {pipeline_mode = #tpu.pipeline_mode<synchronous>, transform_indices = @transform_2, window_bounds = array<i64: 32, 32>}, {pipeline_mode = #tpu.pipeline_mode<synchronous>, transform_indices = @transform_3, window_bounds = array<i64: 1, 32>}, {transform_indices = @transform_4, window_bounds = array<i64: 1, 8, 32>}]} {
    %c0 = arith.constant 0 : index
    %c0_0 = arith.constant 0 : index
    %c0_1 = arith.constant 0 : index
    %0 = vector.load %arg2[%c0, %c0_0, %c0_1] : memref<1x8x96xf32, #tpu.memory_space<vmem>>, vector<1x8x96xf32>
    %1 = vector.shape_cast %0 : vector<1x8x96xf32> to vector<8x96xf32>
    %2 = vector.extract_strided_slice %1 {offsets = [0, 0], sizes = [8, 8], strides = [1, 1]} : vector<8x96xf32> to vector<8x8xf32>
    %3 = vector.extract_strided_slice %1 {offsets = [0, 32], sizes = [8, 8], strides = [1, 1]} : vector<8x96xf32> to vector<8x8xf32>
    %4 = vector.extract_strided_slice %1 {offsets = [0, 64], sizes = [8, 8], strides = [1, 1]} : vector<8x96xf32> to vector<8x8xf32>
    %cst = arith.constant 0.353553385 : f32
    %5 = vector.broadcast %cst : f32 to vector<8x8xf32>
    %6 = arith.mulf %2, %5 : vector<8x8xf32>
    %cst_2 = arith.constant dense<0.000000e+00> : vector<8x8xf32>
    %7 = tpu.matmul %6, %3, %cst_2 {dimension_numbers = #tpu.dot_dimension_numbers<[1], [1], [0], [0], [0, 0, 1, 0], [], []>} : vector<8x8xf32>, vector<8x8xf32>, vector<8x8xf32> -> vector<8x8xf32>
    %cst_3 = arith.constant dense<0xFF800000> : vector<8xf32>
    %8 = vector.multi_reduction <maximumf>, %7, %cst_3 [1] : vector<8x8xf32> to vector<8xf32>
    %9 = vector.shape_cast %8 : vector<8xf32> to vector<8x1xf32>
    %10 = vector.broadcast %9 : vector<8x1xf32> to vector<8x8xf32>
    %11 = arith.subf %7, %10 : vector<8x8xf32>
    %12 = math.exp %11 : vector<8x8xf32>
    %cst_4 = arith.constant dense<0.000000e+00> : vector<8xf32>
    %13 = vector.multi_reduction <add>, %12, %cst_4 [1] : vector<8x8xf32> to vector<8xf32>
    %14 = vector.shape_cast %13 : vector<8xf32> to vector<8x1xf32>
    %15 = vector.broadcast %14 : vector<8x1xf32> to vector<8x8xf32>
    %16 = arith.divf %12, %15 : vector<8x8xf32>
    %cst_5 = arith.constant dense<0.000000e+00> : vector<8x8xf32>
    %17 = tpu.matmul %16, %4, %cst_5 {dimension_numbers = #tpu.dot_dimension_numbers<[1], [0], [0], [1], [0, 0, 1, 1], [], []>} : vector<8x8xf32>, vector<8x8xf32>, vector<8x8xf32> -> vector<8x8xf32>
    %18 = vector.extract_strided_slice %1 {offsets = [0, 8], sizes = [8, 8], strides = [1, 1]} : vector<8x96xf32> to vector<8x8xf32>
    %19 = vector.extract_strided_slice %1 {offsets = [0, 40], sizes = [8, 8], strides = [1, 1]} : vector<8x96xf32> to vector<8x8xf32>
    %20 = vector.extract_strided_slice %1 {offsets = [0, 72], sizes = [8, 8], strides = [1, 1]} : vector<8x96xf32> to vector<8x8xf32>
    %cst_6 = arith.constant 0.353553385 : f32
    %21 = vector.broadcast %cst_6 : f32 to vector<8x8xf32>
    %22 = arith.mulf %18, %21 : vector<8x8xf32>
    %cst_7 = arith.constant dense<0.000000e+00> : vector<8x8xf32>
    %23 = tpu.matmul %22, %19, %cst_7 {dimension_numbers = #tpu.dot_dimension_numbers<[1], [1], [0], [0], [0, 0, 1, 0], [], []>} : vector<8x8xf32>, vector<8x8xf32>, vector<8x8xf32> -> vector<8x8xf32>
    %cst_8 = arith.constant dense<0xFF800000> : vector<8xf32>
    %24 = vector.multi_reduction <maximumf>, %23, %cst_8 [1] : vector<8x8xf32> to vector<8xf32>
    %25 = vector.shape_cast %24 : vector<8xf32> to vector<8x1xf32>
    %26 = vector.broadcast %25 : vector<8x1xf32> to vector<8x8xf32>
    %27 = arith.subf %23, %26 : vector<8x8xf32>
    %28 = math.exp %27 : vector<8x8xf32>
    %cst_9 = arith.constant dense<0.000000e+00> : vector<8xf32>
    %29 = vector.multi_reduction <add>, %28, %cst_9 [1] : vector<8x8xf32> to vector<8xf32>
    %30 = vector.shape_cast %29 : vector<8xf32> to vector<8x1xf32>
    %31 = vector.broadcast %30 : vector<8x1xf32> to vector<8x8xf32>
    %32 = arith.divf %28, %31 : vector<8x8xf32>
    %cst_10 = arith.constant dense<0.000000e+00> : vector<8x8xf32>
    %33 = tpu.matmul %32, %20, %cst_10 {dimension_numbers = #tpu.dot_dimension_numbers<[1], [0], [0], [1], [0, 0, 1, 1], [], []>} : vector<8x8xf32>, vector<8x8xf32>, vector<8x8xf32> -> vector<8x8xf32>
    %34 = vector.extract_strided_slice %1 {offsets = [0, 16], sizes = [8, 8], strides = [1, 1]} : vector<8x96xf32> to vector<8x8xf32>
    %35 = vector.extract_strided_slice %1 {offsets = [0, 48], sizes = [8, 8], strides = [1, 1]} : vector<8x96xf32> to vector<8x8xf32>
    %36 = vector.extract_strided_slice %1 {offsets = [0, 80], sizes = [8, 8], strides = [1, 1]} : vector<8x96xf32> to vector<8x8xf32>
    %cst_11 = arith.constant 0.353553385 : f32
    %37 = vector.broadcast %cst_11 : f32 to vector<8x8xf32>
    %38 = arith.mulf %34, %37 : vector<8x8xf32>
    %cst_12 = arith.constant dense<0.000000e+00> : vector<8x8xf32>
    %39 = tpu.matmul %38, %35, %cst_12 {dimension_numbers = #tpu.dot_dimension_numbers<[1], [1], [0], [0], [0, 0, 1, 0], [], []>} : vector<8x8xf32>, vector<8x8xf32>, vector<8x8xf32> -> vector<8x8xf32>
    %cst_13 = arith.constant dense<0xFF800000> : vector<8xf32>
    %40 = vector.multi_reduction <maximumf>, %39, %cst_13 [1] : vector<8x8xf32> to vector<8xf32>
    %41 = vector.shape_cast %40 : vector<8xf32> to vector<8x1xf32>
    %42 = vector.broadcast %41 : vector<8x1xf32> to vector<8x8xf32>
    %43 = arith.subf %39, %42 : vector<8x8xf32>
    %44 = math.exp %43 : vector<8x8xf32>
    %cst_14 = arith.constant dense<0.000000e+00> : vector<8xf32>
    %45 = vector.multi_reduction <add>, %44, %cst_14 [1] : vector<8x8xf32> to vector<8xf32>
    %46 = vector.shape_cast %45 : vector<8xf32> to vector<8x1xf32>
    %47 = vector.broadcast %46 : vector<8x1xf32> to vector<8x8xf32>
    %48 = arith.divf %44, %47 : vector<8x8xf32>
    %cst_15 = arith.constant dense<0.000000e+00> : vector<8x8xf32>
    %49 = tpu.matmul %48, %36, %cst_15 {dimension_numbers = #tpu.dot_dimension_numbers<[1], [0], [0], [1], [0, 0, 1, 1], [], []>} : vector<8x8xf32>, vector<8x8xf32>, vector<8x8xf32> -> vector<8x8xf32>
    %50 = vector.extract_strided_slice %1 {offsets = [0, 24], sizes = [8, 8], strides = [1, 1]} : vector<8x96xf32> to vector<8x8xf32>
    %51 = vector.extract_strided_slice %1 {offsets = [0, 56], sizes = [8, 8], strides = [1, 1]} : vector<8x96xf32> to vector<8x8xf32>
    %52 = vector.extract_strided_slice %1 {offsets = [0, 88], sizes = [8, 8], strides = [1, 1]} : vector<8x96xf32> to vector<8x8xf32>
    %cst_16 = arith.constant 0.353553385 : f32
    %53 = vector.broadcast %cst_16 : f32 to vector<8x8xf32>
    %54 = arith.mulf %50, %53 : vector<8x8xf32>
    %cst_17 = arith.constant dense<0.000000e+00> : vector<8x8xf32>
    %55 = tpu.matmul %54, %51, %cst_17 {dimension_numbers = #tpu.dot_dimension_numbers<[1], [1], [0], [0], [0, 0, 1, 0], [], []>} : vector<8x8xf32>, vector<8x8xf32>, vector<8x8xf32> -> vector<8x8xf32>
    %cst_18 = arith.constant dense<0xFF800000> : vector<8xf32>
    %56 = vector.multi_reduction <maximumf>, %55, %cst_18 [1] : vector<8x8xf32> to vector<8xf32>
    %57 = vector.shape_cast %56 : vector<8xf32> to vector<8x1xf32>
    %58 = vector.broadcast %57 : vector<8x1xf32> to vector<8x8xf32>
    %59 = arith.subf %55, %58 : vector<8x8xf32>
    %60 = math.exp %59 : vector<8x8xf32>
    %cst_19 = arith.constant dense<0.000000e+00> : vector<8xf32>
    %61 = vector.multi_reduction <add>, %60, %cst_19 [1] : vector<8x8xf32> to vector<8xf32>
    %62 = vector.shape_cast %61 : vector<8xf32> to vector<8x1xf32>
    %63 = vector.broadcast %62 : vector<8x1xf32> to vector<8x8xf32>
    %64 = arith.divf %60, %63 : vector<8x8xf32>
    %cst_20 = arith.constant dense<0.000000e+00> : vector<8x8xf32>
    %65 = tpu.matmul %64, %52, %cst_20 {dimension_numbers = #tpu.dot_dimension_numbers<[1], [0], [0], [1], [0, 0, 1, 1], [], []>} : vector<8x8xf32>, vector<8x8xf32>, vector<8x8xf32> -> vector<8x8xf32>
    %66 = tpu.concatenate %17, %33, %49, %65 in 1 : vector<8x8xf32>, vector<8x8xf32>, vector<8x8xf32>, vector<8x8xf32> -> vector<8x32xf32>
    %c0_21 = arith.constant 0 : index
    %c0_22 = arith.constant 0 : index
    %67 = vector.load %arg4[%c0_21, %c0_22] : memref<32x32xf32, #tpu.memory_space<vmem>>, vector<32x32xf32>
    %cst_23 = arith.constant dense<0.000000e+00> : vector<8x32xf32>
    %68 = tpu.matmul %66, %67, %cst_23 {dimension_numbers = #tpu.dot_dimension_numbers<[1], [0], [0], [1], [0, 0, 1, 1], [], []>} : vector<8x32xf32>, vector<32x32xf32>, vector<8x32xf32> -> vector<8x32xf32>
    %c0_24 = arith.constant 0 : index
    %c0_25 = arith.constant 0 : index
    %69 = vector.load %arg5[%c0_24, %c0_25] : memref<1x32xf32, #tpu.memory_space<vmem>>, vector<1x32xf32>
    %70 = vector.broadcast %69 : vector<1x32xf32> to vector<8x32xf32>
    %71 = arith.addf %68, %70 : vector<8x32xf32>
    %c0_26 = arith.constant 0 : index
    %c0_27 = arith.constant 0 : index
    %c0_28 = arith.constant 0 : index
    %72 = vector.load %arg3[%c0_26, %c0_27, %c0_28] : memref<1x8x32xf32, #tpu.memory_space<vmem>>, vector<1x8x32xf32>
    %73 = vector.shape_cast %72 : vector<1x8x32xf32> to vector<8x32xf32>
    %74 = arith.addf %71, %73 : vector<8x32xf32>
    %c0_29 = arith.constant 0 : index
    %c0_30 = arith.constant 0 : index
    %c0_31 = arith.constant 0 : index
    %75 = vector.load %arg6[%c0_29, %c0_30, %c0_31] : memref<1x8x32xf32, #tpu.memory_space<vmem>>, vector<1x8x32xf32>
    %76 = vector.shape_cast %75 : vector<1x8x32xf32> to vector<8x32xf32>
    %77 = vector.shape_cast %74 : vector<8x32xf32> to vector<1x8x32xf32>
    tpu.vector_store %arg6[%c0_29, %c0_30, %c0_31], %77 {strides = array<i32>} : memref<1x8x32xf32, #tpu.memory_space<vmem>>, vector<1x8x32xf32>,
    return
  }
  func.func @transform_0(%arg0: i32, %arg1: i32) -> (i32, i32, i32) {
    %c0_i32 = arith.constant 0 : i32
    %c0_i32_0 = arith.constant 0 : i32
    %c0_i32_1 = arith.constant 0 : i32
    return %arg0, %c0_i32, %c0_i32_0 : i32, i32, i32
  }
  func.func @transform_1(%arg0: i32, %arg1: i32) -> (i32, i32, i32) {
    %c0_i32 = arith.constant 0 : i32
    %c0_i32_0 = arith.constant 0 : i32
    return %arg0, %arg1, %c0_i32 : i32, i32, i32
  }
  func.func @transform_2(%arg0: i32, %arg1: i32) -> (i32, i32) {
    %c0_i32 = arith.constant 0 : i32
    %c0_i32_0 = arith.constant 0 : i32
    %c0_i32_1 = arith.constant 0 : i32
    return %c0_i32, %c0_i32_0 : i32, i32
  }
  func.func @transform_3(%arg0: i32, %arg1: i32) -> (i32, i32) {
    %c0_i32 = arith.constant 0 : i32
    %c0_i32_0 = arith.constant 0 : i32
    %c0_i32_1 = arith.constant 0 : i32
    return %c0_i32, %c0_i32_0 : i32, i32
  }
  func.func @transform_4(%arg0: i32, %arg1: i32) -> (i32, i32, i32) {
    %c0_i32 = arith.constant 0 : i32
    %c0_i32_0 = arith.constant 0 : i32
    return %arg0, %arg1, %c0_i32 : i32, i32, i32
  }
}

module attributes {stable_mosaic.version = 11 : i64} {
  func.func @_ln_proj_kernel(%arg0: i32, %arg1: memref<16x32xf32, #tpu.memory_space<vmem>>, %arg2: memref<1x32xf32, #tpu.memory_space<vmem>>, %arg3: memref<1x32xf32, #tpu.memory_space<vmem>>, %arg4: memref<32x32xf32, #tpu.memory_space<vmem>>, %arg5: memref<1x32xf32, #tpu.memory_space<vmem>>, %arg6: memref<16x32xf32, #tpu.memory_space<vmem>>, %arg7: memref<16x32xf32, #tpu.memory_space<vmem>>) attributes {dimension_semantics = [#tpu.dimension_semantics<parallel>], iteration_bounds = array<i64: 1>, scalar_prefetch = 0 : i64, scratch_operands = 0 : i64, tpu.core_type = #tpu.core_type<tc>, window_params = [{transform_indices = @transform_0, window_bounds = array<i64: 16, 32>}, {pipeline_mode = #tpu.pipeline_mode<synchronous>, transform_indices = @transform_1, window_bounds = array<i64: 1, 32>}, {pipeline_mode = #tpu.pipeline_mode<synchronous>, transform_indices = @transform_2, window_bounds = array<i64: 1, 32>}, {pipeline_mode = #tpu.pipeline_mode<synchronous>, transform_indices = @transform_3, window_bounds = array<i64: 32, 32>}, {pipeline_mode = #tpu.pipeline_mode<synchronous>, transform_indices = @transform_4, window_bounds = array<i64: 1, 32>}, {transform_indices = @transform_5, window_bounds = array<i64: 16, 32>}, {transform_indices = @transform_6, window_bounds = array<i64: 16, 32>}]} {
    %c0 = arith.constant 0 : index
    %c0_0 = arith.constant 0 : index
    %0 = vector.load %arg1[%c0, %c0_0] : memref<16x32xf32, #tpu.memory_space<vmem>>, vector<16x32xf32>
    %cst = arith.constant dense<0.000000e+00> : vector<16xf32>
    %1 = vector.multi_reduction <add>, %0, %cst [1] : vector<16x32xf32> to vector<16xf32>
    %2 = vector.shape_cast %1 : vector<16xf32> to vector<16x1xf32>
    %cst_1 = arith.constant 3.200000e+01 : f32
    %3 = vector.broadcast %cst_1 : f32 to vector<16x1xf32>
    %4 = arith.divf %2, %3 : vector<16x1xf32>
    %5 = vector.broadcast %4 : vector<16x1xf32> to vector<16x32xf32>
    %6 = arith.subf %0, %5 : vector<16x32xf32>
    %7 = arith.mulf %6, %6 : vector<16x32xf32>
    %cst_2 = arith.constant dense<0.000000e+00> : vector<16xf32>
    %8 = vector.multi_reduction <add>, %7, %cst_2 [1] : vector<16x32xf32> to vector<16xf32>
    %9 = vector.shape_cast %8 : vector<16xf32> to vector<16x1xf32>
    %cst_3 = arith.constant 3.200000e+01 : f32
    %10 = vector.broadcast %cst_3 : f32 to vector<16x1xf32>
    %11 = arith.divf %9, %10 : vector<16x1xf32>
    %12 = vector.broadcast %4 : vector<16x1xf32> to vector<16x32xf32>
    %13 = arith.subf %0, %12 : vector<16x32xf32>
    %cst_4 = arith.constant 9.99999974E-6 : f32
    %14 = vector.broadcast %cst_4 : f32 to vector<16x1xf32>
    %15 = arith.addf %11, %14 : vector<16x1xf32>
    %16 = math.rsqrt %15 : vector<16x1xf32>
    %17 = vector.broadcast %16 : vector<16x1xf32> to vector<16x32xf32>
    %18 = arith.mulf %13, %17 : vector<16x32xf32>
    %c0_5 = arith.constant 0 : index
    %c0_6 = arith.constant 0 : index
    %19 = vector.load %arg2[%c0_5, %c0_6] : memref<1x32xf32, #tpu.memory_space<vmem>>, vector<1x32xf32>
    %20 = vector.broadcast %19 : vector<1x32xf32> to vector<16x32xf32>
    %21 = arith.mulf %18, %20 : vector<16x32xf32>
    %c0_7 = arith.constant 0 : index
    %c0_8 = arith.constant 0 : index
    %22 = vector.load %arg3[%c0_7, %c0_8] : memref<1x32xf32, #tpu.memory_space<vmem>>, vector<1x32xf32>
    %23 = vector.broadcast %22 : vector<1x32xf32> to vector<16x32xf32>
    %24 = arith.addf %21, %23 : vector<16x32xf32>
    %c0_9 = arith.constant 0 : index
    %c0_10 = arith.constant 0 : index
    %25 = vector.load %arg6[%c0_9, %c0_10] : memref<16x32xf32, #tpu.memory_space<vmem>>, vector<16x32xf32>
    tpu.vector_store %arg6[%c0_9, %c0_10], %24 {strides = array<i32>} : memref<16x32xf32, #tpu.memory_space<vmem>>, vector<16x32xf32>,
    %c0_11 = arith.constant 0 : index
    %c0_12 = arith.constant 0 : index
    %26 = vector.load %arg4[%c0_11, %c0_12] : memref<32x32xf32, #tpu.memory_space<vmem>>, vector<32x32xf32>
    %cst_13 = arith.constant dense<0.000000e+00> : vector<16x32xf32>
    %27 = tpu.matmul %24, %26, %cst_13 {dimension_numbers = #tpu.dot_dimension_numbers<[1], [0], [0], [1], [0, 0, 1, 1], [], []>} : vector<16x32xf32>, vector<32x32xf32>, vector<16x32xf32> -> vector<16x32xf32>
    %c0_14 = arith.constant 0 : index
    %c0_15 = arith.constant 0 : index
    %28 = vector.load %arg5[%c0_14, %c0_15] : memref<1x32xf32, #tpu.memory_space<vmem>>, vector<1x32xf32>
    %29 = vector.broadcast %28 : vector<1x32xf32> to vector<16x32xf32>
    %30 = arith.addf %27, %29 : vector<16x32xf32>
    %c0_16 = arith.constant 0 : index
    %c0_17 = arith.constant 0 : index
    %31 = vector.load %arg7[%c0_16, %c0_17] : memref<16x32xf32, #tpu.memory_space<vmem>>, vector<16x32xf32>
    tpu.vector_store %arg7[%c0_16, %c0_17], %30 {strides = array<i32>} : memref<16x32xf32, #tpu.memory_space<vmem>>, vector<16x32xf32>,
    return
  }
  func.func @transform_0(%arg0: i32) -> (i32, i32) {
    %c0_i32 = arith.constant 0 : i32
    %c0_i32_0 = arith.constant 0 : i32
    return %arg0, %c0_i32 : i32, i32
  }
  func.func @transform_1(%arg0: i32) -> (i32, i32) {
    %c0_i32 = arith.constant 0 : i32
    %c0_i32_0 = arith.constant 0 : i32
    %c0_i32_1 = arith.constant 0 : i32
    return %c0_i32, %c0_i32_0 : i32, i32
  }
  func.func @transform_2(%arg0: i32) -> (i32, i32) {
    %c0_i32 = arith.constant 0 : i32
    %c0_i32_0 = arith.constant 0 : i32
    %c0_i32_1 = arith.constant 0 : i32
    return %c0_i32, %c0_i32_0 : i32, i32
  }
  func.func @transform_3(%arg0: i32) -> (i32, i32) {
    %c0_i32 = arith.constant 0 : i32
    %c0_i32_0 = arith.constant 0 : i32
    %c0_i32_1 = arith.constant 0 : i32
    return %c0_i32, %c0_i32_0 : i32, i32
  }
  func.func @transform_4(%arg0: i32) -> (i32, i32) {
    %c0_i32 = arith.constant 0 : i32
    %c0_i32_0 = arith.constant 0 : i32
    %c0_i32_1 = arith.constant 0 : i32
    return %c0_i32, %c0_i32_0 : i32, i32
  }
  func.func @transform_5(%arg0: i32) -> (i32, i32) {
    %c0_i32 = arith.constant 0 : i32
    %c0_i32_0 = arith.constant 0 : i32
    return %arg0, %c0_i32 : i32, i32
  }
  func.func @transform_6(%arg0: i32) -> (i32, i32) {
    %c0_i32 = arith.constant 0 : i32
    %c0_i32_0 = arith.constant 0 : i32
    return %arg0, %c0_i32 : i32, i32
  }
}

module attributes {stable_mosaic.version = 11 : i64} {
  func.func @_cross_attn_kernel(%arg0: i32, %arg1: i32, %arg2: memref<1x8x32xf32, #tpu.memory_space<vmem>>, %arg3: memref<1x8x32xf32, #tpu.memory_space<vmem>>, %arg4: memref<1x8x32xf32, #tpu.memory_space<vmem>>, %arg5: memref<32x32xf32, #tpu.memory_space<vmem>>, %arg6: memref<1x32xf32, #tpu.memory_space<vmem>>, %arg7: memref<32x32xf32, #tpu.memory_space<vmem>>, %arg8: memref<1x32xf32, #tpu.memory_space<vmem>>, %arg9: memref<1x8x32xf32, #tpu.memory_space<vmem>>, %arg10: memref<8x32xf32, #tpu.memory_space<vmem>>, %arg11: memref<8x32xf32, #tpu.memory_space<vmem>>) attributes {dimension_semantics = [#tpu.dimension_semantics<parallel>, #tpu.dimension_semantics<arbitrary>], iteration_bounds = array<i64: 2, 1>, scalar_prefetch = 0 : i64, scratch_operands = 2 : i64, tpu.core_type = #tpu.core_type<tc>, window_params = [{transform_indices = @transform_0, window_bounds = array<i64: 1, 8, 32>}, {transform_indices = @transform_1, window_bounds = array<i64: 1, 8, 32>}, {transform_indices = @transform_2, window_bounds = array<i64: 1, 8, 32>}, {pipeline_mode = #tpu.pipeline_mode<synchronous>, transform_indices = @transform_3, window_bounds = array<i64: 32, 32>}, {pipeline_mode = #tpu.pipeline_mode<synchronous>, transform_indices = @transform_4, window_bounds = array<i64: 1, 32>}, {pipeline_mode = #tpu.pipeline_mode<synchronous>, transform_indices = @transform_5, window_bounds = array<i64: 32, 32>}, {pipeline_mode = #tpu.pipeline_mode<synchronous>, transform_indices = @transform_6, window_bounds = array<i64: 1, 32>}, {transform_indices = @transform_7, window_bounds = array<i64: 1, 8, 32>}]} {
    %c0_i32 = arith.constant 0 : i32
    %0 = arith.cmpi eq, %arg1, %c0_i32 : i32
    %1 = arith.extui %0 : i1 to i32
    %c0_i32_0 = arith.constant 0 : i32
    %2 = arith.cmpi ne, %1, %c0_i32_0 : i32
    scf.if %2 {
      %c0_17 = arith.constant 0 : index
      %c0_18 = arith.constant 0 : index
      %c0_19 = arith.constant 0 : index
      %26 = vector.load %arg3[%c0_17, %c0_18, %c0_19] : memref<1x8x32xf32, #tpu.memory_space<vmem>>, vector<1x8x32xf32>
      %27 = vector.shape_cast %26 : vector<1x8x32xf32> to vector<8x32xf32>
      %c0_20 = arith.constant 0 : index
      %c0_21 = arith.constant 0 : index
      %28 = vector.load %arg5[%c0_20, %c0_21] : memref<32x32xf32, #tpu.memory_space<vmem>>, vector<32x32xf32>
      %cst_22 = arith.constant dense<0.000000e+00> : vector<8x32xf32>
      %29 = tpu.matmul %27, %28, %cst_22 {dimension_numbers = #tpu.dot_dimension_numbers<[1], [0], [0], [1], [0, 0, 1, 1], [], []>} : vector<8x32xf32>, vector<32x32xf32>, vector<8x32xf32> -> vector<8x32xf32>
      %c0_23 = arith.constant 0 : index
      %c0_24 = arith.constant 0 : index
      %30 = vector.load %arg6[%c0_23, %c0_24] : memref<1x32xf32, #tpu.memory_space<vmem>>, vector<1x32xf32>
      %31 = vector.broadcast %30 : vector<1x32xf32> to vector<8x32xf32>
      %32 = arith.addf %29, %31 : vector<8x32xf32>
      %c0_25 = arith.constant 0 : index
      %c0_26 = arith.constant 0 : index
      %33 = vector.load %arg10[%c0_25, %c0_26] : memref<8x32xf32, #tpu.memory_space<vmem>>, vector<8x32xf32>
      tpu.vector_store %arg10[%c0_25, %c0_26], %32 {strides = array<i32>} : memref<8x32xf32, #tpu.memory_space<vmem>>, vector<8x32xf32>,
      %c0_27 = arith.constant 0 : index
      %c0_28 = arith.constant 0 : index
      %34 = vector.load %arg7[%c0_27, %c0_28] : memref<32x32xf32, #tpu.memory_space<vmem>>, vector<32x32xf32>
      %cst_29 = arith.constant dense<0.000000e+00> : vector<8x32xf32>
      %35 = tpu.matmul %27, %34, %cst_29 {dimension_numbers = #tpu.dot_dimension_numbers<[1], [0], [0], [1], [0, 0, 1, 1], [], []>} : vector<8x32xf32>, vector<32x32xf32>, vector<8x32xf32> -> vector<8x32xf32>
      %c0_30 = arith.constant 0 : index
      %c0_31 = arith.constant 0 : index
      %36 = vector.load %arg8[%c0_30, %c0_31] : memref<1x32xf32, #tpu.memory_space<vmem>>, vector<1x32xf32>
      %37 = vector.broadcast %36 : vector<1x32xf32> to vector<8x32xf32>
      %38 = arith.addf %35, %37 : vector<8x32xf32>
      %c0_32 = arith.constant 0 : index
      %c0_33 = arith.constant 0 : index
      %39 = vector.load %arg11[%c0_32, %c0_33] : memref<8x32xf32, #tpu.memory_space<vmem>>, vector<8x32xf32>
      tpu.vector_store %arg11[%c0_32, %c0_33], %38 {strides = array<i32>} : memref<8x32xf32, #tpu.memory_space<vmem>>, vector<8x32xf32>,
    } else {
    }
    %c0 = arith.constant 0 : index
    %c0_1 = arith.constant 0 : index
    %c0_2 = arith.constant 0 : index
    %3 = vector.load %arg2[%c0, %c0_1, %c0_2] : memref<1x8x32xf32, #tpu.memory_space<vmem>>, vector<1x8x32xf32>
    %4 = vector.shape_cast %3 : vector<1x8x32xf32> to vector<8x32xf32>
    %cst = arith.constant 0.176776692 : f32
    %5 = vector.broadcast %cst : f32 to vector<8x32xf32>
    %6 = arith.mulf %4, %5 : vector<8x32xf32>
    %c0_3 = arith.constant 0 : index
    %c0_4 = arith.constant 0 : index
    %7 = vector.load %arg10[%c0_3, %c0_4] : memref<8x32xf32, #tpu.memory_space<vmem>>, vector<8x32xf32>
    %cst_5 = arith.constant dense<0.000000e+00> : vector<8x8xf32>
    %8 = tpu.matmul %6, %7, %cst_5 {dimension_numbers = #tpu.dot_dimension_numbers<[1], [1], [0], [0], [0, 0, 1, 0], [], []>} : vector<8x32xf32>, vector<8x32xf32>, vector<8x8xf32> -> vector<8x8xf32>
    %cst_6 = arith.constant dense<0xFF800000> : vector<8xf32>
    %9 = vector.multi_reduction <maximumf>, %8, %cst_6 [1] : vector<8x8xf32> to vector<8xf32>
    %10 = vector.shape_cast %9 : vector<8xf32> to vector<8x1xf32>
    %11 = vector.broadcast %10 : vector<8x1xf32> to vector<8x8xf32>
    %12 = arith.subf %8, %11 : vector<8x8xf32>
    %13 = math.exp %12 : vector<8x8xf32>
    %cst_7 = arith.constant dense<0.000000e+00> : vector<8xf32>
    %14 = vector.multi_reduction <add>, %13, %cst_7 [1] : vector<8x8xf32> to vector<8xf32>
    %15 = vector.shape_cast %14 : vector<8xf32> to vector<8x1xf32>
    %16 = vector.broadcast %15 : vector<8x1xf32> to vector<8x8xf32>
    %17 = arith.divf %13, %16 : vector<8x8xf32>
    %c0_8 = arith.constant 0 : index
    %c0_9 = arith.constant 0 : index
    %18 = vector.load %arg11[%c0_8, %c0_9] : memref<8x32xf32, #tpu.memory_space<vmem>>, vector<8x32xf32>
    %cst_10 = arith.constant dense<0.000000e+00> : vector<8x32xf32>
    %19 = tpu.matmul %17, %18, %cst_10 {dimension_numbers = #tpu.dot_dimension_numbers<[1], [0], [0], [1], [0, 0, 1, 1], [], []>} : vector<8x8xf32>, vector<8x32xf32>, vector<8x32xf32> -> vector<8x32xf32>
    %c0_11 = arith.constant 0 : index
    %c0_12 = arith.constant 0 : index
    %c0_13 = arith.constant 0 : index
    %20 = vector.load %arg4[%c0_11, %c0_12, %c0_13] : memref<1x8x32xf32, #tpu.memory_space<vmem>>, vector<1x8x32xf32>
    %21 = vector.shape_cast %20 : vector<1x8x32xf32> to vector<8x32xf32>
    %22 = arith.addf %21, %19 : vector<8x32xf32>
    %c0_14 = arith.constant 0 : index
    %c0_15 = arith.constant 0 : index
    %c0_16 = arith.constant 0 : index
    %23 = vector.load %arg9[%c0_14, %c0_15, %c0_16] : memref<1x8x32xf32, #tpu.memory_space<vmem>>, vector<1x8x32xf32>
    %24 = vector.shape_cast %23 : vector<1x8x32xf32> to vector<8x32xf32>
    %25 = vector.shape_cast %22 : vector<8x32xf32> to vector<1x8x32xf32>
    tpu.vector_store %arg9[%c0_14, %c0_15, %c0_16], %25 {strides = array<i32>} : memref<1x8x32xf32, #tpu.memory_space<vmem>>, vector<1x8x32xf32>,
    return
  }
  func.func @transform_0(%arg0: i32, %arg1: i32) -> (i32, i32, i32) {
    %c0_i32 = arith.constant 0 : i32
    %c0_i32_0 = arith.constant 0 : i32
    return %arg0, %arg1, %c0_i32 : i32, i32, i32
  }
  func.func @transform_1(%arg0: i32, %arg1: i32) -> (i32, i32, i32) {
    %c0_i32 = arith.constant 0 : i32
    %c0_i32_0 = arith.constant 0 : i32
    %c0_i32_1 = arith.constant 0 : i32
    return %arg0, %c0_i32, %c0_i32_0 : i32, i32, i32
  }
  func.func @transform_2(%arg0: i32, %arg1: i32) -> (i32, i32, i32) {
    %c0_i32 = arith.constant 0 : i32
    %c0_i32_0 = arith.constant 0 : i32
    return %arg0, %arg1, %c0_i32 : i32, i32, i32
  }
  func.func @transform_3(%arg0: i32, %arg1: i32) -> (i32, i32) {
    %c0_i32 = arith.constant 0 : i32
    %c0_i32_0 = arith.constant 0 : i32
    %c0_i32_1 = arith.constant 0 : i32
    return %c0_i32, %c0_i32_0 : i32, i32
  }
  func.func @transform_4(%arg0: i32, %arg1: i32) -> (i32, i32) {
    %c0_i32 = arith.constant 0 : i32
    %c0_i32_0 = arith.constant 0 : i32
    %c0_i32_1 = arith.constant 0 : i32
    return %c0_i32, %c0_i32_0 : i32, i32
  }
  func.func @transform_5(%arg0: i32, %arg1: i32) -> (i32, i32) {
    %c0_i32 = arith.constant 0 : i32
    %c0_i32_0 = arith.constant 0 : i32
    %c0_i32_1 = arith.constant 0 : i32
    return %c0_i32, %c0_i32_0 : i32, i32
  }
  func.func @transform_6(%arg0: i32, %arg1: i32) -> (i32, i32) {
    %c0_i32 = arith.constant 0 : i32
    %c0_i32_0 = arith.constant 0 : i32
    %c0_i32_1 = arith.constant 0 : i32
    return %c0_i32, %c0_i32_0 : i32, i32
  }
  func.func @transform_7(%arg0: i32, %arg1: i32) -> (i32, i32, i32) {
    %c0_i32 = arith.constant 0 : i32
    %c0_i32_0 = arith.constant 0 : i32
    return %arg0, %arg1, %c0_i32 : i32, i32, i32
  }
}

module attributes {stable_mosaic.version = 11 : i64} {
  func.func @_mlp_kernel(%arg0: i32, %arg1: i32, %arg2: memref<16x32xf32, #tpu.memory_space<vmem>>, %arg3: memref<1x32xf32, #tpu.memory_space<vmem>>, %arg4: memref<1x32xf32, #tpu.memory_space<vmem>>, %arg5: memref<32x128xf32, #tpu.memory_space<vmem>>, %arg6: memref<1x128xf32, #tpu.memory_space<vmem>>, %arg7: memref<128x32xf32, #tpu.memory_space<vmem>>, %arg8: memref<1x32xf32, #tpu.memory_space<vmem>>, %arg9: memref<16x32xf32, #tpu.memory_space<vmem>>, %arg10: memref<16x32xf32, #tpu.memory_space<vmem>>, %arg11: memref<16x32xf32, #tpu.memory_space<vmem>>) attributes {dimension_semantics = [#tpu.dimension_semantics<parallel>, #tpu.dimension_semantics<arbitrary>], iteration_bounds = array<i64: 1, 1>, scalar_prefetch = 0 : i64, scratch_operands = 2 : i64, tpu.core_type = #tpu.core_type<tc>, window_params = [{transform_indices = @transform_0, window_bounds = array<i64: 16, 32>}, {pipeline_mode = #tpu.pipeline_mode<synchronous>, transform_indices = @transform_1, window_bounds = array<i64: 1, 32>}, {pipeline_mode = #tpu.pipeline_mode<synchronous>, transform_indices = @transform_2, window_bounds = array<i64: 1, 32>}, {transform_indices = @transform_3, window_bounds = array<i64: 32, 128>}, {transform_indices = @transform_4, window_bounds = array<i64: 1, 128>}, {transform_indices = @transform_5, window_bounds = array<i64: 128, 32>}, {pipeline_mode = #tpu.pipeline_mode<synchronous>, transform_indices = @transform_6, window_bounds = array<i64: 1, 32>}, {transform_indices = @transform_7, window_bounds = array<i64: 16, 32>}]} {
    %c0_i32 = arith.constant 0 : i32
    %0 = arith.cmpi eq, %arg1, %c0_i32 : i32
    %1 = arith.extui %0 : i1 to i32
    %c0_i32_0 = arith.constant 0 : i32
    %2 = arith.cmpi ne, %1, %c0_i32_0 : i32
    scf.if %2 {
      %c0_17 = arith.constant 0 : index
      %c0_18 = arith.constant 0 : index
      %25 = vector.load %arg2[%c0_17, %c0_18] : memref<16x32xf32, #tpu.memory_space<vmem>>, vector<16x32xf32>
      %cst_19 = arith.constant dense<0.000000e+00> : vector<16xf32>
      %26 = vector.multi_reduction <add>, %25, %cst_19 [1] : vector<16x32xf32> to vector<16xf32>
      %27 = vector.shape_cast %26 : vector<16xf32> to vector<16x1xf32>
      %cst_20 = arith.constant 3.200000e+01 : f32
      %28 = vector.broadcast %cst_20 : f32 to vector<16x1xf32>
      %29 = arith.divf %27, %28 : vector<16x1xf32>
      %30 = vector.broadcast %29 : vector<16x1xf32> to vector<16x32xf32>
      %31 = arith.subf %25, %30 : vector<16x32xf32>
      %32 = arith.mulf %31, %31 : vector<16x32xf32>
      %cst_21 = arith.constant dense<0.000000e+00> : vector<16xf32>
      %33 = vector.multi_reduction <add>, %32, %cst_21 [1] : vector<16x32xf32> to vector<16xf32>
      %34 = vector.shape_cast %33 : vector<16xf32> to vector<16x1xf32>
      %cst_22 = arith.constant 3.200000e+01 : f32
      %35 = vector.broadcast %cst_22 : f32 to vector<16x1xf32>
      %36 = arith.divf %34, %35 : vector<16x1xf32>
      %37 = vector.broadcast %29 : vector<16x1xf32> to vector<16x32xf32>
      %38 = arith.subf %25, %37 : vector<16x32xf32>
      %cst_23 = arith.constant 9.99999974E-6 : f32
      %39 = vector.broadcast %cst_23 : f32 to vector<16x1xf32>
      %40 = arith.addf %36, %39 : vector<16x1xf32>
      %41 = math.rsqrt %40 : vector<16x1xf32>
      %42 = vector.broadcast %41 : vector<16x1xf32> to vector<16x32xf32>
      %43 = arith.mulf %38, %42 : vector<16x32xf32>
      %c0_24 = arith.constant 0 : index
      %c0_25 = arith.constant 0 : index
      %44 = vector.load %arg3[%c0_24, %c0_25] : memref<1x32xf32, #tpu.memory_space<vmem>>, vector<1x32xf32>
      %45 = vector.broadcast %44 : vector<1x32xf32> to vector<16x32xf32>
      %46 = arith.mulf %43, %45 : vector<16x32xf32>
      %c0_26 = arith.constant 0 : index
      %c0_27 = arith.constant 0 : index
      %47 = vector.load %arg4[%c0_26, %c0_27] : memref<1x32xf32, #tpu.memory_space<vmem>>, vector<1x32xf32>
      %48 = vector.broadcast %47 : vector<1x32xf32> to vector<16x32xf32>
      %49 = arith.addf %46, %48 : vector<16x32xf32>
      %c0_28 = arith.constant 0 : index
      %c0_29 = arith.constant 0 : index
      %50 = vector.load %arg10[%c0_28, %c0_29] : memref<16x32xf32, #tpu.memory_space<vmem>>, vector<16x32xf32>
      tpu.vector_store %arg10[%c0_28, %c0_29], %49 {strides = array<i32>} : memref<16x32xf32, #tpu.memory_space<vmem>>, vector<16x32xf32>,
      %c0_30 = arith.constant 0 : index
      %c0_31 = arith.constant 0 : index
      %51 = vector.load %arg8[%c0_30, %c0_31] : memref<1x32xf32, #tpu.memory_space<vmem>>, vector<1x32xf32>
      %52 = vector.broadcast %51 : vector<1x32xf32> to vector<16x32xf32>
      %53 = arith.addf %25, %52 : vector<16x32xf32>
      %c0_32 = arith.constant 0 : index
      %c0_33 = arith.constant 0 : index
      %54 = vector.load %arg11[%c0_32, %c0_33] : memref<16x32xf32, #tpu.memory_space<vmem>>, vector<16x32xf32>
      tpu.vector_store %arg11[%c0_32, %c0_33], %53 {strides = array<i32>} : memref<16x32xf32, #tpu.memory_space<vmem>>, vector<16x32xf32>,
    } else {
    }
    %c0 = arith.constant 0 : index
    %c0_1 = arith.constant 0 : index
    %3 = vector.load %arg10[%c0, %c0_1] : memref<16x32xf32, #tpu.memory_space<vmem>>, vector<16x32xf32>
    %c0_2 = arith.constant 0 : index
    %c0_3 = arith.constant 0 : index
    %4 = vector.load %arg5[%c0_2, %c0_3] : memref<32x128xf32, #tpu.memory_space<vmem>>, vector<32x128xf32>
    %cst = arith.constant dense<0.000000e+00> : vector<16x128xf32>
    %5 = tpu.matmul %3, %4, %cst {dimension_numbers = #tpu.dot_dimension_numbers<[1], [0], [0], [1], [0, 0, 1, 1], [], []>} : vector<16x32xf32>, vector<32x128xf32>, vector<16x128xf32> -> vector<16x128xf32>
    %c0_4 = arith.constant 0 : index
    %c0_5 = arith.constant 0 : index
    %6 = vector.load %arg6[%c0_4, %c0_5] : memref<1x128xf32, #tpu.memory_space<vmem>>, vector<1x128xf32>
    %7 = vector.broadcast %6 : vector<1x128xf32> to vector<16x128xf32>
    %8 = arith.addf %5, %7 : vector<16x128xf32>
    %cst_6 = arith.constant 1.702000e+00 : f32
    %9 = vector.broadcast %cst_6 : f32 to vector<16x128xf32>
    %10 = arith.mulf %9, %8 : vector<16x128xf32>
    %11 = arith.negf %10 : vector<16x128xf32>
    %12 = math.exp %11 : vector<16x128xf32>
    %cst_7 = arith.constant 1.000000e+00 : f32
    %13 = vector.broadcast %cst_7 : f32 to vector<16x128xf32>
    %14 = arith.addf %13, %12 : vector<16x128xf32>
    %15 = arith.divf %13, %14 : vector<16x128xf32>
    %16 = arith.mulf %8, %15 : vector<16x128xf32>
    %c0_8 = arith.constant 0 : index
    %c0_9 = arith.constant 0 : index
    %17 = vector.load %arg11[%c0_8, %c0_9] : memref<16x32xf32, #tpu.memory_space<vmem>>, vector<16x32xf32>
    %c0_10 = arith.constant 0 : index
    %c0_11 = arith.constant 0 : index
    %18 = vector.load %arg7[%c0_10, %c0_11] : memref<128x32xf32, #tpu.memory_space<vmem>>, vector<128x32xf32>
    %cst_12 = arith.constant dense<0.000000e+00> : vector<16x32xf32>
    %19 = tpu.matmul %16, %18, %cst_12 {dimension_numbers = #tpu.dot_dimension_numbers<[1], [0], [0], [1], [0, 0, 1, 1], [], []>} : vector<16x128xf32>, vector<128x32xf32>, vector<16x32xf32> -> vector<16x32xf32>
    %20 = arith.addf %17, %19 : vector<16x32xf32>
    %c0_13 = arith.constant 0 : index
    %c0_14 = arith.constant 0 : index
    %21 = vector.load %arg11[%c0_13, %c0_14] : memref<16x32xf32, #tpu.memory_space<vmem>>, vector<16x32xf32>
    tpu.vector_store %arg11[%c0_13, %c0_14], %20 {strides = array<i32>} : memref<16x32xf32, #tpu.memory_space<vmem>>, vector<16x32xf32>,
    %c0_i32_15 = arith.constant 0 : i32
    %22 = arith.cmpi eq, %arg1, %c0_i32_15 : i32
    %23 = arith.extui %22 : i1 to i32
    %c0_i32_16 = arith.constant 0 : i32
    %24 = arith.cmpi ne, %23, %c0_i32_16 : i32
    scf.if %24 {
      %c0_17 = arith.constant 0 : index
      %c0_18 = arith.constant 0 : index
      %25 = vector.load %arg11[%c0_17, %c0_18] : memref<16x32xf32, #tpu.memory_space<vmem>>, vector<16x32xf32>
      %c0_19 = arith.constant 0 : index
      %c0_20 = arith.constant 0 : index
      %26 = vector.load %arg9[%c0_19, %c0_20] : memref<16x32xf32, #tpu.memory_space<vmem>>, vector<16x32xf32>
      tpu.vector_store %arg9[%c0_19, %c0_20], %25 {strides = array<i32>} : memref<16x32xf32, #tpu.memory_space<vmem>>, vector<16x32xf32>,
    } else {
    }
    return
  }
  func.func @transform_0(%arg0: i32, %arg1: i32) -> (i32, i32) {
    %c0_i32 = arith.constant 0 : i32
    %c0_i32_0 = arith.constant 0 : i32
    return %arg0, %c0_i32 : i32, i32
  }
  func.func @transform_1(%arg0: i32, %arg1: i32) -> (i32, i32) {
    %c0_i32 = arith.constant 0 : i32
    %c0_i32_0 = arith.constant 0 : i32
    %c0_i32_1 = arith.constant 0 : i32
    return %c0_i32, %c0_i32_0 : i32, i32
  }
  func.func @transform_2(%arg0: i32, %arg1: i32) -> (i32, i32) {
    %c0_i32 = arith.constant 0 : i32
    %c0_i32_0 = arith.constant 0 : i32
    %c0_i32_1 = arith.constant 0 : i32
    return %c0_i32, %c0_i32_0 : i32, i32
  }
  func.func @transform_3(%arg0: i32, %arg1: i32) -> (i32, i32) {
    %c0_i32 = arith.constant 0 : i32
    %c0_i32_0 = arith.constant 0 : i32
    return %c0_i32, %arg1 : i32, i32
  }
  func.func @transform_4(%arg0: i32, %arg1: i32) -> (i32, i32) {
    %c0_i32 = arith.constant 0 : i32
    %c0_i32_0 = arith.constant 0 : i32
    return %c0_i32, %arg1 : i32, i32
  }
  func.func @transform_5(%arg0: i32, %arg1: i32) -> (i32, i32) {
    %c0_i32 = arith.constant 0 : i32
    %c0_i32_0 = arith.constant 0 : i32
    return %arg1, %c0_i32 : i32, i32
  }
  func.func @transform_6(%arg0: i32, %arg1: i32) -> (i32, i32) {
    %c0_i32 = arith.constant 0 : i32
    %c0_i32_0 = arith.constant 0 : i32
    %c0_i32_1 = arith.constant 0 : i32
    return %c0_i32, %c0_i32_0 : i32, i32
  }
  func.func @transform_7(%arg0: i32, %arg1: i32) -> (i32, i32) {
    %c0_i32 = arith.constant 0 : i32
    %c0_i32_0 = arith.constant 0 : i32
    return %arg0, %c0_i32 : i32, i32
  }
}

</mosaic_0001>

<llo_original>
// kernel: tpu_custom_call.1
$region0: #{tpu_custom_call.1}
  #allocation0 [shape = 'u32[]', space=smem, size = 0x4, offset = 0x4, fixed_abs, tag = 'smem constant byte address 0x4 - core index']
  #allocation1 [shape = 'u32[144,128]{1,0:T(1,128)}', space=vmem, size = 0x12000, scoped, tag = 'internal scratch']
  %s0 = inlined_call_operand.hbm [shape: f32[8,128], index: 0, kind: input, shape index: {}]
  %s1 = inlined_call_operand.hbm [shape: f32[8,128], index: 1, kind: output, shape index: {}]
  %s2 = sld [smem:[#allocation0]]
  $region41: #{tpu_custom_call.1} parent=0
    _
  %s4 = ssub.s32 1, %s2
  %s5 = scalar_select 0, %s4, %s2
  $region1: #{tpu_custom_call.1} parent=0
    #allocation2 [shape = 'u8[4096]{0}', space=vmem, size = 0x1000, scoped, tag = 'input window, operand 0, single buffered']
    #allocation3 [shape = 's32[2]{0}', space=sflag, size = 0x8, scoped, tag = 'scoped memory for tpu_custom_call.1']
    #allocation4 [shape = 's32[2]{0}', space=sflag, size = 0x8, scoped, tag = 'scoped memory for tpu_custom_call.1']
    #allocation5 [shape = 'u8[4096]{0}', space=vmem, size = 0x1000, scoped, tag = 'output window, operand 0, single buffered']
    %6 = vsyncpa [#allocation3], 0
    %7 = vsyncpa [#allocation4], 0
    loop: start=0, step=1, limit=4
    $region2: #{tpu_custom_call.1} parent=1 // loop_pre_header
      _
    $region3: #{tpu_custom_call.1} parent=1 // loop_header
      %s9 = sphi 0, %s13
      %p10 = scmp.ge.s32.totalorder %s9, 4
      %s17 = sphi 0, %s17
      %s19 = sphi 0, %s17
      %s20 = sphi 0, %s19
      %s34 = sphi 0, %s20
      %s38 = sphi 0, %s38
      %s40 = sphi 0, %s38
      %s41 = sphi 0, %s40
      %s55 = sphi 0, %s41
    $region4: #{tpu_custom_call.1} parent=1 // loop_header_branch
      %12 = sbr.rel (%p10) target = $region8
    $region5: #{tpu_custom_call.1} parent=1 // loop_body
      %s14 = ssub.s32 %s9, 1
      %s15 = ssub.s32 %s9, 2
      %s16 = sadd.s32 %s9, 1
      %s18 = sadd.s32 %s17, 1
      %p21 = scmp.eq.s32.totalorder %s9, 1
      %p22 = scmp.ne.s32.totalorder %s17, %s19
      %p23 = scmp.eq.s32.totalorder %s9, 0
      %p24 = por %p22, %p23
      %p25 = scmp.ne.s32.totalorder %s17, %s19
      %p26 = scmp.eq.s32.totalorder %s14, 1
      %p27 = por %p25, %p26
      %p28 = scmp.ne.s32.totalorder %s19, %s20
      %p29 = scmp.eq.s32.totalorder %s14, 0
      %p30 = por %p28, %p29
      %p31 = scmp.ne.s32.totalorder %s19, %s20
      %p32 = scmp.eq.s32.totalorder %s15, 1
      %p33 = por %p31, %p32
      %p35 = scmp.ne.s32.totalorder %s20, %s34
      %p36 = scmp.eq.s32.totalorder %s15, 0
      %p37 = por %p35, %p36
      %s39 = sadd.s32 %s38, 1
      %p42 = scmp.eq.s32.totalorder %s9, 1
      %p43 = scmp.ne.s32.totalorder %s38, %s40
      %p44 = scmp.eq.s32.totalorder %s9, 0
      %p45 = por %p43, %p44
      %p46 = scmp.ne.s32.totalorder %s38, %s40
      %p47 = scmp.eq.s32.totalorder %s14, 1
      %p48 = por %p46, %p47
      %p49 = scmp.ne.s32.totalorder %s40, %s41
      %p50 = scmp.eq.s32.totalorder %s14, 0
      %p51 = por %p49, %p50
      %p52 = scmp.ne.s32.totalorder %s40, %s41
      %p53 = scmp.eq.s32.totalorder %s15, 1
      %p54 = por %p52, %p53
      %p56 = scmp.ne.s32.totalorder %s41, %s55
      %p57 = scmp.eq.s32.totalorder %s15, 0
      %p58 = por %p56, %p57
      %p59 = scmp.le.s32.totalorder 1, %s9
      %p60 = scmp.lt.s32.totalorder %s9, 3
      %p61 = pnand %p59, %p60
      %p62 = pneg %p61
      // Predicated region
      $region9: #{tpu_custom_call.1} parent=5 // pred_check
        _
      $region10: #{tpu_custom_call.1} parent=5 // pred_check_branch
        %64 = sbr.rel (%p61) target = $region12
      $region11: #{tpu_custom_call.1} parent=5 // pred_region
        %s65 = ssub.s32 %s9, 1
        // Predicated region
        $region13: #{tpu_custom_call.1} parent=11 // pred_check
          %p66 = pneg %p30
        $region14: #{tpu_custom_call.1} parent=11 // pred_check_branch
          %68 = sbr.rel (%p66) target = $region16
        $region15: #{tpu_custom_call.1} parent=11 // pred_region
          %s70 = ssub.s32 128, 128
          %71 = vsyncadd [#allocation3], %s70
          %s73 = sshll.u32 [#allocation2], 4
          %s74 = int_to_ptr.vmem [resolvable:$true] %s73
          %76 = dma.hbm_to_vmem [thread:$0]  %s0, 128, %s74, [#allocation3]
        $region16: #{tpu_custom_call.1} parent=11 // pred_fallthru
          _
      $region12: #{tpu_custom_call.1} parent=5 // pred_fallthru
        _
      %p77 = scmp.lt.s32.totalorder %s9, 2
      // Predicated region
      $region17: #{tpu_custom_call.1} parent=5 // pred_check
        %p78 = pneg %p77
      $region18: #{tpu_custom_call.1} parent=5 // pred_check_branch
        %80 = sbr.rel (%p78) target = $region20
      $region19: #{tpu_custom_call.1} parent=5 // pred_region
        _
      $region20: #{tpu_custom_call.1} parent=5 // pred_fallthru
        _
      %p81 = scmp.le.s32.totalorder 1, %s9
      %p82 = scmp.lt.s32.totalorder %s9, 3
      %p83 = pnand %p81, %p82
      %p84 = pneg %p83
      // Predicated region
      $region21: #{tpu_custom_call.1} parent=5 // pred_check
        _
      $region22: #{tpu_custom_call.1} parent=5 // pred_check_branch
        %86 = sbr.rel (%p83) target = $region24
      $region23: #{tpu_custom_call.1} parent=5 // pred_region
        %s87 = ssub.s32 %s9, 1
        // Predicated region
        $region25: #{tpu_custom_call.1} parent=23 // pred_check
          %p88 = pneg %p30
        $region26: #{tpu_custom_call.1} parent=23 // pred_check_branch
          %90 = sbr.rel (%p88) target = $region28
        $region27: #{tpu_custom_call.1} parent=23 // pred_region
          %91 = dma.done [#allocation3], 128
        $region28: #{tpu_custom_call.1} parent=23 // pred_fallthru
          _
        %p92 = pneg %p30
        %p93 = pneg %p27
        %p94 = pneg %p51
        %p95 = pneg %p48
        %v96 = vld [vmem:[#allocation2] sm:$0xff]
        %v97 = vadd.f32 %v96, 1.0
        %98 = vst [vmem:[#allocation5] sm:$0xff] %v97
        // Predicated region
        $region29: #{tpu_custom_call.1} parent=23 // pred_check
          %p99 = pneg %p48
        $region30: #{tpu_custom_call.1} parent=23 // pred_check_branch
          %101 = sbr.rel (%p99) target = $region32
        $region31: #{tpu_custom_call.1} parent=23 // pred_region
          %s103 = ssub.s32 128, 128
          %104 = vsyncadd [#allocation4], %s103
          %s106 = sshll.u32 [#allocation5], 4
          %s107 = int_to_ptr.vmem [resolvable:$true] %s106
          %109 = dma.vmem_to_hbm [thread:$0]  %s107, 128, %s1, [#allocation4]
        $region32: #{tpu_custom_call.1} parent=23 // pred_fallthru
          _
        // Predicated region
        $region33: #{tpu_custom_call.1} parent=23 // pred_check
          %p110 = pneg %p48
        $region34: #{tpu_custom_call.1} parent=23 // pred_check_branch
          %112 = sbr.rel (%p110) target = $region36
        $region35: #{tpu_custom_call.1} parent=23 // pred_region
          %113 = dma.done [#allocation4], 128
        $region36: #{tpu_custom_call.1} parent=23 // pred_fallthru
          _
      $region24: #{tpu_custom_call.1} parent=5 // pred_fallthru
        _
      %p114 = scmp.le.s32.totalorder 2, %s9
      // Predicated region
      $region37: #{tpu_custom_call.1} parent=5 // pred_check
        %p115 = pneg %p114
      $region38: #{tpu_custom_call.1} parent=5 // pred_check_branch
        %117 = sbr.rel (%p115) target = $region40
      $region39: #{tpu_custom_call.1} parent=5 // pred_region
        %s118 = ssub.s32 %s9, 2
      $region40: #{tpu_custom_call.1} parent=5 // pred_fallthru
        _
    $region6: #{tpu_custom_call.1} parent=1 // loop_footer
      %s13 = sadd.s32 1, %s9
    $region7: #{tpu_custom_call.1} parent=1 // loop_footer_branch
      %8 = sbr.rel target = $region3
    $region8: #{tpu_custom_call.1} parent=1 // loop_exit
      _
    %119 = vsyncpa [#allocation3], 1
    %s120 = scalar_lea.sflag [#allocation3], 1
    %121 = vsyncpa %s120, 1
    %122 = vsyncpa [#allocation4], 1
    %s123 = scalar_lea.sflag [#allocation4], 1
    %124 = vsyncpa %s123, 1

// kernel: tpu_custom_call.1
$region0: #{tpu_custom_call.1}
  #allocation0 [shape = 'u32[]', space=smem, size = 0x4, offset = 0x4, fixed_abs, tag = 'smem constant byte address 0x4 - core index']
  #allocation1 [shape = 'u32[144,128]{1,0:T(1,128)}', space=vmem, size = 0x12000, scoped, tag = 'internal scratch']
  %s0 = inlined_call_operand.hbm [shape: f32[1,8,96], index: 0, kind: input, shape index: {}]
  %s1 = inlined_call_operand.hbm [shape: f32[1,8,8], index: 1, kind: output, shape index: {}]
  %s2 = sld [smem:[#allocation0]]
  $region18: #{tpu_custom_call.1} parent=0
    _
  %s4 = ssub.s32 1, %s2
  %s5 = scalar_select 0, %s4, %s2
  $region1: #{tpu_custom_call.1} parent=0
    #allocation2 [shape = 'u8[4096]{0}', space=vmem, size = 0x1000, scoped, tag = 'input window, operand 0, single buffered']
    #allocation3 [shape = 's32[1]{0}', space=sflag, size = 0x4, scoped, tag = 'scoped memory for tpu_custom_call.1']
    #allocation4 [shape = 's32[1]{0}', space=sflag, size = 0x4, scoped, tag = 'scoped memory for tpu_custom_call.1']
    #allocation5 [shape = 'u8[4096]{0}', space=vmem, size = 0x1000, scoped, tag = 'output window, operand 0, single buffered']
    %6 = vsyncpa [#allocation3], 0
    %7 = vsyncpa [#allocation4], 0
    // Predicated region
    $region2: #{tpu_custom_call.1} parent=1 // pred_check
      _
    $region3: #{tpu_custom_call.1} parent=1 // pred_check_branch
      %9 = sbr.rel (0) target = $region5
    $region4: #{tpu_custom_call.1} parent=1 // pred_region
      %s11 = ssub.s32 128, 128
      %12 = vsyncadd [#allocation3], %s11
      %s14 = sshll.u32 [#allocation2], 4
      %s15 = int_to_ptr.vmem [resolvable:$true] %s14
      %17 = dma.hbm_to_vmem [thread:$0]  %s0, 128, %s15, [#allocation3]
    $region5: #{tpu_custom_call.1} parent=1 // pred_fallthru
      _
    // Predicated region
    $region6: #{tpu_custom_call.1} parent=1 // pred_check
      _
    $region7: #{tpu_custom_call.1} parent=1 // pred_check_branch
      %19 = sbr.rel (0) target = $region9
    $region8: #{tpu_custom_call.1} parent=1 // pred_region
      %20 = dma.done [#allocation3], 128
    $region9: #{tpu_custom_call.1} parent=1 // pred_fallthru
      _
    %s21 = smul.u32 0, 8
    %s22 = scalar_lea.vmem [#allocation2], %s21
    %v23 = vld [vmem:[%s22] sm:$0xff]
    %25 = vrot.lane.b32.xlu0 %v23, 88
    %v26 = vpop.permute.xlu0 %25
    %vm28 = vcmask 64512
    %29 = vst.msk [vmem:[#allocation5] sm:$0xff] %vm28, %v26
    // Predicated region
    $region10: #{tpu_custom_call.1} parent=1 // pred_check
      _
    $region11: #{tpu_custom_call.1} parent=1 // pred_check_branch
      %31 = sbr.rel (0) target = $region13
    $region12: #{tpu_custom_call.1} parent=1 // pred_region
      %s33 = ssub.s32 128, 128
      %34 = vsyncadd [#allocation4], %s33
      %s36 = sshll.u32 [#allocation5], 4
      %s37 = int_to_ptr.vmem [resolvable:$true] %s36
      %39 = dma.vmem_to_hbm [thread:$0]  %s37, 128, %s1, [#allocation4]
    $region13: #{tpu_custom_call.1} parent=1 // pred_fallthru
      _
    // Predicated region
    $region14: #{tpu_custom_call.1} parent=1 // pred_check
      _
    $region15: #{tpu_custom_call.1} parent=1 // pred_check_branch
      %41 = sbr.rel (0) target = $region17
    $region16: #{tpu_custom_call.1} parent=1 // pred_region
      %42 = dma.done [#allocation4], 128
    $region17: #{tpu_custom_call.1} parent=1 // pred_fallthru
      _
    %43 = vsyncpa [#allocation3], 1
    %44 = vsyncpa [#allocation4], 1

// kernel: transformer_decoder.10
$region0: #{transformer_decoder.10}
  #allocation0 [shape = 'u32[]', space=smem, size = 0x4, offset = 0x4, fixed_abs, tag = 'smem constant byte address 0x4 - core index']
  #allocation1 [shape = 'u32[144,128]{1,0:T(1,128)}', space=vmem, size = 0x12000, scoped, tag = 'internal scratch']
  %s0 = inlined_call_operand.vmem [shape: f32[16,32], index: 0, kind: input, shape index: {}]
  %s1 = inlined_call_operand.vmem [shape: f32[1,32], index: 1, kind: input, shape index: {}]
  %s2 = inlined_call_operand.vmem [shape: f32[1,32], index: 2, kind: input, shape index: {}]
  %s3 = inlined_call_operand.vmem [shape: f32[32,96], index: 3, kind: input, shape index: {}]
  %s4 = inlined_call_operand.vmem [shape: f32[1,96], index: 4, kind: input, shape index: {}]
  %s5 = inlined_call_operand.vmem [shape: f32[16,32], index: 5, kind: output, shape index: {0}]
  %s6 = inlined_call_operand.vmem [shape: f32[16,96], index: 6, kind: output, shape index: {1}]
  %7 = xla_tuple %s5, %s6
  %s8 = sld [smem:[#allocation0]]
  $region38: #{transformer_decoder.10} parent=0
    _
  %s10 = ssub.s32 1, %s8
  %s11 = scalar_select 0, %s10, %s8
  // Predicated region
  $region2: #{transformer_decoder.10} parent=0 // pred_check
    _
  $region3: #{transformer_decoder.10} parent=0 // pred_check_branch
    %13 = sbr.rel (0) target = $region5
  $region4: #{transformer_decoder.10} parent=0 // pred_region
    _
  $region5: #{transformer_decoder.10} parent=0 // pred_fallthru
    _
  // Predicated region
  $region6: #{transformer_decoder.10} parent=0 // pred_check
    _
  $region7: #{transformer_decoder.10} parent=0 // pred_check_branch
    %15 = sbr.rel (0) target = $region9
  $region8: #{transformer_decoder.10} parent=0 // pred_region
    _
  $region9: #{transformer_decoder.10} parent=0 // pred_fallthru
    _
  // Predicated region
  $region10: #{transformer_decoder.10} parent=0 // pred_check
    _
  $region11: #{transformer_decoder.10} parent=0 // pred_check_branch
    %17 = sbr.rel (0) target = $region13
  $region12: #{transformer_decoder.10} parent=0 // pred_region
    _
  $region13: #{transformer_decoder.10} parent=0 // pred_fallthru
    _
  // Predicated region
  $region14: #{transformer_decoder.10} parent=0 // pred_check
    _
  $region15: #{transformer_decoder.10} parent=0 // pred_check_branch
    %19 = sbr.rel (0) target = $region17
  $region16: #{transformer_decoder.10} parent=0 // pred_region
    _
  $region17: #{transformer_decoder.10} parent=0 // pred_fallthru
    _
  // Predicated region
  $region18: #{transformer_decoder.10} parent=0 // pred_check
    _
  $region19: #{transformer_decoder.10} parent=0 // pred_check_branch
    %21 = sbr.rel (0) target = $region21
  $region20: #{transformer_decoder.10} parent=0 // pred_region
    _
  $region21: #{transformer_decoder.10} parent=0 // pred_fallthru
    _
  %v22 = vld [vmem:[%s0] sm:$0xff]
  %v23 = vld [vmem:[%s0 + $0x8] sm:$0xff]
  %vm24 = vcmask 261120
  %v25 = vsel %vm24, %v22, 0.0
  %26 = vadd.xlane.f32.xlu0 %v25
  %v27 = vpop.xlane.xlu0 %26
  %v28 = vsel %vm24, %v23, 0.0
  %29 = vadd.xlane.f32.xlu0 %v28
  %v30 = vpop.xlane.xlu0 %29
  %v31 = vrcp.pop 32.0
  %v32 = vmul.f32 %v27, %v31
  %v33 = vmul.f32 %v30, %v31
  %v34 = vsub.f32 %v22, %v32
  %v35 = vsub.f32 %v23, %v33
  %v36 = vmul.f32 %v34, %v34
  %v37 = vmul.f32 %v35, %v35
  %v38 = vsel %vm24, %v36, 0.0
  %39 = vadd.xlane.f32.xlu0 %v38
  %v40 = vpop.xlane.xlu0 %39
  %v41 = vsel %vm24, %v37, 0.0
  %42 = vadd.xlane.f32.xlu0 %v41
  %v43 = vpop.xlane.xlu0 %42
  %v44 = vmul.f32 %v40, %v31
  %v45 = vmul.f32 %v43, %v31
  %v46 = vadd.f32 %v44, 1e-05
  %v47 = vadd.f32 %v45, 1e-05
  %v48 = vrsqrt.pop %v46
  %v49 = vrsqrt.pop %v47
  %v50 = vmul.f32 %v34, %v48
  %v51 = vmul.f32 %v35, %v49
  %v52 = vld [vmem:[%s1] sm:$0x1]
  %v54 = vlaneseq
  %v55 = vshrl.u32 %v54, 7
  %v56 = vsub.s32 0, %v55
  %v57 = vrot.slane %v52, %v56
  %v59 = vmul.f32 %v50, %v57
  %v60 = vmul.f32 %v51, %v57
  %v61 = vld [vmem:[%s2] sm:$0x1]
  %v63 = vlaneseq
  %v64 = vshrl.u32 %v63, 7
  %v65 = vsub.s32 0, %v64
  %v66 = vrot.slane %v61, %v65
  %v68 = vadd.f32 %v59, %v66
  %v69 = vadd.f32 %v60, %v66
  %70 = vst.msk [vmem:[%s5] sm:$0xff] %vm24, %v68
  %71 = vst.msk [vmem:[%s5 + $0x8] sm:$0xff] %vm24, %v69
  %v72 = vld [vmem:[%s3] sm:$0xff]
  %v73 = vld [vmem:[%s3 + $0x8] sm:$0xff]
  %v74 = vld [vmem:[%s3 + $0x10] sm:$0xff]
  %v75 = vld [vmem:[%s3 + $0x18] sm:$0xff]
  %v76 = vld [vmem:[%s4] sm:$0x1]
  %v78 = vlaneseq
  %v79 = vshrl.u32 %v78, 7
  %v80 = vsub.s32 0, %v79
  %v81 = vrot.slane %v76, %v80
  %v84 = vsel %vm24, %v68, 0
  %v87 = vsel %vm24, %v69, 0
  %89 = vmatprep.subr.mxu0 0.0
  %90 = vmatpush1.msra.mxu0 %v72
  %91 = vmatprep.subr.mxu0 0.0
  %92 = vmatpush1.msra.mxu0 %v73
  %93 = vmatprep.subr.mxu0 0.0
  %94 = vmatpush1.msra.mxu0 %v74
  %95 = vmatprep.subr.mxu0 0.0
  %96 = vmatpush1.msra.mxu0 %v75
  %97 = vmatprep.subr.mxu0 0.0
  %98 = vmatpush1.msra.mxu0 0.0
  %99 = vmatprep.subr.mxu0 0.0
  %100 = vmatpush1.msra.mxu0 0.0
  %101 = vmatprep.subr.mxu0 0.0
  %102 = vmatpush1.msra.mxu0 0.0
  %103 = vmatprep.subr.mxu0 0.0
  %104 = vmatpush1.msra.mxu0 0.0
  %105 = vmatprep.subr.mxu0 0.0
  %106 = vmatpush1.msra.mxu0 0.0
  %107 = vmatprep.subr.mxu0 0.0
  %108 = vmatpush1.msra.mxu0 0.0
  %109 = vmatprep.subr.mxu0 0.0
  %110 = vmatpush1.msra.mxu0 0.0
  %111 = vmatprep.subr.mxu0 0.0
  %112 = vmatpush1.msra.mxu0 0.0
  %113 = vmatprep.subr.mxu0 0.0
  %114 = vmatpush1.msra.mxu0 0.0
  %115 = vmatprep.subr.mxu0 0.0
  %116 = vmatpush1.msra.mxu0 0.0
  %117 = vmatprep.subr.mxu0 0.0
  %118 = vmatpush1.msra.mxu0 0.0
  %119 = vmatprep.subr.mxu0 0.0
  %120 = vmatpush1.msra.mxu0 0.0
  %121 = vmatprep.subr.mxu0 0.0
  %122 = vmatpush1.msra.mxu0 0.0
  %123 = vmatprep.subr.mxu0 0.0
  %124 = vmatpush1.msra.mxu0 0.0
  %125 = vmatprep.subr.mxu0 0.0
  %126 = vmatpush1.msra.mxu0 0.0
  %127 = vmatprep.subr.mxu0 0.0
  %128 = vmatpush1.msra.mxu0 0.0
  %129 = vmatprep.subr.mxu0 0.0
  %130 = vmatpush1.msra.mxu0 0.0
  %131 = vmatprep.subr.mxu0 0.0
  %132 = vmatpush1.msra.mxu0 0.0
  %133 = vmatprep.subr.mxu0 0.0
  %134 = vmatpush1.msra.mxu0 0.0
  %135 = vmatprep.subr.mxu0 0.0
  %136 = vmatpush1.msra.mxu0 0.0
  %137 = vmatprep.subr.mxu0 0.0
  %138 = vmatpush1.msra.mxu0 0.0
  %139 = vmatprep.subr.mxu0 0.0
  %140 = vmatpush1.msra.mxu0 0.0
  %141 = vmatprep.subr.mxu0 0.0
  %142 = vmatpush1.msra.mxu0 0.0
  %143 = vmatprep.subr.mxu0 0.0
  %144 = vmatpush1.msra.mxu0 0.0
  %145 = vmatprep.subr.mxu0 0.0
  %146 = vmatpush1.msra.mxu0 0.0
  %147 = vmatprep.subr.mxu0 0.0
  %148 = vmatpush1.msra.mxu0 0.0
  %149 = vmatprep.subr.mxu0 0.0
  %150 = vmatpush1.msra.mxu0 0.0
  %151 = vmatprep.subr.mxu0 0.0
  %152 = vmatpush1.msra.mxu0 0.0
  %153 = vmatprep.mubr.f32.mxu0 0.0
  %154 = vmatmul.mubr.f32.gmra.mrb[0].mxu0 %v84
  %v155 = vpop.f32.mrb[0].mxu0
  %v156 = vadd.f32 %v81, %v155
  %v157 = vpop.f32.mrb[0].mxu0
  %158 = vmatprep.mubr.f32.mxu0 0.0
  %159 = vmatmul.mubr.f32.gmra.mrb[0].mxu0 %v87
  %v160 = vpop.f32.mrb[0].mxu0
  %v161 = vadd.f32 %v81, %v160
  %v162 = vpop.f32.mrb[0].mxu0
  %163 = vdwg.mxu0
  %vm164 = vcmask 785408
  %165 = vst.msk [vmem:[%s6] sm:$0xff] %vm164, %v156
  %166 = vst.msk [vmem:[%s6 + $0x8] sm:$0xff] %vm164, %v161
  // Predicated region
  $region22: #{transformer_decoder.10} parent=0 // pred_check
    _
  $region23: #{transformer_decoder.10} parent=0 // pred_check_branch
    %168 = sbr.rel (0) target = $region25
  $region24: #{transformer_decoder.10} parent=0 // pred_region
    _
  $region25: #{transformer_decoder.10} parent=0 // pred_fallthru
    _
  // Predicated region
  $region26: #{transformer_decoder.10} parent=0 // pred_check
    _
  $region27: #{transformer_decoder.10} parent=0 // pred_check_branch
    %170 = sbr.rel (0) target = $region29
  $region28: #{transformer_decoder.10} parent=0 // pred_region
    _
  $region29: #{transformer_decoder.10} parent=0 // pred_fallthru
    _
  // Predicated region
  $region30: #{transformer_decoder.10} parent=0 // pred_check
    _
  $region31: #{transformer_decoder.10} parent=0 // pred_check_branch
    %172 = sbr.rel (0) target = $region33
  $region32: #{transformer_decoder.10} parent=0 // pred_region
    _
  $region33: #{transformer_decoder.10} parent=0 // pred_fallthru
    _
  // Predicated region
  $region34: #{transformer_decoder.10} parent=0 // pred_check
    _
  $region35: #{transformer_decoder.10} parent=0 // pred_check_branch
    %174 = sbr.rel (0) target = $region37
  $region36: #{transformer_decoder.10} parent=0 // pred_region
    _
  $region37: #{transformer_decoder.10} parent=0 // pred_fallthru
    _

// kernel: transformer_decoder.12
$region0: #{transformer_decoder.12}
  #allocation0 [shape = 'u32[]', space=smem, size = 0x4, offset = 0x4, fixed_abs, tag = 'smem constant byte address 0x4 - core index']
  #allocation1 [shape = 'u32[144,128]{1,0:T(1,128)}', space=vmem, size = 0x12000, scoped, tag = 'internal scratch']
  %s0 = inlined_call_operand.vmem [shape: f32[16,32], index: 0, kind: input, shape index: {}]
  %s1 = inlined_call_operand.vmem [shape: f32[1,32], index: 1, kind: input, shape index: {}]
  %s2 = inlined_call_operand.vmem [shape: f32[1,32], index: 2, kind: input, shape index: {}]
  %s3 = inlined_call_operand.vmem [shape: f32[32,32], index: 3, kind: input, shape index: {}]
  %s4 = inlined_call_operand.vmem [shape: f32[1,32], index: 4, kind: input, shape index: {}]
  %s5 = inlined_call_operand.vmem [shape: f32[16,32], index: 5, kind: output, shape index: {0}]
  %s6 = inlined_call_operand.vmem [shape: f32[16,32], index: 6, kind: output, shape index: {1}]
  %7 = xla_tuple %s5, %s6
  %s8 = sld [smem:[#allocation0]]
  $region38: #{transformer_decoder.12} parent=0
    _
  %s10 = ssub.s32 1, %s8
  %s11 = scalar_select 0, %s10, %s8
  // Predicated region
  $region2: #{transformer_decoder.12} parent=0 // pred_check
    _
  $region3: #{transformer_decoder.12} parent=0 // pred_check_branch
    %13 = sbr.rel (0) target = $region5
  $region4: #{transformer_decoder.12} parent=0 // pred_region
    _
  $region5: #{transformer_decoder.12} parent=0 // pred_fallthru
    _
  // Predicated region
  $region6: #{transformer_decoder.12} parent=0 // pred_check
    _
  $region7: #{transformer_decoder.12} parent=0 // pred_check_branch
    %15 = sbr.rel (0) target = $region9
  $region8: #{transformer_decoder.12} parent=0 // pred_region
    _
  $region9: #{transformer_decoder.12} parent=0 // pred_fallthru
    _
  // Predicated region
  $region10: #{transformer_decoder.12} parent=0 // pred_check
    _
  $region11: #{transformer_decoder.12} parent=0 // pred_check_branch
    %17 = sbr.rel (0) target = $region13
  $region12: #{transformer_decoder.12} parent=0 // pred_region
    _
  $region13: #{transformer_decoder.12} parent=0 // pred_fallthru
    _
  // Predicated region
  $region14: #{transformer_decoder.12} parent=0 // pred_check
    _
  $region15: #{transformer_decoder.12} parent=0 // pred_check_branch
    %19 = sbr.rel (0) target = $region17
  $region16: #{transformer_decoder.12} parent=0 // pred_region
    _
  $region17: #{transformer_decoder.12} parent=0 // pred_fallthru
    _
  // Predicated region
  $region18: #{transformer_decoder.12} parent=0 // pred_check
    _
  $region19: #{transformer_decoder.12} parent=0 // pred_check_branch
    %21 = sbr.rel (0) target = $region21
  $region20: #{transformer_decoder.12} parent=0 // pred_region
    _
  $region21: #{transformer_decoder.12} parent=0 // pred_fallthru
    _
  %v22 = vld [vmem:[%s0] sm:$0xff]
  %v23 = vld [vmem:[%s0 + $0x8] sm:$0xff]
  %vm24 = vcmask 261120
  %v25 = vsel %vm24, %v22, 0.0
  %26 = vadd.xlane.f32.xlu0 %v25
  %v27 = vpop.xlane.xlu0 %26
  %v28 = vsel %vm24, %v23, 0.0
  %29 = vadd.xlane.f32.xlu0 %v28
  %v30 = vpop.xlane.xlu0 %29
  %v31 = vrcp.pop 32.0
  %v32 = vmul.f32 %v27, %v31
  %v33 = vmul.f32 %v30, %v31
  %v34 = vsub.f32 %v22, %v32
  %v35 = vsub.f32 %v23, %v33
  %v36 = vmul.f32 %v34, %v34
  %v37 = vmul.f32 %v35, %v35
  %v38 = vsel %vm24, %v36, 0.0
  %39 = vadd.xlane.f32.xlu0 %v38
  %v40 = vpop.xlane.xlu0 %39
  %v41 = vsel %vm24, %v37, 0.0
  %42 = vadd.xlane.f32.xlu0 %v41
  %v43 = vpop.xlane.xlu0 %42
  %v44 = vmul.f32 %v40, %v31
  %v45 = vmul.f32 %v43, %v31
  %v46 = vadd.f32 %v44, 1e-05
  %v47 = vadd.f32 %v45, 1e-05
  %v48 = vrsqrt.pop %v46
  %v49 = vrsqrt.pop %v47
  %v50 = vmul.f32 %v34, %v48
  %v51 = vmul.f32 %v35, %v49
  %v52 = vld [vmem:[%s1] sm:$0x1]
  %v54 = vlaneseq
  %v55 = vshrl.u32 %v54, 7
  %v56 = vsub.s32 0, %v55
  %v57 = vrot.slane %v52, %v56
  %v59 = vmul.f32 %v50, %v57
  %v60 = vmul.f32 %v51, %v57
  %v61 = vld [vmem:[%s2] sm:$0x1]
  %v63 = vlaneseq
  %v64 = vshrl.u32 %v63, 7
  %v65 = vsub.s32 0, %v64
  %v66 = vrot.slane %v61, %v65
  %v68 = vadd.f32 %v59, %v66
  %v69 = vadd.f32 %v60, %v66
  %70 = vst.msk [vmem:[%s5] sm:$0xff] %vm24, %v68
  %71 = vst.msk [vmem:[%s5 + $0x8] sm:$0xff] %vm24, %v69
  %v72 = vld [vmem:[%s3] sm:$0xff]
  %v73 = vld [vmem:[%s3 + $0x8] sm:$0xff]
  %v74 = vld [vmem:[%s3 + $0x10] sm:$0xff]
  %v75 = vld [vmem:[%s3 + $0x18] sm:$0xff]
  %v76 = vld [vmem:[%s4] sm:$0x1]
  %v78 = vlaneseq
  %v79 = vshrl.u32 %v78, 7
  %v80 = vsub.s32 0, %v79
  %v81 = vrot.slane %v76, %v80
  %v84 = vsel %vm24, %v68, 0
  %v87 = vsel %vm24, %v69, 0
  %89 = vmatprep.subr.mxu0 0.0
  %90 = vmatpush1.msra.mxu0 %v72
  %91 = vmatprep.subr.mxu0 0.0
  %92 = vmatpush1.msra.mxu0 %v73
  %93 = vmatprep.subr.mxu0 0.0
  %94 = vmatpush1.msra.mxu0 %v74
  %95 = vmatprep.subr.mxu0 0.0
  %96 = vmatpush1.msra.mxu0 %v75
  %97 = vmatprep.subr.mxu0 0.0
  %98 = vmatpush1.msra.mxu0 0.0
  %99 = vmatprep.subr.mxu0 0.0
  %100 = vmatpush1.msra.mxu0 0.0
  %101 = vmatprep.subr.mxu0 0.0
  %102 = vmatpush1.msra.mxu0 0.0
  %103 = vmatprep.subr.mxu0 0.0
  %104 = vmatpush1.msra.mxu0 0.0
  %105 = vmatprep.subr.mxu0 0.0
  %106 = vmatpush1.msra.mxu0 0.0
  %107 = vmatprep.subr.mxu0 0.0
  %108 = vmatpush1.msra.mxu0 0.0
  %109 = vmatprep.subr.mxu0 0.0
  %110 = vmatpush1.msra.mxu0 0.0
  %111 = vmatprep.subr.mxu0 0.0
  %112 = vmatpush1.msra.mxu0 0.0
  %113 = vmatprep.subr.mxu0 0.0
  %114 = vmatpush1.msra.mxu0 0.0
  %115 = vmatprep.subr.mxu0 0.0
  %116 = vmatpush1.msra.mxu0 0.0
  %117 = vmatprep.subr.mxu0 0.0
  %118 = vmatpush1.msra.mxu0 0.0
  %119 = vmatprep.subr.mxu0 0.0
  %120 = vmatpush1.msra.mxu0 0.0
  %121 = vmatprep.subr.mxu0 0.0
  %122 = vmatpush1.msra.mxu0 0.0
  %123 = vmatprep.subr.mxu0 0.0
  %124 = vmatpush1.msra.mxu0 0.0
  %125 = vmatprep.subr.mxu0 0.0
  %126 = vmatpush1.msra.mxu0 0.0
  %127 = vmatprep.subr.mxu0 0.0
  %128 = vmatpush1.msra.mxu0 0.0
  %129 = vmatprep.subr.mxu0 0.0
  %130 = vmatpush1.msra.mxu0 0.0
  %131 = vmatprep.subr.mxu0 0.0
  %132 = vmatpush1.msra.mxu0 0.0
  %133 = vmatprep.subr.mxu0 0.0
  %134 = vmatpush1.msra.mxu0 0.0
  %135 = vmatprep.subr.mxu0 0.0
  %136 = vmatpush1.msra.mxu0 0.0
  %137 = vmatprep.subr.mxu0 0.0
  %138 = vmatpush1.msra.mxu0 0.0
  %139 = vmatprep.subr.mxu0 0.0
  %140 = vmatpush1.msra.mxu0 0.0
  %141 = vmatprep.subr.mxu0 0.0
  %142 = vmatpush1.msra.mxu0 0.0
  %143 = vmatprep.subr.mxu0 0.0
  %144 = vmatpush1.msra.mxu0 0.0
  %145 = vmatprep.subr.mxu0 0.0
  %146 = vmatpush1.msra.mxu0 0.0
  %147 = vmatprep.subr.mxu0 0.0
  %148 = vmatpush1.msra.mxu0 0.0
  %149 = vmatprep.subr.mxu0 0.0
  %150 = vmatpush1.msra.mxu0 0.0
  %151 = vmatprep.subr.mxu0 0.0
  %152 = vmatpush1.msra.mxu0 0.0
  %153 = vmatprep.mubr.f32.mxu0 0.0
  %154 = vmatmul.mubr.f32.gmra.mrb[0].mxu0 %v84
  %v155 = vpop.f32.mrb[0].mxu0
  %v156 = vadd.f32 %v81, %v155
  %v157 = vpop.f32.mrb[0].mxu0
  %158 = vmatprep.mubr.f32.mxu0 0.0
  %159 = vmatmul.mubr.f32.gmra.mrb[0].mxu0 %v87
  %v160 = vpop.f32.mrb[0].mxu0
  %v161 = vadd.f32 %v81, %v160
  %v162 = vpop.f32.mrb[0].mxu0
  %163 = vdwg.mxu0
  %164 = vst.msk [vmem:[%s6] sm:$0xff] %vm24, %v156
  %165 = vst.msk [vmem:[%s6 + $0x8] sm:$0xff] %vm24, %v161
  // Predicated region
  $region22: #{transformer_decoder.12} parent=0 // pred_check
    _
  $region23: #{transformer_decoder.12} parent=0 // pred_check_branch
    %167 = sbr.rel (0) target = $region25
  $region24: #{transformer_decoder.12} parent=0 // pred_region
    _
  $region25: #{transformer_decoder.12} parent=0 // pred_fallthru
    _
  // Predicated region
  $region26: #{transformer_decoder.12} parent=0 // pred_check
    _
  $region27: #{transformer_decoder.12} parent=0 // pred_check_branch
    %169 = sbr.rel (0) target = $region29
  $region28: #{transformer_decoder.12} parent=0 // pred_region
    _
  $region29: #{transformer_decoder.12} parent=0 // pred_fallthru
    _
  // Predicated region
  $region30: #{transformer_decoder.12} parent=0 // pred_check
    _
  $region31: #{transformer_decoder.12} parent=0 // pred_check_branch
    %171 = sbr.rel (0) target = $region33
  $region32: #{transformer_decoder.12} parent=0 // pred_region
    _
  $region33: #{transformer_decoder.12} parent=0 // pred_fallthru
    _
  // Predicated region
  $region34: #{transformer_decoder.12} parent=0 // pred_check
    _
  $region35: #{transformer_decoder.12} parent=0 // pred_check_branch
    %173 = sbr.rel (0) target = $region37
  $region36: #{transformer_decoder.12} parent=0 // pred_region
    _
  $region37: #{transformer_decoder.12} parent=0 // pred_fallthru
    _

// kernel: transformer_decoder.13
$region0: #{transformer_decoder.13}
  #allocation0 [shape = 'u32[]', space=smem, size = 0x4, offset = 0x4, fixed_abs, tag = 'smem constant byte address 0x4 - core index']
  #allocation1 [shape = 'u32[144,128]{1,0:T(1,128)}', space=vmem, size = 0x12000, scoped, tag = 'internal scratch']
  #allocation2 [shape = 'f32[8,32]{1,0:T(8,128)}', space=vmem, size = 0x1000, scoped, tag = 'scratch operand']
  #allocation3 [shape = 'f32[8,32]{1,0:T(8,128)}', space=vmem, size = 0x1000, scoped, tag = 'scratch operand']
  %s0 = inlined_call_operand.vmem [shape: f32[2,8,32], index: 0, kind: input, shape index: {}]
  %s1 = inlined_call_operand.vmem [shape: f32[2,8,32], index: 1, kind: input, shape index: {}]
  %s2 = inlined_call_operand.vmem [shape: f32[2,8,32], index: 2, kind: input, shape index: {}]
  %s3 = inlined_call_operand.vmem [shape: f32[32,32], index: 3, kind: input, shape index: {}]
  %s4 = inlined_call_operand.vmem [shape: f32[1,32], index: 4, kind: input, shape index: {}]
  %s5 = inlined_call_operand.vmem [shape: f32[32,32], index: 5, kind: input, shape index: {}]
  %s6 = inlined_call_operand.vmem [shape: f32[1,32], index: 6, kind: input, shape index: {}]
  %s7 = inlined_call_operand.vmem [shape: f32[2,8,32], index: 7, kind: output, shape index: {}]
  %s8 = sld [smem:[#allocation0]]
  $region65: #{transformer_decoder.13} parent=0
    _
  %s10 = ssub.s32 1, %s8
  %s11 = scalar_select 0, %s10, %s8
  loop: start=0, step=1, limit=4
  $region2: #{transformer_decoder.13} parent=0 // loop_pre_header
    _
  $region3: #{transformer_decoder.13} parent=0 // loop_header
    %s13 = sphi 0, %s17
    %p14 = scmp.ge.s32.totalorder %s13, 4
    %s20 = sphi 0, %s32
    %s21 = sphi 0, %s28
    %s22 = sphi 0, %s20
    %s23 = sphi 0, %s21
    %s24 = sphi 0, %s22
    %s25 = sphi 0, %s23
    %s37 = sphi 0, %s39
    %s40 = sphi 0, %s37
    %s41 = sphi 0, %s40
    %s57 = sphi 0, %s41
    %s63 = sphi 0, %s65
    %s66 = sphi 0, %s63
    %s67 = sphi 0, %s66
    %s83 = sphi 0, %s67
    %s91 = sphi 0, %s93
    %s94 = sphi 0, %s91
    %s95 = sphi 0, %s94
    %s111 = sphi 0, %s95
    %s115 = sphi 0, %s115
    %s117 = sphi 0, %s115
    %s118 = sphi 0, %s117
    %s132 = sphi 0, %s118
    %s136 = sphi 0, %s136
    %s138 = sphi 0, %s136
    %s139 = sphi 0, %s138
    %s153 = sphi 0, %s139
    %s157 = sphi 0, %s157
    %s159 = sphi 0, %s157
    %s160 = sphi 0, %s159
    %s174 = sphi 0, %s160
    %s178 = sphi 0, %s178
    %s180 = sphi 0, %s178
    %s181 = sphi 0, %s180
    %s195 = sphi 0, %s181
    %s203 = sphi 0, %s205
    %s206 = sphi 0, %s203
    %s207 = sphi 0, %s206
    %s223 = sphi 0, %s207
  $region4: #{transformer_decoder.13} parent=0 // loop_header_branch
    %16 = sbr.rel (%p14) target = $region8
  $region5: #{transformer_decoder.13} parent=0 // loop_body
    %s18 = ssub.s32 %s13, 1
    %s19 = ssub.s32 %s13, 2
    %s26 = sadd.s32 1, %s21
    %p27 = scmp.ge.s32.totalorder %s26, 1
    %s28 = scalar_select %p27, 0, %s26
    %s29 = sadd.s32 1, %s20
    %s30 = scalar_select %p27, %s29, %s20
    %p31 = scmp.ge.s32.totalorder %s30, 2
    %s32 = scalar_select %p31, 0, %s30
    %s33 = ssub.s32 %s20, %s32
    %s34 = ssub.s32 %s21, %s28
    %s35 = sor.u32 %s33, %s34
    %p36 = scmp.eq.s32.totalorder %s35, 0
    %s38 = sadd.s32 %s37, 1
    %s39 = scalar_select %p36, %s37, %s38
    %p42 = pneg %p36
    %p43 = scmp.eq.s32.totalorder %s13, 1
    %p44 = por %p42, %p43
    %p45 = scmp.ne.s32.totalorder %s37, %s40
    %p46 = scmp.eq.s32.totalorder %s13, 0
    %p47 = por %p45, %p46
    %p48 = scmp.ne.s32.totalorder %s37, %s40
    %p49 = scmp.eq.s32.totalorder %s18, 1
    %p50 = por %p48, %p49
    %p51 = scmp.ne.s32.totalorder %s40, %s41
    %p52 = scmp.eq.s32.totalorder %s18, 0
    %p53 = por %p51, %p52
    %p54 = scmp.ne.s32.totalorder %s40, %s41
    %p55 = scmp.eq.s32.totalorder %s19, 1
    %p56 = por %p54, %p55
    %p58 = scmp.ne.s32.totalorder %s41, %s57
    %p59 = scmp.eq.s32.totalorder %s19, 0
    %p60 = por %p58, %p59
    %s61 = ssub.s32 %s20, %s32
    %p62 = scmp.eq.s32.totalorder %s61, 0
    %s64 = sadd.s32 %s63, 1
    %s65 = scalar_select %p62, %s63, %s64
    %p68 = pneg %p62
    %p69 = scmp.eq.s32.totalorder %s13, 1
    %p70 = por %p68, %p69
    %p71 = scmp.ne.s32.totalorder %s63, %s66
    %p72 = scmp.eq.s32.totalorder %s13, 0
    %p73 = por %p71, %p72
    %p74 = scmp.ne.s32.totalorder %s63, %s66
    %p75 = scmp.eq.s32.totalorder %s18, 1
    %p76 = por %p74, %p75
    %p77 = scmp.ne.s32.totalorder %s66, %s67
    %p78 = scmp.eq.s32.totalorder %s18, 0
    %p79 = por %p77, %p78
    %p80 = scmp.ne.s32.totalorder %s66, %s67
    %p81 = scmp.eq.s32.totalorder %s19, 1
    %p82 = por %p80, %p81
    %p84 = scmp.ne.s32.totalorder %s67, %s83
    %p85 = scmp.eq.s32.totalorder %s19, 0
    %p86 = por %p84, %p85
    %s87 = ssub.s32 %s20, %s32
    %s88 = ssub.s32 %s21, %s28
    %s89 = sor.u32 %s87, %s88
    %p90 = scmp.eq.s32.totalorder %s89, 0
    %s92 = sadd.s32 %s91, 1
    %s93 = scalar_select %p90, %s91, %s92
    %p96 = pneg %p90
    %p97 = scmp.eq.s32.totalorder %s13, 1
    %p98 = por %p96, %p97
    %p99 = scmp.ne.s32.totalorder %s91, %s94
    %p100 = scmp.eq.s32.totalorder %s13, 0
    %p101 = por %p99, %p100
    %p102 = scmp.ne.s32.totalorder %s91, %s94
    %p103 = scmp.eq.s32.totalorder %s18, 1
    %p104 = por %p102, %p103
    %p105 = scmp.ne.s32.totalorder %s94, %s95
    %p106 = scmp.eq.s32.totalorder %s18, 0
    %p107 = por %p105, %p106
    %p108 = scmp.ne.s32.totalorder %s94, %s95
    %p109 = scmp.eq.s32.totalorder %s19, 1
    %p110 = por %p108, %p109
    %p112 = scmp.ne.s32.totalorder %s95, %s111
    %p113 = scmp.eq.s32.totalorder %s19, 0
    %p114 = por %p112, %p113
    %s116 = sadd.s32 %s115, 1
    %p119 = scmp.eq.s32.totalorder %s13, 1
    %p120 = scmp.ne.s32.totalorder %s115, %s117
    %p121 = scmp.eq.s32.totalorder %s13, 0
    %p122 = por %p120, %p121
    %p123 = scmp.ne.s32.totalorder %s115, %s117
    %p124 = scmp.eq.s32.totalorder %s18, 1
    %p125 = por %p123, %p124
    %p126 = scmp.ne.s32.totalorder %s117, %s118
    %p127 = scmp.eq.s32.totalorder %s18, 0
    %p128 = por %p126, %p127
    %p129 = scmp.ne.s32.totalorder %s117, %s118
    %p130 = scmp.eq.s32.totalorder %s19, 1
    %p131 = por %p129, %p130
    %p133 = scmp.ne.s32.totalorder %s118, %s132
    %p134 = scmp.eq.s32.totalorder %s19, 0
    %p135 = por %p133, %p134
    %s137 = sadd.s32 %s136, 1
    %p140 = scmp.eq.s32.totalorder %s13, 1
    %p141 = scmp.ne.s32.totalorder %s136, %s138
    %p142 = scmp.eq.s32.totalorder %s13, 0
    %p143 = por %p141, %p142
    %p144 = scmp.ne.s32.totalorder %s136, %s138
    %p145 = scmp.eq.s32.totalorder %s18, 1
    %p146 = por %p144, %p145
    %p147 = scmp.ne.s32.totalorder %s138, %s139
    %p148 = scmp.eq.s32.totalorder %s18, 0
    %p149 = por %p147, %p148
    %p150 = scmp.ne.s32.totalorder %s138, %s139
    %p151 = scmp.eq.s32.totalorder %s19, 1
    %p152 = por %p150, %p151
    %p154 = scmp.ne.s32.totalorder %s139, %s153
    %p155 = scmp.eq.s32.totalorder %s19, 0
    %p156 = por %p154, %p155
    %s158 = sadd.s32 %s157, 1
    %p161 = scmp.eq.s32.totalorder %s13, 1
    %p162 = scmp.ne.s32.totalorder %s157, %s159
    %p163 = scmp.eq.s32.totalorder %s13, 0
    %p164 = por %p162, %p163
    %p165 = scmp.ne.s32.totalorder %s157, %s159
    %p166 = scmp.eq.s32.totalorder %s18, 1
    %p167 = por %p165, %p166
    %p168 = scmp.ne.s32.totalorder %s159, %s160
    %p169 = scmp.eq.s32.totalorder %s18, 0
    %p170 = por %p168, %p169
    %p171 = scmp.ne.s32.totalorder %s159, %s160
    %p172 = scmp.eq.s32.totalorder %s19, 1
    %p173 = por %p171, %p172
    %p175 = scmp.ne.s32.totalorder %s160, %s174
    %p176 = scmp.eq.s32.totalorder %s19, 0
    %p177 = por %p175, %p176
    %s179 = sadd.s32 %s178, 1
    %p182 = scmp.eq.s32.totalorder %s13, 1
    %p183 = scmp.ne.s32.totalorder %s178, %s180
    %p184 = scmp.eq.s32.totalorder %s13, 0
    %p185 = por %p183, %p184
    %p186 = scmp.ne.s32.totalorder %s178, %s180
    %p187 = scmp.eq.s32.totalorder %s18, 1
    %p188 = por %p186, %p187
    %p189 = scmp.ne.s32.totalorder %s180, %s181
    %p190 = scmp.eq.s32.totalorder %s18, 0
    %p191 = por %p189, %p190
    %p192 = scmp.ne.s32.totalorder %s180, %s181
    %p193 = scmp.eq.s32.totalorder %s19, 1
    %p194 = por %p192, %p193
    %p196 = scmp.ne.s32.totalorder %s181, %s195
    %p197 = scmp.eq.s32.totalorder %s19, 0
    %p198 = por %p196, %p197
    %s199 = ssub.s32 %s20, %s32
    %s200 = ssub.s32 %s21, %s28
    %s201 = sor.u32 %s199, %s200
    %p202 = scmp.eq.s32.totalorder %s201, 0
    %s204 = sadd.s32 %s203, 1
    %s205 = scalar_select %p202, %s203, %s204
    %p208 = pneg %p202
    %p209 = scmp.eq.s32.totalorder %s13, 1
    %p210 = por %p208, %p209
    %p211 = scmp.ne.s32.totalorder %s203, %s206
    %p212 = scmp.eq.s32.totalorder %s13, 0
    %p213 = por %p211, %p212
    %p214 = scmp.ne.s32.totalorder %s203, %s206
    %p215 = scmp.eq.s32.totalorder %s18, 1
    %p216 = por %p214, %p215
    %p217 = scmp.ne.s32.totalorder %s206, %s207
    %p218 = scmp.eq.s32.totalorder %s18, 0
    %p219 = por %p217, %p218
    %p220 = scmp.ne.s32.totalorder %s206, %s207
    %p221 = scmp.eq.s32.totalorder %s19, 1
    %p222 = por %p220, %p221
    %p224 = scmp.ne.s32.totalorder %s207, %s223
    %p225 = scmp.eq.s32.totalorder %s19, 0
    %p226 = por %p224, %p225
    %p227 = scmp.le.s32.totalorder 1, %s13
    %p228 = scmp.lt.s32.totalorder %s13, 3
    %p229 = pnand %p227, %p228
    %p230 = pneg %p229
    // Predicated region
    $region9: #{transformer_decoder.13} parent=5 // pred_check
      _
    $region10: #{transformer_decoder.13} parent=5 // pred_check_branch
      %232 = sbr.rel (%p229) target = $region12
    $region11: #{transformer_decoder.13} parent=5 // pred_region
      %s233 = ssub.s32 %s13, 1
      // Predicated region
      $region13: #{transformer_decoder.13} parent=11 // pred_check
        %p234 = pneg %p128
      $region14: #{transformer_decoder.13} parent=11 // pred_check_branch
        %236 = sbr.rel (%p234) target = $region16
      $region15: #{transformer_decoder.13} parent=11 // pred_region
        _
      $region16: #{transformer_decoder.13} parent=11 // pred_fallthru
        _
      // Predicated region
      $region17: #{transformer_decoder.13} parent=11 // pred_check
        %p237 = pneg %p149
      $region18: #{transformer_decoder.13} parent=11 // pred_check_branch
        %239 = sbr.rel (%p237) target = $region20
      $region19: #{transformer_decoder.13} parent=11 // pred_region
        _
      $region20: #{transformer_decoder.13} parent=11 // pred_fallthru
        _
      // Predicated region
      $region21: #{transformer_decoder.13} parent=11 // pred_check
        %p240 = pneg %p170
      $region22: #{transformer_decoder.13} parent=11 // pred_check_branch
        %242 = sbr.rel (%p240) target = $region24
      $region23: #{transformer_decoder.13} parent=11 // pred_region
        _
      $region24: #{transformer_decoder.13} parent=11 // pred_fallthru
        _
      // Predicated region
      $region25: #{transformer_decoder.13} parent=11 // pred_check
        %p243 = pneg %p191
      $region26: #{transformer_decoder.13} parent=11 // pred_check_branch
        %245 = sbr.rel (%p243) target = $region28
      $region27: #{transformer_decoder.13} parent=11 // pred_region
        _
      $region28: #{transformer_decoder.13} parent=11 // pred_fallthru
        _
    $region12: #{transformer_decoder.13} parent=5 // pred_fallthru
      _
    %p246 = scmp.lt.s32.totalorder %s13, 2
    // Predicated region
    $region29: #{transformer_decoder.13} parent=5 // pred_check
      %p247 = pneg %p246
    $region30: #{transformer_decoder.13} parent=5 // pred_check_branch
      %249 = sbr.rel (%p247) target = $region32
    $region31: #{transformer_decoder.13} parent=5 // pred_region
      // Predicated region
      $region33: #{transformer_decoder.13} parent=31 // pred_check
        %p250 = pneg %p47
      $region34: #{transformer_decoder.13} parent=31 // pred_check_branch
        %252 = sbr.rel (%p250) target = $region36
      $region35: #{transformer_decoder.13} parent=31 // pred_region
        %p253 = scmp.lt.s32.totalorder %s20, 1
        %s254 = scalar_select %p253, %s20, 1
        %p255 = scmp.lt.s32.totalorder %s21, 0
        %s256 = scalar_select %p255, %s21, 0
        %s257 = sadd.s32 %s256, %s254
        %s258 = smul.addr %s257, 8
        %s259 = scalar_lea.vmem %s0, %s258
      $region36: #{transformer_decoder.13} parent=31 // pred_fallthru
        _
      // Predicated region
      $region37: #{transformer_decoder.13} parent=31 // pred_check
        %p260 = pneg %p73
      $region38: #{transformer_decoder.13} parent=31 // pred_check_branch
        %262 = sbr.rel (%p260) target = $region40
      $region39: #{transformer_decoder.13} parent=31 // pred_region
        %p263 = scmp.lt.s32.totalorder %s20, 1
        %s264 = scalar_select %p263, %s20, 1
        %s265 = smul.addr %s264, 8
        %s266 = scalar_lea.vmem %s1, %s265
      $region40: #{transformer_decoder.13} parent=31 // pred_fallthru
        _
      // Predicated region
      $region41: #{transformer_decoder.13} parent=31 // pred_check
        %p267 = pneg %p101
      $region42: #{transformer_decoder.13} parent=31 // pred_check_branch
        %269 = sbr.rel (%p267) target = $region44
      $region43: #{transformer_decoder.13} parent=31 // pred_region
        %p270 = scmp.lt.s32.totalorder %s20, 1
        %s271 = scalar_select %p270, %s20, 1
        %p272 = scmp.lt.s32.totalorder %s21, 0
        %s273 = scalar_select %p272, %s21, 0
        %s274 = sadd.s32 %s273, %s271
        %s275 = smul.addr %s274, 8
        %s276 = scalar_lea.vmem %s2, %s275
      $region44: #{transformer_decoder.13} parent=31 // pred_fallthru
        _
    $region32: #{transformer_decoder.13} parent=5 // pred_fallthru
      _
    %p277 = scmp.le.s32.totalorder 1, %s13
    %p278 = scmp.lt.s32.totalorder %s13, 3
    %p279 = pnand %p277, %p278
    %p280 = pneg %p279
    // Predicated region
    $region45: #{transformer_decoder.13} parent=5 // pred_check
      _
    $region46: #{transformer_decoder.13} parent=5 // pred_check_branch
      %282 = sbr.rel (%p279) target = $region48
    $region47: #{transformer_decoder.13} parent=5 // pred_region
      %s283 = ssub.s32 %s13, 1
      %p284 = scmp.lt.s32.totalorder %s22, 1
      %s285 = scalar_select %p284, %s22, 1
      %p286 = scmp.lt.s32.totalorder %s23, 0
      %s287 = scalar_select %p286, %s23, 0
      %s288 = sadd.s32 %s287, %s285
      %s289 = smul.addr %s288, 8
      %s290 = scalar_lea.vmem %s0, %s289
      %p291 = pneg %p53
      %p292 = pneg %p50
      %p293 = scmp.lt.s32.totalorder %s22, 1
      %s294 = scalar_select %p293, %s22, 1
      %s295 = smul.addr %s294, 8
      %s296 = scalar_lea.vmem %s1, %s295
      %p297 = pneg %p79
      %p298 = pneg %p76
      %p299 = scmp.lt.s32.totalorder %s22, 1
      %s300 = scalar_select %p299, %s22, 1
      %p301 = scmp.lt.s32.totalorder %s23, 0
      %s302 = scalar_select %p301, %s23, 0
      %s303 = sadd.s32 %s302, %s300
      %s304 = smul.addr %s303, 8
      %s305 = scalar_lea.vmem %s2, %s304
      %p306 = pneg %p107
      %p307 = pneg %p104
      %p308 = pneg %p128
      %p309 = pneg %p125
      %p310 = pneg %p149
      %p311 = pneg %p146
      %p312 = pneg %p170
      %p313 = pneg %p167
      %p314 = pneg %p191
      %p315 = pneg %p188
      %p316 = pneg %p219
      %p317 = pneg %p216
      %p318 = scmp.lt.s32.totalorder %s22, 1
      %s319 = scalar_select %p318, %s22, 1
      %p320 = scmp.lt.s32.totalorder %s23, 0
      %s321 = scalar_select %p320, %s23, 0
      %s322 = sadd.s32 %s321, %s319
      %s323 = smul.addr %s322, 8
      %s324 = scalar_lea.vmem %s7, %s323
      %p325 = scmp.lt.s32.totalorder %s22, 1
      %s326 = scalar_select %p325, %s22, 1
      %p327 = scmp.lt.s32.totalorder %s23, 0
      %s328 = scalar_select %p327, %s23, 0
      %s329 = sadd.s32 %s328, %s326
      %s330 = smul.addr %s329, 8
      %s331 = scalar_lea.vmem %s0, %s330
      %p332 = scmp.lt.s32.totalorder %s22, 1
      %s333 = scalar_select %p332, %s22, 1
      %s334 = smul.addr %s333, 8
      %s335 = scalar_lea.vmem %s1, %s334
      %p336 = scmp.lt.s32.totalorder %s22, 1
      %s337 = scalar_select %p336, %s22, 1
      %p338 = scmp.lt.s32.totalorder %s23, 0
      %s339 = scalar_select %p338, %s23, 0
      %s340 = sadd.s32 %s339, %s337
      %s341 = smul.addr %s340, 8
      %s342 = scalar_lea.vmem %s2, %s341
      %p343 = scmp.lt.s32.totalorder %s22, 1
      %s344 = scalar_select %p343, %s22, 1
      %p345 = scmp.lt.s32.totalorder %s23, 0
      %s346 = scalar_select %p345, %s23, 0
      %s347 = sadd.s32 %s346, %s344
      %s348 = smul.addr %s347, 8
      %s349 = scalar_lea.vmem %s7, %s348
      %p350 = scmp.eq.s32.totalorder %s23, 0
      // Predicated region
      $region49: #{transformer_decoder.13} parent=47 // pred_check
        %p351 = pneg %p350
      $region50: #{transformer_decoder.13} parent=47 // pred_check_branch
        %353 = sbr.rel (%p351) target = $region52
      $region51: #{transformer_decoder.13} parent=47 // pred_region
        %v354 = vld [vmem:[%s335] sm:$0xff]
        %v355 = vld [vmem:[%s3] sm:$0xff]
        %v356 = vld [vmem:[%s3 + $0x8] sm:$0xff]
        %v357 = vld [vmem:[%s3 + $0x10] sm:$0xff]
        %v358 = vld [vmem:[%s3 + $0x18] sm:$0xff]
        %v359 = vld [vmem:[%s4] sm:$0x1]
        %v361 = vlaneseq
        %v362 = vshrl.u32 %v361, 7
        %v363 = vsub.s32 0, %v362
        %v364 = vrot.slane %v359, %v363
        %vm366 = vcmask 261120
        %v368 = vsel %vm366, %v354, 0
        %370 = vmatprep.subr.mxu0 0.0
        %371 = vmatpush1.msra.mxu0 %v355
        %372 = vmatprep.subr.mxu0 0.0
        %373 = vmatpush1.msra.mxu0 %v356
        %374 = vmatprep.subr.mxu0 0.0
        %375 = vmatpush1.msra.mxu0 %v357
        %376 = vmatprep.subr.mxu0 0.0
        %377 = vmatpush1.msra.mxu0 %v358
        %378 = vmatprep.subr.mxu0 0.0
        %379 = vmatpush1.msra.mxu0 0.0
        %380 = vmatprep.subr.mxu0 0.0
        %381 = vmatpush1.msra.mxu0 0.0
        %382 = vmatprep.subr.mxu0 0.0
        %383 = vmatpush1.msra.mxu0 0.0
        %384 = vmatprep.subr.mxu0 0.0
        %385 = vmatpush1.msra.mxu0 0.0
        %386 = vmatprep.subr.mxu0 0.0
        %387 = vmatpush1.msra.mxu0 0.0
        %388 = vmatprep.subr.mxu0 0.0
        %389 = vmatpush1.msra.mxu0 0.0
        %390 = vmatprep.subr.mxu0 0.0
        %391 = vmatpush1.msra.mxu0 0.0
        %392 = vmatprep.subr.mxu0 0.0
        %393 = vmatpush1.msra.mxu0 0.0
        %394 = vmatprep.subr.mxu0 0.0
        %395 = vmatpush1.msra.mxu0 0.0
        %396 = vmatprep.subr.mxu0 0.0
        %397 = vmatpush1.msra.mxu0 0.0
        %398 = vmatprep.subr.mxu0 0.0
        %399 = vmatpush1.msra.mxu0 0.0
        %400 = vmatprep.subr.mxu0 0.0
        %401 = vmatpush1.msra.mxu0 0.0
        %402 = vmatprep.subr.mxu0 0.0
        %403 = vmatpush1.msra.mxu0 0.0
        %404 = vmatprep.subr.mxu0 0.0
        %405 = vmatpush1.msra.mxu0 0.0
        %406 = vmatprep.subr.mxu0 0.0
        %407 = vmatpush1.msra.mxu0 0.0
        %408 = vmatprep.subr.mxu0 0.0
        %409 = vmatpush1.msra.mxu0 0.0
        %410 = vmatprep.subr.mxu0 0.0
        %411 = vmatpush1.msra.mxu0 0.0
        %412 = vmatprep.subr.mxu0 0.0
        %413 = vmatpush1.msra.mxu0 0.0
        %414 = vmatprep.subr.mxu0 0.0
        %415 = vmatpush1.msra.mxu0 0.0
        %416 = vmatprep.subr.mxu0 0.0
        %417 = vmatpush1.msra.mxu0 0.0
        %418 = vmatprep.subr.mxu0 0.0
        %419 = vmatpush1.msra.mxu0 0.0
        %420 = vmatprep.subr.mxu0 0.0
        %421 = vmatpush1.msra.mxu0 0.0
        %422 = vmatprep.subr.mxu0 0.0
        %423 = vmatpush1.msra.mxu0 0.0
        %424 = vmatprep.subr.mxu0 0.0
        %425 = vmatpush1.msra.mxu0 0.0
        %426 = vmatprep.subr.mxu0 0.0
        %427 = vmatpush1.msra.mxu0 0.0
        %428 = vmatprep.subr.mxu0 0.0
        %429 = vmatpush1.msra.mxu0 0.0
        %430 = vmatprep.subr.mxu0 0.0
        %431 = vmatpush1.msra.mxu0 0.0
        %432 = vmatprep.subr.mxu0 0.0
        %433 = vmatpush1.msra.mxu0 0.0
        %434 = vmatprep.mubr.f32.mxu0 0.0
        %435 = vmatmul.mubr.f32.gmra.mrb[0].mxu0 %v368
        %v436 = vpop.f32.mrb[0].mxu0
        %v437 = vadd.f32 %v364, %v436
        %v438 = vpop.f32.mrb[0].mxu0
        %439 = vdwg.mxu0
        %440 = vst.msk [vmem:[#allocation2] sm:$0xff] %vm366, %v437
        %v441 = vld [vmem:[%s5] sm:$0xff]
        %v442 = vld [vmem:[%s5 + $0x8] sm:$0xff]
        %v443 = vld [vmem:[%s5 + $0x10] sm:$0xff]
        %v444 = vld [vmem:[%s5 + $0x18] sm:$0xff]
        %v445 = vld [vmem:[%s6] sm:$0x1]
        %v447 = vlaneseq
        %v448 = vshrl.u32 %v447, 7
        %v449 = vsub.s32 0, %v448
        %v450 = vrot.slane %v445, %v449
        %452 = vmatprep.subr.mxu0 0.0
        %453 = vmatpush1.msra.mxu0 %v441
        %454 = vmatprep.subr.mxu0 0.0
        %455 = vmatpush1.msra.mxu0 %v442
        %456 = vmatprep.subr.mxu0 0.0
        %457 = vmatpush1.msra.mxu0 %v443
        %458 = vmatprep.subr.mxu0 0.0
        %459 = vmatpush1.msra.mxu0 %v444
        %460 = vmatprep.subr.mxu0 0.0
        %461 = vmatpush1.msra.mxu0 0.0
        %462 = vmatprep.subr.mxu0 0.0
        %463 = vmatpush1.msra.mxu0 0.0
        %464 = vmatprep.subr.mxu0 0.0
        %465 = vmatpush1.msra.mxu0 0.0
        %466 = vmatprep.subr.mxu0 0.0
        %467 = vmatpush1.msra.mxu0 0.0
        %468 = vmatprep.subr.mxu0 0.0
        %469 = vmatpush1.msra.mxu0 0.0
        %470 = vmatprep.subr.mxu0 0.0
        %471 = vmatpush1.msra.mxu0 0.0
        %472 = vmatprep.subr.mxu0 0.0
        %473 = vmatpush1.msra.mxu0 0.0
        %474 = vmatprep.subr.mxu0 0.0
        %475 = vmatpush1.msra.mxu0 0.0
        %476 = vmatprep.subr.mxu0 0.0
        %477 = vmatpush1.msra.mxu0 0.0
        %478 = vmatprep.subr.mxu0 0.0
        %479 = vmatpush1.msra.mxu0 0.0
        %480 = vmatprep.subr.mxu0 0.0
        %481 = vmatpush1.msra.mxu0 0.0
        %482 = vmatprep.subr.mxu0 0.0
        %483 = vmatpush1.msra.mxu0 0.0
        %484 = vmatprep.subr.mxu0 0.0
        %485 = vmatpush1.msra.mxu0 0.0
        %486 = vmatprep.subr.mxu0 0.0
        %487 = vmatpush1.msra.mxu0 0.0
        %488 = vmatprep.subr.mxu0 0.0
        %489 = vmatpush1.msra.mxu0 0.0
        %490 = vmatprep.subr.mxu0 0.0
        %491 = vmatpush1.msra.mxu0 0.0
        %492 = vmatprep.subr.mxu0 0.0
        %493 = vmatpush1.msra.mxu0 0.0
        %494 = vmatprep.subr.mxu0 0.0
        %495 = vmatpush1.msra.mxu0 0.0
        %496 = vmatprep.subr.mxu0 0.0
        %497 = vmatpush1.msra.mxu0 0.0
        %498 = vmatprep.subr.mxu0 0.0
        %499 = vmatpush1.msra.mxu0 0.0
        %500 = vmatprep.subr.mxu0 0.0
        %501 = vmatpush1.msra.mxu0 0.0
        %502 = vmatprep.subr.mxu0 0.0
        %503 = vmatpush1.msra.mxu0 0.0
        %504 = vmatprep.subr.mxu0 0.0
        %505 = vmatpush1.msra.mxu0 0.0
        %506 = vmatprep.subr.mxu0 0.0
        %507 = vmatpush1.msra.mxu0 0.0
        %508 = vmatprep.subr.mxu0 0.0
        %509 = vmatpush1.msra.mxu0 0.0
        %510 = vmatprep.subr.mxu0 0.0
        %511 = vmatpush1.msra.mxu0 0.0
        %512 = vmatprep.subr.mxu0 0.0
        %513 = vmatpush1.msra.mxu0 0.0
        %514 = vmatprep.subr.mxu0 0.0
        %515 = vmatpush1.msra.mxu0 0.0
        %516 = vmatprep.mubr.f32.mxu0 0.0
        %517 = vmatmul.mubr.f32.gmra.mrb[0].mxu0 %v368
        %v518 = vpop.f32.mrb[0].mxu0
        %v519 = vadd.f32 %v450, %v518
        %v520 = vpop.f32.mrb[0].mxu0
        %521 = vdwg.mxu0
        %522 = vst.msk [vmem:[#allocation3] sm:$0xff] %vm366, %v519
      $region52: #{transformer_decoder.13} parent=47 // pred_fallthru
        _
      %v523 = vld [vmem:[%s331] sm:$0xff]
      %v524 = vmul.f32 %v523, 0.17677669
      %v525 = vld [vmem:[#allocation2] sm:$0xff]
      %vm526 = vcmask 261120
      %v528 = vsel %vm526, %v524, 0
      %v531 = vsel %vm526, %v525, 0
      %533 = vmatprep.subr.mxu0 0.0
      %534 = vmatpush1.xpose.msra.mxu0 %v531
      %535 = vmatprep.subr.mxu0 0.0
      %536 = vmatpush1.xpose.msra.mxu0 0.0
      %537 = vmatprep.subr.mxu0 0.0
      %538 = vmatpush1.xpose.msra.mxu0 0.0
      %539 = vmatprep.subr.mxu0 0.0
      %540 = vmatpush1.xpose.msra.mxu0 0.0
      %541 = vmatprep.subr.mxu0 0.0
      %542 = vmatpush1.xpose.msra.mxu0 0.0
      %543 = vmatprep.subr.mxu0 0.0
      %544 = vmatpush1.xpose.msra.mxu0 0.0
      %545 = vmatprep.subr.mxu0 0.0
      %546 = vmatpush1.xpose.msra.mxu0 0.0
      %547 = vmatprep.subr.mxu0 0.0
      %548 = vmatpush1.xpose.msra.mxu0 0.0
      %549 = vmatprep.subr.mxu0 0.0
      %550 = vmatpush1.xpose.msra.mxu0 0.0
      %551 = vmatprep.subr.mxu0 0.0
      %552 = vmatpush1.xpose.msra.mxu0 0.0
      %553 = vmatprep.subr.mxu0 0.0
      %554 = vmatpush1.xpose.msra.mxu0 0.0
      %555 = vmatprep.subr.mxu0 0.0
      %556 = vmatpush1.xpose.msra.mxu0 0.0
      %557 = vmatprep.subr.mxu0 0.0
      %558 = vmatpush1.xpose.msra.mxu0 0.0
      %559 = vmatprep.subr.mxu0 0.0
      %560 = vmatpush1.xpose.msra.mxu0 0.0
      %561 = vmatprep.subr.mxu0 0.0
      %562 = vmatpush1.xpose.msra.mxu0 0.0
      %563 = vmatprep.subr.mxu0 0.0
      %564 = vmatpush1.xpose.msra.mxu0 0.0
      %565 = vmatprep.subr.mxu0 0.0
      %566 = vmatpush1.xpose.msra.mxu0 0.0
      %567 = vmatprep.subr.mxu0 0.0
      %568 = vmatpush1.xpose.msra.mxu0 0.0
      %569 = vmatprep.subr.mxu0 0.0
      %570 = vmatpush1.xpose.msra.mxu0 0.0
      %571 = vmatprep.subr.mxu0 0.0
      %572 = vmatpush1.xpose.msra.mxu0 0.0
      %573 = vmatprep.subr.mxu0 0.0
      %574 = vmatpush1.xpose.msra.mxu0 0.0
      %575 = vmatprep.subr.mxu0 0.0
      %576 = vmatpush1.xpose.msra.mxu0 0.0
      %577 = vmatprep.subr.mxu0 0.0
      %578 = vmatpush1.xpose.msra.mxu0 0.0
      %579 = vmatprep.subr.mxu0 0.0
      %580 = vmatpush1.xpose.msra.mxu0 0.0
      %581 = vmatprep.subr.mxu0 0.0
      %582 = vmatpush1.xpose.msra.mxu0 0.0
      %583 = vmatprep.subr.mxu0 0.0
      %584 = vmatpush1.xpose.msra.mxu0 0.0
      %585 = vmatprep.subr.mxu0 0.0
      %586 = vmatpush1.xpose.msra.mxu0 0.0
      %587 = vmatprep.subr.mxu0 0.0
      %588 = vmatpush1.xpose.msra.mxu0 0.0
      %589 = vmatprep.subr.mxu0 0.0
      %590 = vmatpush1.xpose.msra.mxu0 0.0
      %591 = vmatprep.subr.mxu0 0.0
      %592 = vmatpush1.xpose.msra.mxu0 0.0
      %593 = vmatprep.subr.mxu0 0.0
      %594 = vmatpush1.xpose.msra.mxu0 0.0
      %595 = vmatprep.subr.mxu0 0.0
      %596 = vmatpush1.xpose.msra.mxu0 0.0
      %597 = vmatprep.mubr.f32.mxu0 0.0
      %598 = vmatmul.mubr.f32.gmra.mrb[0].mxu0 %v528
      %v599 = vpop.f32.mrb[0].mxu0
      %v600 = vadd.f32 0.0, %v599
      %v601 = vpop.f32.mrb[0].mxu0
      %602 = vdwg.mxu0
      %vm603 = vcmask 64512
      %v604 = vsel %vm603, %v600, -inf
      %605 = vmax.xlane.f32.xlu0 %v604
      %v606 = vpop.xlane.xlu0 %605
      %v607 = vsub.f32 %v600, %v606
      %v608 = vmul.f32 %v607, 1.442695
      %v609 = vpow.pop %v608
      %v610 = vsel %vm603, %v609, 0.0
      %611 = vadd.xlane.f32.xlu0 %v610
      %v612 = vpop.xlane.xlu0 %611
      %v613 = vrcp.pop %v612
      %v614 = vmul.f32 %v609, %v613
      %v615 = vld [vmem:[#allocation3] sm:$0xff]
      %v617 = vsel %vm603, %v614, 0
      %619 = vmatprep.subr.mxu0 0.0
      %620 = vmatpush1.msra.mxu0 %v615
      %621 = vmatprep.subr.mxu0 0.0
      %622 = vmatpush1.msra.mxu0 0.0
      %623 = vmatprep.subr.mxu0 0.0
      %624 = vmatpush1.msra.mxu0 0.0
      %625 = vmatprep.subr.mxu0 0.0
      %626 = vmatpush1.msra.mxu0 0.0
      %627 = vmatprep.subr.mxu0 0.0
      %628 = vmatpush1.msra.mxu0 0.0
      %629 = vmatprep.subr.mxu0 0.0
      %630 = vmatpush1.msra.mxu0 0.0
      %631 = vmatprep.subr.mxu0 0.0
      %632 = vmatpush1.msra.mxu0 0.0
      %633 = vmatprep.subr.mxu0 0.0
      %634 = vmatpush1.msra.mxu0 0.0
      %635 = vmatprep.subr.mxu0 0.0
      %636 = vmatpush1.msra.mxu0 0.0
      %637 = vmatprep.subr.mxu0 0.0
      %638 = vmatpush1.msra.mxu0 0.0
      %639 = vmatprep.subr.mxu0 0.0
      %640 = vmatpush1.msra.mxu0 0.0
      %641 = vmatprep.subr.mxu0 0.0
      %642 = vmatpush1.msra.mxu0 0.0
      %643 = vmatprep.subr.mxu0 0.0
      %644 = vmatpush1.msra.mxu0 0.0
      %645 = vmatprep.subr.mxu0 0.0
      %646 = vmatpush1.msra.mxu0 0.0
      %647 = vmatprep.subr.mxu0 0.0
      %648 = vmatpush1.msra.mxu0 0.0
      %649 = vmatprep.subr.mxu0 0.0
      %650 = vmatpush1.msra.mxu0 0.0
      %651 = vmatprep.subr.mxu0 0.0
      %652 = vmatpush1.msra.mxu0 0.0
      %653 = vmatprep.subr.mxu0 0.0
      %654 = vmatpush1.msra.mxu0 0.0
      %655 = vmatprep.subr.mxu0 0.0
      %656 = vmatpush1.msra.mxu0 0.0
      %657 = vmatprep.subr.mxu0 0.0
      %658 = vmatpush1.msra.mxu0 0.0
      %659 = vmatprep.subr.mxu0 0.0
      %660 = vmatpush1.msra.mxu0 0.0
      %661 = vmatprep.subr.mxu0 0.0
      %662 = vmatpush1.msra.mxu0 0.0
      %663 = vmatprep.subr.mxu0 0.0
      %664 = vmatpush1.msra.mxu0 0.0
      %665 = vmatprep.subr.mxu0 0.0
      %666 = vmatpush1.msra.mxu0 0.0
      %667 = vmatprep.subr.mxu0 0.0
      %668 = vmatpush1.msra.mxu0 0.0
      %669 = vmatprep.subr.mxu0 0.0
      %670 = vmatpush1.msra.mxu0 0.0
      %671 = vmatprep.subr.mxu0 0.0
      %672 = vmatpush1.msra.mxu0 0.0
      %673 = vmatprep.subr.mxu0 0.0
      %674 = vmatpush1.msra.mxu0 0.0
      %675 = vmatprep.subr.mxu0 0.0
      %676 = vmatpush1.msra.mxu0 0.0
      %677 = vmatprep.subr.mxu0 0.0
      %678 = vmatpush1.msra.mxu0 0.0
      %679 = vmatprep.subr.mxu0 0.0
      %680 = vmatpush1.msra.mxu0 0.0
      %681 = vmatprep.subr.mxu0 0.0
      %682 = vmatpush1.msra.mxu0 0.0
      %683 = vmatprep.mubr.f32.mxu0 0.0
      %684 = vmatmul.mubr.f32.gmra.mrb[0].mxu0 %v617
      %v685 = vpop.f32.mrb[0].mxu0
      %v686 = vadd.f32 0.0, %v685
      %v687 = vpop.f32.mrb[0].mxu0
      %688 = vdwg.mxu0
      %v689 = vld [vmem:[%s342] sm:$0xff]
      %v690 = vadd.f32 %v689, %v686
      %691 = vst.msk [vmem:[%s349] sm:$0xff] %vm526, %v690
      %p692 = scmp.lt.s32.totalorder %s22, 1
      %s693 = scalar_select %p692, %s22, 1
      %p694 = scmp.lt.s32.totalorder %s23, 0
      %s695 = scalar_select %p694, %s23, 0
      %s696 = sadd.s32 %s695, %s693
      %s697 = smul.addr %s696, 8
      %s698 = scalar_lea.vmem %s7, %s697
      // Predicated region
      $region53: #{transformer_decoder.13} parent=47 // pred_check
        %p699 = pneg %p216
      $region54: #{transformer_decoder.13} parent=47 // pred_check_branch
        %701 = sbr.rel (%p699) target = $region56
      $region55: #{transformer_decoder.13} parent=47 // pred_region
        _
      $region56: #{transformer_decoder.13} parent=47 // pred_fallthru
        _
    $region48: #{transformer_decoder.13} parent=5 // pred_fallthru
      _
    %p702 = scmp.le.s32.totalorder 2, %s13
    // Predicated region
    $region57: #{transformer_decoder.13} parent=5 // pred_check
      %p703 = pneg %p702
    $region58: #{transformer_decoder.13} parent=5 // pred_check_branch
      %705 = sbr.rel (%p703) target = $region60
    $region59: #{transformer_decoder.13} parent=5 // pred_region
      %s706 = ssub.s32 %s13, 2
      // Predicated region
      $region61: #{transformer_decoder.13} parent=59 // pred_check
        %p707 = pneg %p222
      $region62: #{transformer_decoder.13} parent=59 // pred_check_branch
        %709 = sbr.rel (%p707) target = $region64
      $region63: #{transformer_decoder.13} parent=59 // pred_region
        %p710 = scmp.lt.s32.totalorder %s24, 1
        %s711 = scalar_select %p710, %s24, 1
        %p712 = scmp.lt.s32.totalorder %s25, 0
        %s713 = scalar_select %p712, %s25, 0
        %s714 = sadd.s32 %s713, %s711
        %s715 = smul.addr %s714, 8
        %s716 = scalar_lea.vmem %s7, %s715
      $region64: #{transformer_decoder.13} parent=59 // pred_fallthru
        _
    $region60: #{transformer_decoder.13} parent=5 // pred_fallthru
      _
  $region6: #{transformer_decoder.13} parent=0 // loop_footer
    %s17 = sadd.s32 1, %s13
  $region7: #{transformer_decoder.13} parent=0 // loop_footer_branch
    %12 = sbr.rel target = $region3
  $region8: #{transformer_decoder.13} parent=0 // loop_exit
    _

// kernel: transformer_decoder.11
$region0: #{transformer_decoder.11}
  #allocation0 [shape = 'u32[]', space=smem, size = 0x4, offset = 0x4, fixed_abs, tag = 'smem constant byte address 0x4 - core index']
  #allocation1 [shape = 'u32[144,128]{1,0:T(1,128)}', space=vmem, size = 0x12000, scoped, tag = 'internal scratch']
  %s0 = inlined_call_operand.vmem [shape: f32[2,8,96], index: 0, kind: input, shape index: {}]
  %s1 = inlined_call_operand.vmem [shape: f32[2,8,32], index: 1, kind: input, shape index: {}]
  %s2 = inlined_call_operand.vmem [shape: f32[32,32], index: 2, kind: input, shape index: {}]
  %s3 = inlined_call_operand.vmem [shape: f32[1,32], index: 3, kind: input, shape index: {}]
  %s4 = inlined_call_operand.vmem [shape: f32[2,8,32], index: 4, kind: output, shape index: {}]
  %s5 = sld [smem:[#allocation0]]
  $region49: #{transformer_decoder.11} parent=0
    _
  %s7 = ssub.s32 1, %s5
  %s8 = scalar_select 0, %s7, %s5
  loop: start=0, step=1, limit=4
  $region2: #{transformer_decoder.11} parent=0 // loop_pre_header
    _
  $region3: #{transformer_decoder.11} parent=0 // loop_header
    %s10 = sphi 0, %s14
    %p11 = scmp.ge.s32.totalorder %s10, 4
    %s17 = sphi 0, %s29
    %s18 = sphi 0, %s25
    %s19 = sphi 0, %s17
    %s20 = sphi 0, %s18
    %s21 = sphi 0, %s19
    %s22 = sphi 0, %s20
    %s32 = sphi 0, %s34
    %s35 = sphi 0, %s32
    %s36 = sphi 0, %s35
    %s52 = sphi 0, %s36
    %s60 = sphi 0, %s62
    %s63 = sphi 0, %s60
    %s64 = sphi 0, %s63
    %s80 = sphi 0, %s64
    %s84 = sphi 0, %s84
    %s86 = sphi 0, %s84
    %s87 = sphi 0, %s86
    %s101 = sphi 0, %s87
    %s105 = sphi 0, %s105
    %s107 = sphi 0, %s105
    %s108 = sphi 0, %s107
    %s122 = sphi 0, %s108
    %s130 = sphi 0, %s132
    %s133 = sphi 0, %s130
    %s134 = sphi 0, %s133
    %s150 = sphi 0, %s134
  $region4: #{transformer_decoder.11} parent=0 // loop_header_branch
    %13 = sbr.rel (%p11) target = $region8
  $region5: #{transformer_decoder.11} parent=0 // loop_body
    %s15 = ssub.s32 %s10, 1
    %s16 = ssub.s32 %s10, 2
    %s23 = sadd.s32 1, %s18
    %p24 = scmp.ge.s32.totalorder %s23, 1
    %s25 = scalar_select %p24, 0, %s23
    %s26 = sadd.s32 1, %s17
    %s27 = scalar_select %p24, %s26, %s17
    %p28 = scmp.ge.s32.totalorder %s27, 2
    %s29 = scalar_select %p28, 0, %s27
    %s30 = ssub.s32 %s17, %s29
    %p31 = scmp.eq.s32.totalorder %s30, 0
    %s33 = sadd.s32 %s32, 1
    %s34 = scalar_select %p31, %s32, %s33
    %p37 = pneg %p31
    %p38 = scmp.eq.s32.totalorder %s10, 1
    %p39 = por %p37, %p38
    %p40 = scmp.ne.s32.totalorder %s32, %s35
    %p41 = scmp.eq.s32.totalorder %s10, 0
    %p42 = por %p40, %p41
    %p43 = scmp.ne.s32.totalorder %s32, %s35
    %p44 = scmp.eq.s32.totalorder %s15, 1
    %p45 = por %p43, %p44
    %p46 = scmp.ne.s32.totalorder %s35, %s36
    %p47 = scmp.eq.s32.totalorder %s15, 0
    %p48 = por %p46, %p47
    %p49 = scmp.ne.s32.totalorder %s35, %s36
    %p50 = scmp.eq.s32.totalorder %s16, 1
    %p51 = por %p49, %p50
    %p53 = scmp.ne.s32.totalorder %s36, %s52
    %p54 = scmp.eq.s32.totalorder %s16, 0
    %p55 = por %p53, %p54
    %s56 = ssub.s32 %s17, %s29
    %s57 = ssub.s32 %s18, %s25
    %s58 = sor.u32 %s56, %s57
    %p59 = scmp.eq.s32.totalorder %s58, 0
    %s61 = sadd.s32 %s60, 1
    %s62 = scalar_select %p59, %s60, %s61
    %p65 = pneg %p59
    %p66 = scmp.eq.s32.totalorder %s10, 1
    %p67 = por %p65, %p66
    %p68 = scmp.ne.s32.totalorder %s60, %s63
    %p69 = scmp.eq.s32.totalorder %s10, 0
    %p70 = por %p68, %p69
    %p71 = scmp.ne.s32.totalorder %s60, %s63
    %p72 = scmp.eq.s32.totalorder %s15, 1
    %p73 = por %p71, %p72
    %p74 = scmp.ne.s32.totalorder %s63, %s64
    %p75 = scmp.eq.s32.totalorder %s15, 0
    %p76 = por %p74, %p75
    %p77 = scmp.ne.s32.totalorder %s63, %s64
    %p78 = scmp.eq.s32.totalorder %s16, 1
    %p79 = por %p77, %p78
    %p81 = scmp.ne.s32.totalorder %s64, %s80
    %p82 = scmp.eq.s32.totalorder %s16, 0
    %p83 = por %p81, %p82
    %s85 = sadd.s32 %s84, 1
    %p88 = scmp.eq.s32.totalorder %s10, 1
    %p89 = scmp.ne.s32.totalorder %s84, %s86
    %p90 = scmp.eq.s32.totalorder %s10, 0
    %p91 = por %p89, %p90
    %p92 = scmp.ne.s32.totalorder %s84, %s86
    %p93 = scmp.eq.s32.totalorder %s15, 1
    %p94 = por %p92, %p93
    %p95 = scmp.ne.s32.totalorder %s86, %s87
    %p96 = scmp.eq.s32.totalorder %s15, 0
    %p97 = por %p95, %p96
    %p98 = scmp.ne.s32.totalorder %s86, %s87
    %p99 = scmp.eq.s32.totalorder %s16, 1
    %p100 = por %p98, %p99
    %p102 = scmp.ne.s32.totalorder %s87, %s101
    %p103 = scmp.eq.s32.totalorder %s16, 0
    %p104 = por %p102, %p103
    %s106 = sadd.s32 %s105, 1
    %p109 = scmp.eq.s32.totalorder %s10, 1
    %p110 = scmp.ne.s32.totalorder %s105, %s107
    %p111 = scmp.eq.s32.totalorder %s10, 0
    %p112 = por %p110, %p111
    %p113 = scmp.ne.s32.totalorder %s105, %s107
    %p114 = scmp.eq.s32.totalorder %s15, 1
    %p115 = por %p113, %p114
    %p116 = scmp.ne.s32.totalorder %s107, %s108
    %p117 = scmp.eq.s32.totalorder %s15, 0
    %p118 = por %p116, %p117
    %p119 = scmp.ne.s32.totalorder %s107, %s108
    %p120 = scmp.eq.s32.totalorder %s16, 1
    %p121 = por %p119, %p120
    %p123 = scmp.ne.s32.totalorder %s108, %s122
    %p124 = scmp.eq.s32.totalorder %s16, 0
    %p125 = por %p123, %p124
    %s126 = ssub.s32 %s17, %s29
    %s127 = ssub.s32 %s18, %s25
    %s128 = sor.u32 %s126, %s127
    %p129 = scmp.eq.s32.totalorder %s128, 0
    %s131 = sadd.s32 %s130, 1
    %s132 = scalar_select %p129, %s130, %s131
    %p135 = pneg %p129
    %p136 = scmp.eq.s32.totalorder %s10, 1
    %p137 = por %p135, %p136
    %p138 = scmp.ne.s32.totalorder %s130, %s133
    %p139 = scmp.eq.s32.totalorder %s10, 0
    %p140 = por %p138, %p139
    %p141 = scmp.ne.s32.totalorder %s130, %s133
    %p142 = scmp.eq.s32.totalorder %s15, 1
    %p143 = por %p141, %p142
    %p144 = scmp.ne.s32.totalorder %s133, %s134
    %p145 = scmp.eq.s32.totalorder %s15, 0
    %p146 = por %p144, %p145
    %p147 = scmp.ne.s32.totalorder %s133, %s134
    %p148 = scmp.eq.s32.totalorder %s16, 1
    %p149 = por %p147, %p148
    %p151 = scmp.ne.s32.totalorder %s134, %s150
    %p152 = scmp.eq.s32.totalorder %s16, 0
    %p153 = por %p151, %p152
    %p154 = scmp.le.s32.totalorder 1, %s10
    %p155 = scmp.lt.s32.totalorder %s10, 3
    %p156 = pnand %p154, %p155
    %p157 = pneg %p156
    // Predicated region
    $region9: #{transformer_decoder.11} parent=5 // pred_check
      _
    $region10: #{transformer_decoder.11} parent=5 // pred_check_branch
      %159 = sbr.rel (%p156) target = $region12
    $region11: #{transformer_decoder.11} parent=5 // pred_region
      %s160 = ssub.s32 %s10, 1
      // Predicated region
      $region13: #{transformer_decoder.11} parent=11 // pred_check
        %p161 = pneg %p97
      $region14: #{transformer_decoder.11} parent=11 // pred_check_branch
        %163 = sbr.rel (%p161) target = $region16
      $region15: #{transformer_decoder.11} parent=11 // pred_region
        _
      $region16: #{transformer_decoder.11} parent=11 // pred_fallthru
        _
      // Predicated region
      $region17: #{transformer_decoder.11} parent=11 // pred_check
        %p164 = pneg %p118
      $region18: #{transformer_decoder.11} parent=11 // pred_check_branch
        %166 = sbr.rel (%p164) target = $region20
      $region19: #{transformer_decoder.11} parent=11 // pred_region
        _
      $region20: #{transformer_decoder.11} parent=11 // pred_fallthru
        _
    $region12: #{transformer_decoder.11} parent=5 // pred_fallthru
      _
    %p167 = scmp.lt.s32.totalorder %s10, 2
    // Predicated region
    $region21: #{transformer_decoder.11} parent=5 // pred_check
      %p168 = pneg %p167
    $region22: #{transformer_decoder.11} parent=5 // pred_check_branch
      %170 = sbr.rel (%p168) target = $region24
    $region23: #{transformer_decoder.11} parent=5 // pred_region
      // Predicated region
      $region25: #{transformer_decoder.11} parent=23 // pred_check
        %p171 = pneg %p42
      $region26: #{transformer_decoder.11} parent=23 // pred_check_branch
        %173 = sbr.rel (%p171) target = $region28
      $region27: #{transformer_decoder.11} parent=23 // pred_region
        %p174 = scmp.lt.s32.totalorder %s17, 1
        %s175 = scalar_select %p174, %s17, 1
        %s176 = smul.addr %s175, 8
        %s177 = scalar_lea.vmem %s0, %s176
      $region28: #{transformer_decoder.11} parent=23 // pred_fallthru
        _
      // Predicated region
      $region29: #{transformer_decoder.11} parent=23 // pred_check
        %p178 = pneg %p70
      $region30: #{transformer_decoder.11} parent=23 // pred_check_branch
        %180 = sbr.rel (%p178) target = $region32
      $region31: #{transformer_decoder.11} parent=23 // pred_region
        %p181 = scmp.lt.s32.totalorder %s17, 1
        %s182 = scalar_select %p181, %s17, 1
        %p183 = scmp.lt.s32.totalorder %s18, 0
        %s184 = scalar_select %p183, %s18, 0
        %s185 = sadd.s32 %s184, %s182
        %s186 = smul.addr %s185, 8
        %s187 = scalar_lea.vmem %s1, %s186
      $region32: #{transformer_decoder.11} parent=23 // pred_fallthru
        _
    $region24: #{transformer_decoder.11} parent=5 // pred_fallthru
      _
    %p188 = scmp.le.s32.totalorder 1, %s10
    %p189 = scmp.lt.s32.totalorder %s10, 3
    %p190 = pnand %p188, %p189
    %p191 = pneg %p190
    // Predicated region
    $region33: #{transformer_decoder.11} parent=5 // pred_check
      _
    $region34: #{transformer_decoder.11} parent=5 // pred_check_branch
      %193 = sbr.rel (%p190) target = $region36
    $region35: #{transformer_decoder.11} parent=5 // pred_region
      %s194 = ssub.s32 %s10, 1
      %p195 = scmp.lt.s32.totalorder %s19, 1
      %s196 = scalar_select %p195, %s19, 1
      %s197 = smul.addr %s196, 8
      %s198 = scalar_lea.vmem %s0, %s197
      %p199 = pneg %p48
      %p200 = pneg %p45
      %p201 = scmp.lt.s32.totalorder %s19, 1
      %s202 = scalar_select %p201, %s19, 1
      %p203 = scmp.lt.s32.totalorder %s20, 0
      %s204 = scalar_select %p203, %s20, 0
      %s205 = sadd.s32 %s204, %s202
      %s206 = smul.addr %s205, 8
      %s207 = scalar_lea.vmem %s1, %s206
      %p208 = pneg %p76
      %p209 = pneg %p73
      %p210 = pneg %p97
      %p211 = pneg %p94
      %p212 = pneg %p118
      %p213 = pneg %p115
      %p214 = pneg %p146
      %p215 = pneg %p143
      %p216 = scmp.lt.s32.totalorder %s19, 1
      %s217 = scalar_select %p216, %s19, 1
      %p218 = scmp.lt.s32.totalorder %s20, 0
      %s219 = scalar_select %p218, %s20, 0
      %s220 = sadd.s32 %s219, %s217
      %s221 = smul.addr %s220, 8
      %s222 = scalar_lea.vmem %s4, %s221
      %p223 = scmp.lt.s32.totalorder %s19, 1
      %s224 = scalar_select %p223, %s19, 1
      %s225 = smul.addr %s224, 8
      %s226 = scalar_lea.vmem %s0, %s225
      %p227 = scmp.lt.s32.totalorder %s19, 1
      %s228 = scalar_select %p227, %s19, 1
      %p229 = scmp.lt.s32.totalorder %s20, 0
      %s230 = scalar_select %p229, %s20, 0
      %s231 = sadd.s32 %s230, %s228
      %s232 = smul.addr %s231, 8
      %s233 = scalar_lea.vmem %s1, %s232
      %p234 = scmp.lt.s32.totalorder %s19, 1
      %s235 = scalar_select %p234, %s19, 1
      %p236 = scmp.lt.s32.totalorder %s20, 0
      %s237 = scalar_select %p236, %s20, 0
      %s238 = sadd.s32 %s237, %s235
      %s239 = smul.addr %s238, 8
      %s240 = scalar_lea.vmem %s4, %s239
      %v241 = vld [vmem:[%s226] sm:$0xff]
      %v242 = vmul.f32 %v241, 0.35355338
      %244 = vrot.lane.b32.xlu0 %v241, 96
      %v245 = vpop.permute.xlu0 %244
      %vm246 = vcmask 64512
      %v248 = vsel %vm246, %v242, 0
      %v250 = vsel %vm246, %v245, 0
      %252 = vmatprep.subr.mxu0 0.0
      %253 = vmatpush1.xpose.msra.mxu0 %v250
      %254 = vmatprep.subr.mxu0 0.0
      %255 = vmatpush1.xpose.msra.mxu0 0.0
      %256 = vmatprep.subr.mxu0 0.0
      %257 = vmatpush1.xpose.msra.mxu0 0.0
      %258 = vmatprep.subr.mxu0 0.0
      %259 = vmatpush1.xpose.msra.mxu0 0.0
      %260 = vmatprep.subr.mxu0 0.0
      %261 = vmatpush1.xpose.msra.mxu0 0.0
      %262 = vmatprep.subr.mxu0 0.0
      %263 = vmatpush1.xpose.msra.mxu0 0.0
      %264 = vmatprep.subr.mxu0 0.0
      %265 = vmatpush1.xpose.msra.mxu0 0.0
      %266 = vmatprep.subr.mxu0 0.0
      %267 = vmatpush1.xpose.msra.mxu0 0.0
      %268 = vmatprep.subr.mxu0 0.0
      %269 = vmatpush1.xpose.msra.mxu0 0.0
      %270 = vmatprep.subr.mxu0 0.0
      %271 = vmatpush1.xpose.msra.mxu0 0.0
      %272 = vmatprep.subr.mxu0 0.0
      %273 = vmatpush1.xpose.msra.mxu0 0.0
      %274 = vmatprep.subr.mxu0 0.0
      %275 = vmatpush1.xpose.msra.mxu0 0.0
      %276 = vmatprep.subr.mxu0 0.0
      %277 = vmatpush1.xpose.msra.mxu0 0.0
      %278 = vmatprep.subr.mxu0 0.0
      %279 = vmatpush1.xpose.msra.mxu0 0.0
      %280 = vmatprep.subr.mxu0 0.0
      %281 = vmatpush1.xpose.msra.mxu0 0.0
      %282 = vmatprep.subr.mxu0 0.0
      %283 = vmatpush1.xpose.msra.mxu0 0.0
      %284 = vmatprep.subr.mxu0 0.0
      %285 = vmatpush1.xpose.msra.mxu0 0.0
      %286 = vmatprep.subr.mxu0 0.0
      %287 = vmatpush1.xpose.msra.mxu0 0.0
      %288 = vmatprep.subr.mxu0 0.0
      %289 = vmatpush1.xpose.msra.mxu0 0.0
      %290 = vmatprep.subr.mxu0 0.0
      %291 = vmatpush1.xpose.msra.mxu0 0.0
      %292 = vmatprep.subr.mxu0 0.0
      %293 = vmatpush1.xpose.msra.mxu0 0.0
      %294 = vmatprep.subr.mxu0 0.0
      %295 = vmatpush1.xpose.msra.mxu0 0.0
      %296 = vmatprep.subr.mxu0 0.0
      %297 = vmatpush1.xpose.msra.mxu0 0.0
      %298 = vmatprep.subr.mxu0 0.0
      %299 = vmatpush1.xpose.msra.mxu0 0.0
      %300 = vmatprep.subr.mxu0 0.0
      %301 = vmatpush1.xpose.msra.mxu0 0.0
      %302 = vmatprep.subr.mxu0 0.0
      %303 = vmatpush1.xpose.msra.mxu0 0.0
      %304 = vmatprep.subr.mxu0 0.0
      %305 = vmatpush1.xpose.msra.mxu0 0.0
      %306 = vmatprep.subr.mxu0 0.0
      %307 = vmatpush1.xpose.msra.mxu0 0.0
      %308 = vmatprep.subr.mxu0 0.0
      %309 = vmatpush1.xpose.msra.mxu0 0.0
      %310 = vmatprep.subr.mxu0 0.0
      %311 = vmatpush1.xpose.msra.mxu0 0.0
      %312 = vmatprep.subr.mxu0 0.0
      %313 = vmatpush1.xpose.msra.mxu0 0.0
      %314 = vmatprep.subr.mxu0 0.0
      %315 = vmatpush1.xpose.msra.mxu0 0.0
      %316 = vmatprep.mubr.f32.mxu0 0.0
      %317 = vmatmul.mubr.f32.gmra.mrb[0].mxu0 %v248
      %v318 = vpop.f32.mrb[0].mxu0
      %v319 = vadd.f32 0.0, %v318
      %v320 = vpop.f32.mrb[0].mxu0
      %321 = vdwg.mxu0
      %v322 = vsel %vm246, %v319, -inf
      %323 = vmax.xlane.f32.xlu0 %v322
      %v324 = vpop.xlane.xlu0 %323
      %v325 = vsub.f32 %v319, %v324
      %v326 = vmul.f32 %v325, 1.442695
      %v327 = vpow.pop %v326
      %v328 = vsel %vm246, %v327, 0.0
      %329 = vadd.xlane.f32.xlu0 %v328
      %v330 = vpop.xlane.xlu0 %329
      %v331 = vrcp.pop %v330
      %v332 = vmul.f32 %v327, %v331
      %333 = vrot.lane.b32.xlu0 %v241, 64
      %v334 = vpop.permute.xlu0 %333
      %v337 = vsel %vm246, %v332, 0
      %339 = vmatprep.subr.mxu0 0.0
      %340 = vmatpush1.msra.mxu0 %v334
      %341 = vmatprep.subr.mxu0 0.0
      %342 = vmatpush1.msra.mxu0 0.0
      %343 = vmatprep.subr.mxu0 0.0
      %344 = vmatpush1.msra.mxu0 0.0
      %345 = vmatprep.subr.mxu0 0.0
      %346 = vmatpush1.msra.mxu0 0.0
      %347 = vmatprep.subr.mxu0 0.0
      %348 = vmatpush1.msra.mxu0 0.0
      %349 = vmatprep.subr.mxu0 0.0
      %350 = vmatpush1.msra.mxu0 0.0
      %351 = vmatprep.subr.mxu0 0.0
      %352 = vmatpush1.msra.mxu0 0.0
      %353 = vmatprep.subr.mxu0 0.0
      %354 = vmatpush1.msra.mxu0 0.0
      %355 = vmatprep.subr.mxu0 0.0
      %356 = vmatpush1.msra.mxu0 0.0
      %357 = vmatprep.subr.mxu0 0.0
      %358 = vmatpush1.msra.mxu0 0.0
      %359 = vmatprep.subr.mxu0 0.0
      %360 = vmatpush1.msra.mxu0 0.0
      %361 = vmatprep.subr.mxu0 0.0
      %362 = vmatpush1.msra.mxu0 0.0
      %363 = vmatprep.subr.mxu0 0.0
      %364 = vmatpush1.msra.mxu0 0.0
      %365 = vmatprep.subr.mxu0 0.0
      %366 = vmatpush1.msra.mxu0 0.0
      %367 = vmatprep.subr.mxu0 0.0
      %368 = vmatpush1.msra.mxu0 0.0
      %369 = vmatprep.subr.mxu0 0.0
      %370 = vmatpush1.msra.mxu0 0.0
      %371 = vmatprep.subr.mxu0 0.0
      %372 = vmatpush1.msra.mxu0 0.0
      %373 = vmatprep.subr.mxu0 0.0
      %374 = vmatpush1.msra.mxu0 0.0
      %375 = vmatprep.subr.mxu0 0.0
      %376 = vmatpush1.msra.mxu0 0.0
      %377 = vmatprep.subr.mxu0 0.0
      %378 = vmatpush1.msra.mxu0 0.0
      %379 = vmatprep.subr.mxu0 0.0
      %380 = vmatpush1.msra.mxu0 0.0
      %381 = vmatprep.subr.mxu0 0.0
      %382 = vmatpush1.msra.mxu0 0.0
      %383 = vmatprep.subr.mxu0 0.0
      %384 = vmatpush1.msra.mxu0 0.0
      %385 = vmatprep.subr.mxu0 0.0
      %386 = vmatpush1.msra.mxu0 0.0
      %387 = vmatprep.subr.mxu0 0.0
      %388 = vmatpush1.msra.mxu0 0.0
      %389 = vmatprep.subr.mxu0 0.0
      %390 = vmatpush1.msra.mxu0 0.0
      %391 = vmatprep.subr.mxu0 0.0
      %392 = vmatpush1.msra.mxu0 0.0
      %393 = vmatprep.subr.mxu0 0.0
      %394 = vmatpush1.msra.mxu0 0.0
      %395 = vmatprep.subr.mxu0 0.0
      %396 = vmatpush1.msra.mxu0 0.0
      %397 = vmatprep.subr.mxu0 0.0
      %398 = vmatpush1.msra.mxu0 0.0
      %399 = vmatprep.subr.mxu0 0.0
      %400 = vmatpush1.msra.mxu0 0.0
      %401 = vmatprep.subr.mxu0 0.0
      %402 = vmatpush1.msra.mxu0 0.0
      %403 = vmatprep.mubr.f32.mxu0 0.0
      %404 = vmatmul.mubr.f32.gmra.mrb[0].mxu0 %v337
      %v405 = vpop.f32.mrb[0].mxu0
      %v406 = vadd.f32 0.0, %v405
      %v407 = vpop.f32.mrb[0].mxu0
      %408 = vdwg.mxu0
      %409 = vrot.lane.b32.xlu0 %v242, 120
      %v410 = vpop.permute.xlu0 %409
      %411 = vrot.lane.b32.xlu0 %v241, 88
      %v412 = vpop.permute.xlu0 %411
      %v413 = vsel %vm246, %v410, 0
      %v415 = vsel %vm246, %v412, 0
      %417 = vmatprep.subr.mxu0 0.0
      %418 = vmatpush1.xpose.msra.mxu0 %v415
      %419 = vmatprep.subr.mxu0 0.0
      %420 = vmatpush1.xpose.msra.mxu0 0.0
      %421 = vmatprep.subr.mxu0 0.0
      %422 = vmatpush1.xpose.msra.mxu0 0.0
      %423 = vmatprep.subr.mxu0 0.0
      %424 = vmatpush1.xpose.msra.mxu0 0.0
      %425 = vmatprep.subr.mxu0 0.0
      %426 = vmatpush1.xpose.msra.mxu0 0.0
      %427 = vmatprep.subr.mxu0 0.0
      %428 = vmatpush1.xpose.msra.mxu0 0.0
      %429 = vmatprep.subr.mxu0 0.0
      %430 = vmatpush1.xpose.msra.mxu0 0.0
      %431 = vmatprep.subr.mxu0 0.0
      %432 = vmatpush1.xpose.msra.mxu0 0.0
      %433 = vmatprep.subr.mxu0 0.0
      %434 = vmatpush1.xpose.msra.mxu0 0.0
      %435 = vmatprep.subr.mxu0 0.0
      %436 = vmatpush1.xpose.msra.mxu0 0.0
      %437 = vmatprep.subr.mxu0 0.0
      %438 = vmatpush1.xpose.msra.mxu0 0.0
      %439 = vmatprep.subr.mxu0 0.0
      %440 = vmatpush1.xpose.msra.mxu0 0.0
      %441 = vmatprep.subr.mxu0 0.0
      %442 = vmatpush1.xpose.msra.mxu0 0.0
      %443 = vmatprep.subr.mxu0 0.0
      %444 = vmatpush1.xpose.msra.mxu0 0.0
      %445 = vmatprep.subr.mxu0 0.0
      %446 = vmatpush1.xpose.msra.mxu0 0.0
      %447 = vmatprep.subr.mxu0 0.0
      %448 = vmatpush1.xpose.msra.mxu0 0.0
      %449 = vmatprep.subr.mxu0 0.0
      %450 = vmatpush1.xpose.msra.mxu0 0.0
      %451 = vmatprep.subr.mxu0 0.0
      %452 = vmatpush1.xpose.msra.mxu0 0.0
      %453 = vmatprep.subr.mxu0 0.0
      %454 = vmatpush1.xpose.msra.mxu0 0.0
      %455 = vmatprep.subr.mxu0 0.0
      %456 = vmatpush1.xpose.msra.mxu0 0.0
      %457 = vmatprep.subr.mxu0 0.0
      %458 = vmatpush1.xpose.msra.mxu0 0.0
      %459 = vmatprep.subr.mxu0 0.0
      %460 = vmatpush1.xpose.msra.mxu0 0.0
      %461 = vmatprep.subr.mxu0 0.0
      %462 = vmatpush1.xpose.msra.mxu0 0.0
      %463 = vmatprep.subr.mxu0 0.0
      %464 = vmatpush1.xpose.msra.mxu0 0.0
      %465 = vmatprep.subr.mxu0 0.0
      %466 = vmatpush1.xpose.msra.mxu0 0.0
      %467 = vmatprep.subr.mxu0 0.0
      %468 = vmatpush1.xpose.msra.mxu0 0.0
      %469 = vmatprep.subr.mxu0 0.0
      %470 = vmatpush1.xpose.msra.mxu0 0.0
      %471 = vmatprep.subr.mxu0 0.0
      %472 = vmatpush1.xpose.msra.mxu0 0.0
      %473 = vmatprep.subr.mxu0 0.0
      %474 = vmatpush1.xpose.msra.mxu0 0.0
      %475 = vmatprep.subr.mxu0 0.0
      %476 = vmatpush1.xpose.msra.mxu0 0.0
      %477 = vmatprep.subr.mxu0 0.0
      %478 = vmatpush1.xpose.msra.mxu0 0.0
      %479 = vmatprep.subr.mxu0 0.0
      %480 = vmatpush1.xpose.msra.mxu0 0.0
      %481 = vmatprep.mubr.f32.mxu0 0.0
      %482 = vmatmul.mubr.f32.gmra.mrb[0].mxu0 %v413
      %v483 = vpop.f32.mrb[0].mxu0
      %v484 = vadd.f32 0.0, %v483
      %v485 = vpop.f32.mrb[0].mxu0
      %486 = vdwg.mxu0
      %v487 = vsel %vm246, %v484, -inf
      %488 = vmax.xlane.f32.xlu0 %v487
      %v489 = vpop.xlane.xlu0 %488
      %v490 = vsub.f32 %v484, %v489
      %v491 = vmul.f32 %v490, 1.442695
      %v492 = vpow.pop %v491
      %v493 = vsel %vm246, %v492, 0.0
      %494 = vadd.xlane.f32.xlu0 %v493
      %v495 = vpop.xlane.xlu0 %494
      %v496 = vrcp.pop %v495
      %v497 = vmul.f32 %v492, %v496
      %498 = vrot.lane.b32.xlu0 %v241, 56
      %v499 = vpop.permute.xlu0 %498
      %v502 = vsel %vm246, %v497, 0
      %504 = vmatprep.subr.mxu0 0.0
      %505 = vmatpush1.msra.mxu0 %v499
      %506 = vmatprep.subr.mxu0 0.0
      %507 = vmatpush1.msra.mxu0 0.0
      %508 = vmatprep.subr.mxu0 0.0
      %509 = vmatpush1.msra.mxu0 0.0
      %510 = vmatprep.subr.mxu0 0.0
      %511 = vmatpush1.msra.mxu0 0.0
      %512 = vmatprep.subr.mxu0 0.0
      %513 = vmatpush1.msra.mxu0 0.0
      %514 = vmatprep.subr.mxu0 0.0
      %515 = vmatpush1.msra.mxu0 0.0
      %516 = vmatprep.subr.mxu0 0.0
      %517 = vmatpush1.msra.mxu0 0.0
      %518 = vmatprep.subr.mxu0 0.0
      %519 = vmatpush1.msra.mxu0 0.0
      %520 = vmatprep.subr.mxu0 0.0
      %521 = vmatpush1.msra.mxu0 0.0
      %522 = vmatprep.subr.mxu0 0.0
      %523 = vmatpush1.msra.mxu0 0.0
      %524 = vmatprep.subr.mxu0 0.0
      %525 = vmatpush1.msra.mxu0 0.0
      %526 = vmatprep.subr.mxu0 0.0
      %527 = vmatpush1.msra.mxu0 0.0
      %528 = vmatprep.subr.mxu0 0.0
      %529 = vmatpush1.msra.mxu0 0.0
      %530 = vmatprep.subr.mxu0 0.0
      %531 = vmatpush1.msra.mxu0 0.0
      %532 = vmatprep.subr.mxu0 0.0
      %533 = vmatpush1.msra.mxu0 0.0
      %534 = vmatprep.subr.mxu0 0.0
      %535 = vmatpush1.msra.mxu0 0.0
      %536 = vmatprep.subr.mxu0 0.0
      %537 = vmatpush1.msra.mxu0 0.0
      %538 = vmatprep.subr.mxu0 0.0
      %539 = vmatpush1.msra.mxu0 0.0
      %540 = vmatprep.subr.mxu0 0.0
      %541 = vmatpush1.msra.mxu0 0.0
      %542 = vmatprep.subr.mxu0 0.0
      %543 = vmatpush1.msra.mxu0 0.0
      %544 = vmatprep.subr.mxu0 0.0
      %545 = vmatpush1.msra.mxu0 0.0
      %546 = vmatprep.subr.mxu0 0.0
      %547 = vmatpush1.msra.mxu0 0.0
      %548 = vmatprep.subr.mxu0 0.0
      %549 = vmatpush1.msra.mxu0 0.0
      %550 = vmatprep.subr.mxu0 0.0
      %551 = vmatpush1.msra.mxu0 0.0
      %552 = vmatprep.subr.mxu0 0.0
      %553 = vmatpush1.msra.mxu0 0.0
      %554 = vmatprep.subr.mxu0 0.0
      %555 = vmatpush1.msra.mxu0 0.0
      %556 = vmatprep.subr.mxu0 0.0
      %557 = vmatpush1.msra.mxu0 0.0
      %558 = vmatprep.subr.mxu0 0.0
      %559 = vmatpush1.msra.mxu0 0.0
      %560 = vmatprep.subr.mxu0 0.0
      %561 = vmatpush1.msra.mxu0 0.0
      %562 = vmatprep.subr.mxu0 0.0
      %563 = vmatpush1.msra.mxu0 0.0
      %564 = vmatprep.subr.mxu0 0.0
      %565 = vmatpush1.msra.mxu0 0.0
      %566 = vmatprep.subr.mxu0 0.0
      %567 = vmatpush1.msra.mxu0 0.0
      %568 = vmatprep.mubr.f32.mxu0 0.0
      %569 = vmatmul.mubr.f32.gmra.mrb[0].mxu0 %v502
      %v570 = vpop.f32.mrb[0].mxu0
      %v571 = vadd.f32 0.0, %v570
      %v572 = vpop.f32.mrb[0].mxu0
      %573 = vdwg.mxu0
      %574 = vrot.lane.b32.xlu0 %v242, 112
      %v575 = vpop.permute.xlu0 %574
      %576 = vrot.lane.b32.xlu0 %v241, 80
      %v577 = vpop.permute.xlu0 %576
      %v578 = vsel %vm246, %v575, 0
      %v580 = vsel %vm246, %v577, 0
      %582 = vmatprep.subr.mxu0 0.0
      %583 = vmatpush1.xpose.msra.mxu0 %v580
      %584 = vmatprep.subr.mxu0 0.0
      %585 = vmatpush1.xpose.msra.mxu0 0.0
      %586 = vmatprep.subr.mxu0 0.0
      %587 = vmatpush1.xpose.msra.mxu0 0.0
      %588 = vmatprep.subr.mxu0 0.0
      %589 = vmatpush1.xpose.msra.mxu0 0.0
      %590 = vmatprep.subr.mxu0 0.0
      %591 = vmatpush1.xpose.msra.mxu0 0.0
      %592 = vmatprep.subr.mxu0 0.0
      %593 = vmatpush1.xpose.msra.mxu0 0.0
      %594 = vmatprep.subr.mxu0 0.0
      %595 = vmatpush1.xpose.msra.mxu0 0.0
      %596 = vmatprep.subr.mxu0 0.0
      %597 = vmatpush1.xpose.msra.mxu0 0.0
      %598 = vmatprep.subr.mxu0 0.0
      %599 = vmatpush1.xpose.msra.mxu0 0.0
      %600 = vmatprep.subr.mxu0 0.0
      %601 = vmatpush1.xpose.msra.mxu0 0.0
      %602 = vmatprep.subr.mxu0 0.0
      %603 = vmatpush1.xpose.msra.mxu0 0.0
      %604 = vmatprep.subr.mxu0 0.0
      %605 = vmatpush1.xpose.msra.mxu0 0.0
      %606 = vmatprep.subr.mxu0 0.0
      %607 = vmatpush1.xpose.msra.mxu0 0.0
      %608 = vmatprep.subr.mxu0 0.0
      %609 = vmatpush1.xpose.msra.mxu0 0.0
      %610 = vmatprep.subr.mxu0 0.0
      %611 = vmatpush1.xpose.msra.mxu0 0.0
      %612 = vmatprep.subr.mxu0 0.0
      %613 = vmatpush1.xpose.msra.mxu0 0.0
      %614 = vmatprep.subr.mxu0 0.0
      %615 = vmatpush1.xpose.msra.mxu0 0.0
      %616 = vmatprep.subr.mxu0 0.0
      %617 = vmatpush1.xpose.msra.mxu0 0.0
      %618 = vmatprep.subr.mxu0 0.0
      %619 = vmatpush1.xpose.msra.mxu0 0.0
      %620 = vmatprep.subr.mxu0 0.0
      %621 = vmatpush1.xpose.msra.mxu0 0.0
      %622 = vmatprep.subr.mxu0 0.0
      %623 = vmatpush1.xpose.msra.mxu0 0.0
      %624 = vmatprep.subr.mxu0 0.0
      %625 = vmatpush1.xpose.msra.mxu0 0.0
      %626 = vmatprep.subr.mxu0 0.0
      %627 = vmatpush1.xpose.msra.mxu0 0.0
      %628 = vmatprep.subr.mxu0 0.0
      %629 = vmatpush1.xpose.msra.mxu0 0.0
      %630 = vmatprep.subr.mxu0 0.0
      %631 = vmatpush1.xpose.msra.mxu0 0.0
      %632 = vmatprep.subr.mxu0 0.0
      %633 = vmatpush1.xpose.msra.mxu0 0.0
      %634 = vmatprep.subr.mxu0 0.0
      %635 = vmatpush1.xpose.msra.mxu0 0.0
      %636 = vmatprep.subr.mxu0 0.0
      %637 = vmatpush1.xpose.msra.mxu0 0.0
      %638 = vmatprep.subr.mxu0 0.0
      %639 = vmatpush1.xpose.msra.mxu0 0.0
      %640 = vmatprep.subr.mxu0 0.0
      %641 = vmatpush1.xpose.msra.mxu0 0.0
      %642 = vmatprep.subr.mxu0 0.0
      %643 = vmatpush1.xpose.msra.mxu0 0.0
      %644 = vmatprep.subr.mxu0 0.0
      %645 = vmatpush1.xpose.msra.mxu0 0.0
      %646 = vmatprep.mubr.f32.mxu0 0.0
      %647 = vmatmul.mubr.f32.gmra.mrb[0].mxu0 %v578
      %v648 = vpop.f32.mrb[0].mxu0
      %v649 = vadd.f32 0.0, %v648
      %v650 = vpop.f32.mrb[0].mxu0
      %651 = vdwg.mxu0
      %v652 = vsel %vm246, %v649, -inf
      %653 = vmax.xlane.f32.xlu0 %v652
      %v654 = vpop.xlane.xlu0 %653
      %v655 = vsub.f32 %v649, %v654
      %v656 = vmul.f32 %v655, 1.442695
      %v657 = vpow.pop %v656
      %v658 = vsel %vm246, %v657, 0.0
      %659 = vadd.xlane.f32.xlu0 %v658
      %v660 = vpop.xlane.xlu0 %659
      %v661 = vrcp.pop %v660
      %v662 = vmul.f32 %v657, %v661
      %663 = vrot.lane.b32.xlu0 %v241, 48
      %v664 = vpop.permute.xlu0 %663
      %v667 = vsel %vm246, %v662, 0
      %669 = vmatprep.subr.mxu0 0.0
      %670 = vmatpush1.msra.mxu0 %v664
      %671 = vmatprep.subr.mxu0 0.0
      %672 = vmatpush1.msra.mxu0 0.0
      %673 = vmatprep.subr.mxu0 0.0
      %674 = vmatpush1.msra.mxu0 0.0
      %675 = vmatprep.subr.mxu0 0.0
      %676 = vmatpush1.msra.mxu0 0.0
      %677 = vmatprep.subr.mxu0 0.0
      %678 = vmatpush1.msra.mxu0 0.0
      %679 = vmatprep.subr.mxu0 0.0
      %680 = vmatpush1.msra.mxu0 0.0
      %681 = vmatprep.subr.mxu0 0.0
      %682 = vmatpush1.msra.mxu0 0.0
      %683 = vmatprep.subr.mxu0 0.0
      %684 = vmatpush1.msra.mxu0 0.0
      %685 = vmatprep.subr.mxu0 0.0
      %686 = vmatpush1.msra.mxu0 0.0
      %687 = vmatprep.subr.mxu0 0.0
      %688 = vmatpush1.msra.mxu0 0.0
      %689 = vmatprep.subr.mxu0 0.0
      %690 = vmatpush1.msra.mxu0 0.0
      %691 = vmatprep.subr.mxu0 0.0
      %692 = vmatpush1.msra.mxu0 0.0
      %693 = vmatprep.subr.mxu0 0.0
      %694 = vmatpush1.msra.mxu0 0.0
      %695 = vmatprep.subr.mxu0 0.0
      %696 = vmatpush1.msra.mxu0 0.0
      %697 = vmatprep.subr.mxu0 0.0
      %698 = vmatpush1.msra.mxu0 0.0
      %699 = vmatprep.subr.mxu0 0.0
      %700 = vmatpush1.msra.mxu0 0.0
      %701 = vmatprep.subr.mxu0 0.0
      %702 = vmatpush1.msra.mxu0 0.0
      %703 = vmatprep.subr.mxu0 0.0
      %704 = vmatpush1.msra.mxu0 0.0
      %705 = vmatprep.subr.mxu0 0.0
      %706 = vmatpush1.msra.mxu0 0.0
      %707 = vmatprep.subr.mxu0 0.0
      %708 = vmatpush1.msra.mxu0 0.0
      %709 = vmatprep.subr.mxu0 0.0
      %710 = vmatpush1.msra.mxu0 0.0
      %711 = vmatprep.subr.mxu0 0.0
      %712 = vmatpush1.msra.mxu0 0.0
      %713 = vmatprep.subr.mxu0 0.0
      %714 = vmatpush1.msra.mxu0 0.0
      %715 = vmatprep.subr.mxu0 0.0
      %716 = vmatpush1.msra.mxu0 0.0
      %717 = vmatprep.subr.mxu0 0.0
      %718 = vmatpush1.msra.mxu0 0.0
      %719 = vmatprep.subr.mxu0 0.0
      %720 = vmatpush1.msra.mxu0 0.0
      %721 = vmatprep.subr.mxu0 0.0
      %722 = vmatpush1.msra.mxu0 0.0
      %723 = vmatprep.subr.mxu0 0.0
      %724 = vmatpush1.msra.mxu0 0.0
      %725 = vmatprep.subr.mxu0 0.0
      %726 = vmatpush1.msra.mxu0 0.0
      %727 = vmatprep.subr.mxu0 0.0
      %728 = vmatpush1.msra.mxu0 0.0
      %729 = vmatprep.subr.mxu0 0.0
      %730 = vmatpush1.msra.mxu0 0.0
      %731 = vmatprep.subr.mxu0 0.0
      %732 = vmatpush1.msra.mxu0 0.0
      %733 = vmatprep.mubr.f32.mxu0 0.0
      %734 = vmatmul.mubr.f32.gmra.mrb[0].mxu0 %v667
      %v735 = vpop.f32.mrb[0].mxu0
      %v736 = vadd.f32 0.0, %v735
      %v737 = vpop.f32.mrb[0].mxu0
      %738 = vdwg.mxu0
      %739 = vrot.lane.b32.xlu0 %v242, 104
      %v740 = vpop.permute.xlu0 %739
      %741 = vrot.lane.b32.xlu0 %v241, 72
      %v742 = vpop.permute.xlu0 %741
      %v743 = vsel %vm246, %v740, 0
      %v745 = vsel %vm246, %v742, 0
      %747 = vmatprep.subr.mxu0 0.0
      %748 = vmatpush1.xpose.msra.mxu0 %v745
      %749 = vmatprep.subr.mxu0 0.0
      %750 = vmatpush1.xpose.msra.mxu0 0.0
      %751 = vmatprep.subr.mxu0 0.0
      %752 = vmatpush1.xpose.msra.mxu0 0.0
      %753 = vmatprep.subr.mxu0 0.0
      %754 = vmatpush1.xpose.msra.mxu0 0.0
      %755 = vmatprep.subr.mxu0 0.0
      %756 = vmatpush1.xpose.msra.mxu0 0.0
      %757 = vmatprep.subr.mxu0 0.0
      %758 = vmatpush1.xpose.msra.mxu0 0.0
      %759 = vmatprep.subr.mxu0 0.0
      %760 = vmatpush1.xpose.msra.mxu0 0.0
      %761 = vmatprep.subr.mxu0 0.0
      %762 = vmatpush1.xpose.msra.mxu0 0.0
      %763 = vmatprep.subr.mxu0 0.0
      %764 = vmatpush1.xpose.msra.mxu0 0.0
      %765 = vmatprep.subr.mxu0 0.0
      %766 = vmatpush1.xpose.msra.mxu0 0.0
      %767 = vmatprep.subr.mxu0 0.0
      %768 = vmatpush1.xpose.msra.mxu0 0.0
      %769 = vmatprep.subr.mxu0 0.0
      %770 = vmatpush1.xpose.msra.mxu0 0.0
      %771 = vmatprep.subr.mxu0 0.0
      %772 = vmatpush1.xpose.msra.mxu0 0.0
      %773 = vmatprep.subr.mxu0 0.0
      %774 = vmatpush1.xpose.msra.mxu0 0.0
      %775 = vmatprep.subr.mxu0 0.0
      %776 = vmatpush1.xpose.msra.mxu0 0.0
      %777 = vmatprep.subr.mxu0 0.0
      %778 = vmatpush1.xpose.msra.mxu0 0.0
      %779 = vmatprep.subr.mxu0 0.0
      %780 = vmatpush1.xpose.msra.mxu0 0.0
      %781 = vmatprep.subr.mxu0 0.0
      %782 = vmatpush1.xpose.msra.mxu0 0.0
      %783 = vmatprep.subr.mxu0 0.0
      %784 = vmatpush1.xpose.msra.mxu0 0.0
      %785 = vmatprep.subr.mxu0 0.0
      %786 = vmatpush1.xpose.msra.mxu0 0.0
      %787 = vmatprep.subr.mxu0 0.0
      %788 = vmatpush1.xpose.msra.mxu0 0.0
      %789 = vmatprep.subr.mxu0 0.0
      %790 = vmatpush1.xpose.msra.mxu0 0.0
      %791 = vmatprep.subr.mxu0 0.0
      %792 = vmatpush1.xpose.msra.mxu0 0.0
      %793 = vmatprep.subr.mxu0 0.0
      %794 = vmatpush1.xpose.msra.mxu0 0.0
      %795 = vmatprep.subr.mxu0 0.0
      %796 = vmatpush1.xpose.msra.mxu0 0.0
      %797 = vmatprep.subr.mxu0 0.0
      %798 = vmatpush1.xpose.msra.mxu0 0.0
      %799 = vmatprep.subr.mxu0 0.0
      %800 = vmatpush1.xpose.msra.mxu0 0.0
      %801 = vmatprep.subr.mxu0 0.0
      %802 = vmatpush1.xpose.msra.mxu0 0.0
      %803 = vmatprep.subr.mxu0 0.0
      %804 = vmatpush1.xpose.msra.mxu0 0.0
      %805 = vmatprep.subr.mxu0 0.0
      %806 = vmatpush1.xpose.msra.mxu0 0.0
      %807 = vmatprep.subr.mxu0 0.0
      %808 = vmatpush1.xpose.msra.mxu0 0.0
      %809 = vmatprep.subr.mxu0 0.0
      %810 = vmatpush1.xpose.msra.mxu0 0.0
      %811 = vmatprep.mubr.f32.mxu0 0.0
      %812 = vmatmul.mubr.f32.gmra.mrb[0].mxu0 %v743
      %v813 = vpop.f32.mrb[0].mxu0
      %v814 = vadd.f32 0.0, %v813
      %v815 = vpop.f32.mrb[0].mxu0
      %816 = vdwg.mxu0
      %v817 = vsel %vm246, %v814, -inf
      %818 = vmax.xlane.f32.xlu0 %v817
      %v819 = vpop.xlane.xlu0 %818
      %v820 = vsub.f32 %v814, %v819
      %v821 = vmul.f32 %v820, 1.442695
      %v822 = vpow.pop %v821
      %v823 = vsel %vm246, %v822, 0.0
      %824 = vadd.xlane.f32.xlu0 %v823
      %v825 = vpop.xlane.xlu0 %824
      %v826 = vrcp.pop %v825
      %v827 = vmul.f32 %v822, %v826
      %828 = vrot.lane.b32.xlu0 %v241, 40
      %v829 = vpop.permute.xlu0 %828
      %v832 = vsel %vm246, %v827, 0
      %834 = vmatprep.subr.mxu0 0.0
      %835 = vmatpush1.msra.mxu0 %v829
      %836 = vmatprep.subr.mxu0 0.0
      %837 = vmatpush1.msra.mxu0 0.0
      %838 = vmatprep.subr.mxu0 0.0
      %839 = vmatpush1.msra.mxu0 0.0
      %840 = vmatprep.subr.mxu0 0.0
      %841 = vmatpush1.msra.mxu0 0.0
      %842 = vmatprep.subr.mxu0 0.0
      %843 = vmatpush1.msra.mxu0 0.0
      %844 = vmatprep.subr.mxu0 0.0
      %845 = vmatpush1.msra.mxu0 0.0
      %846 = vmatprep.subr.mxu0 0.0
      %847 = vmatpush1.msra.mxu0 0.0
      %848 = vmatprep.subr.mxu0 0.0
      %849 = vmatpush1.msra.mxu0 0.0
      %850 = vmatprep.subr.mxu0 0.0
      %851 = vmatpush1.msra.mxu0 0.0
      %852 = vmatprep.subr.mxu0 0.0
      %853 = vmatpush1.msra.mxu0 0.0
      %854 = vmatprep.subr.mxu0 0.0
      %855 = vmatpush1.msra.mxu0 0.0
      %856 = vmatprep.subr.mxu0 0.0
      %857 = vmatpush1.msra.mxu0 0.0
      %858 = vmatprep.subr.mxu0 0.0
      %859 = vmatpush1.msra.mxu0 0.0
      %860 = vmatprep.subr.mxu0 0.0
      %861 = vmatpush1.msra.mxu0 0.0
      %862 = vmatprep.subr.mxu0 0.0
      %863 = vmatpush1.msra.mxu0 0.0
      %864 = vmatprep.subr.mxu0 0.0
      %865 = vmatpush1.msra.mxu0 0.0
      %866 = vmatprep.subr.mxu0 0.0
      %867 = vmatpush1.msra.mxu0 0.0
      %868 = vmatprep.subr.mxu0 0.0
      %869 = vmatpush1.msra.mxu0 0.0
      %870 = vmatprep.subr.mxu0 0.0
      %871 = vmatpush1.msra.mxu0 0.0
      %872 = vmatprep.subr.mxu0 0.0
      %873 = vmatpush1.msra.mxu0 0.0
      %874 = vmatprep.subr.mxu0 0.0
      %875 = vmatpush1.msra.mxu0 0.0
      %876 = vmatprep.subr.mxu0 0.0
      %877 = vmatpush1.msra.mxu0 0.0
      %878 = vmatprep.subr.mxu0 0.0
      %879 = vmatpush1.msra.mxu0 0.0
      %880 = vmatprep.subr.mxu0 0.0
      %881 = vmatpush1.msra.mxu0 0.0
      %882 = vmatprep.subr.mxu0 0.0
      %883 = vmatpush1.msra.mxu0 0.0
      %884 = vmatprep.subr.mxu0 0.0
      %885 = vmatpush1.msra.mxu0 0.0
      %886 = vmatprep.subr.mxu0 0.0
      %887 = vmatpush1.msra.mxu0 0.0
      %888 = vmatprep.subr.mxu0 0.0
      %889 = vmatpush1.msra.mxu0 0.0
      %890 = vmatprep.subr.mxu0 0.0
      %891 = vmatpush1.msra.mxu0 0.0
      %892 = vmatprep.subr.mxu0 0.0
      %893 = vmatpush1.msra.mxu0 0.0
      %894 = vmatprep.subr.mxu0 0.0
      %895 = vmatpush1.msra.mxu0 0.0
      %896 = vmatprep.subr.mxu0 0.0
      %897 = vmatpush1.msra.mxu0 0.0
      %898 = vmatprep.mubr.f32.mxu0 0.0
      %899 = vmatmul.mubr.f32.gmra.mrb[0].mxu0 %v832
      %v900 = vpop.f32.mrb[0].mxu0
      %v901 = vadd.f32 0.0, %v900
      %v902 = vpop.f32.mrb[0].mxu0
      %903 = vdwg.mxu0
      %905 = vrot.lane.b32.xlu0 %v571, 8
      %v906 = vpop.permute.xlu0 %905
      %909 = vrot.lane.b32.xlu0 %v736, 16
      %v910 = vpop.permute.xlu0 %909
      %913 = vrot.lane.b32.xlu0 %v901, 24
      %v914 = vpop.permute.xlu0 %913
      %v916 = vsel %vm246, %v406, %v906
      %vm917 = vcmask 130048
      %v918 = vsel %vm917, %v916, %v910
      %vm919 = vcmask 195584
      %v920 = vsel %vm919, %v918, %v914
      %v921 = vld [vmem:[%s2] sm:$0xff]
      %v922 = vld [vmem:[%s2 + $0x8] sm:$0xff]
      %v923 = vld [vmem:[%s2 + $0x10] sm:$0xff]
      %v924 = vld [vmem:[%s2 + $0x18] sm:$0xff]
      %v925 = vld [vmem:[%s3] sm:$0x1]
      %v927 = vlaneseq
      %v928 = vshrl.u32 %v927, 7
      %v929 = vsub.s32 0, %v928
      %v930 = vrot.slane %v925, %v929
      %vm932 = vcmask 261120
      %v934 = vsel %vm932, %v920, 0
      %936 = vmatprep.subr.mxu0 0.0
      %937 = vmatpush1.msra.mxu0 %v921
      %938 = vmatprep.subr.mxu0 0.0
      %939 = vmatpush1.msra.mxu0 %v922
      %940 = vmatprep.subr.mxu0 0.0
      %941 = vmatpush1.msra.mxu0 %v923
      %942 = vmatprep.subr.mxu0 0.0
      %943 = vmatpush1.msra.mxu0 %v924
      %944 = vmatprep.subr.mxu0 0.0
      %945 = vmatpush1.msra.mxu0 0.0
      %946 = vmatprep.subr.mxu0 0.0
      %947 = vmatpush1.msra.mxu0 0.0
      %948 = vmatprep.subr.mxu0 0.0
      %949 = vmatpush1.msra.mxu0 0.0
      %950 = vmatprep.subr.mxu0 0.0
      %951 = vmatpush1.msra.mxu0 0.0
      %952 = vmatprep.subr.mxu0 0.0
      %953 = vmatpush1.msra.mxu0 0.0
      %954 = vmatprep.subr.mxu0 0.0
      %955 = vmatpush1.msra.mxu0 0.0
      %956 = vmatprep.subr.mxu0 0.0
      %957 = vmatpush1.msra.mxu0 0.0
      %958 = vmatprep.subr.mxu0 0.0
      %959 = vmatpush1.msra.mxu0 0.0
      %960 = vmatprep.subr.mxu0 0.0
      %961 = vmatpush1.msra.mxu0 0.0
      %962 = vmatprep.subr.mxu0 0.0
      %963 = vmatpush1.msra.mxu0 0.0
      %964 = vmatprep.subr.mxu0 0.0
      %965 = vmatpush1.msra.mxu0 0.0
      %966 = vmatprep.subr.mxu0 0.0
      %967 = vmatpush1.msra.mxu0 0.0
      %968 = vmatprep.subr.mxu0 0.0
      %969 = vmatpush1.msra.mxu0 0.0
      %970 = vmatprep.subr.mxu0 0.0
      %971 = vmatpush1.msra.mxu0 0.0
      %972 = vmatprep.subr.mxu0 0.0
      %973 = vmatpush1.msra.mxu0 0.0
      %974 = vmatprep.subr.mxu0 0.0
      %975 = vmatpush1.msra.mxu0 0.0
      %976 = vmatprep.subr.mxu0 0.0
      %977 = vmatpush1.msra.mxu0 0.0
      %978 = vmatprep.subr.mxu0 0.0
      %979 = vmatpush1.msra.mxu0 0.0
      %980 = vmatprep.subr.mxu0 0.0
      %981 = vmatpush1.msra.mxu0 0.0
      %982 = vmatprep.subr.mxu0 0.0
      %983 = vmatpush1.msra.mxu0 0.0
      %984 = vmatprep.subr.mxu0 0.0
      %985 = vmatpush1.msra.mxu0 0.0
      %986 = vmatprep.subr.mxu0 0.0
      %987 = vmatpush1.msra.mxu0 0.0
      %988 = vmatprep.subr.mxu0 0.0
      %989 = vmatpush1.msra.mxu0 0.0
      %990 = vmatprep.subr.mxu0 0.0
      %991 = vmatpush1.msra.mxu0 0.0
      %992 = vmatprep.subr.mxu0 0.0
      %993 = vmatpush1.msra.mxu0 0.0
      %994 = vmatprep.subr.mxu0 0.0
      %995 = vmatpush1.msra.mxu0 0.0
      %996 = vmatprep.subr.mxu0 0.0
      %997 = vmatpush1.msra.mxu0 0.0
      %998 = vmatprep.subr.mxu0 0.0
      %999 = vmatpush1.msra.mxu0 0.0
      %1000 = vmatprep.mubr.f32.mxu0 0.0
      %1001 = vmatmul.mubr.f32.gmra.mrb[0].mxu0 %v934
      %v1002 = vpop.f32.mrb[0].mxu0
      %v1003 = vadd.f32 %v930, %v1002
      %v1004 = vpop.f32.mrb[0].mxu0
      %1005 = vdwg.mxu0
      %v1006 = vld [vmem:[%s233] sm:$0xff]
      %v1007 = vadd.f32 %v1003, %v1006
      %1008 = vst.msk [vmem:[%s240] sm:$0xff] %vm932, %v1007
      %p1009 = scmp.lt.s32.totalorder %s19, 1
      %s1010 = scalar_select %p1009, %s19, 1
      %p1011 = scmp.lt.s32.totalorder %s20, 0
      %s1012 = scalar_select %p1011, %s20, 0
      %s1013 = sadd.s32 %s1012, %s1010
      %s1014 = smul.addr %s1013, 8
      %s1015 = scalar_lea.vmem %s4, %s1014
      // Predicated region
      $region37: #{transformer_decoder.11} parent=35 // pred_check
        %p1016 = pneg %p143
      $region38: #{transformer_decoder.11} parent=35 // pred_check_branch
        %1018 = sbr.rel (%p1016) target = $region40
      $region39: #{transformer_decoder.11} parent=35 // pred_region
        _
      $region40: #{transformer_decoder.11} parent=35 // pred_fallthru
        _
    $region36: #{transformer_decoder.11} parent=5 // pred_fallthru
      _
    %p1019 = scmp.le.s32.totalorder 2, %s10
    // Predicated region
    $region41: #{transformer_decoder.11} parent=5 // pred_check
      %p1020 = pneg %p1019
    $region42: #{transformer_decoder.11} parent=5 // pred_check_branch
      %1022 = sbr.rel (%p1020) target = $region44
    $region43: #{transformer_decoder.11} parent=5 // pred_region
      %s1023 = ssub.s32 %s10, 2
      // Predicated region
      $region45: #{transformer_decoder.11} parent=43 // pred_check
        %p1024 = pneg %p149
      $region46: #{transformer_decoder.11} parent=43 // pred_check_branch
        %1026 = sbr.rel (%p1024) target = $region48
      $region47: #{transformer_decoder.11} parent=43 // pred_region
        %p1027 = scmp.lt.s32.totalorder %s21, 1
        %s1028 = scalar_select %p1027, %s21, 1
        %p1029 = scmp.lt.s32.totalorder %s22, 0
        %s1030 = scalar_select %p1029, %s22, 0
        %s1031 = sadd.s32 %s1030, %s1028
        %s1032 = smul.addr %s1031, 8
        %s1033 = scalar_lea.vmem %s4, %s1032
      $region48: #{transformer_decoder.11} parent=43 // pred_fallthru
        _
    $region44: #{transformer_decoder.11} parent=5 // pred_fallthru
      _
  $region6: #{transformer_decoder.11} parent=0 // loop_footer
    %s14 = sadd.s32 1, %s10
  $region7: #{transformer_decoder.11} parent=0 // loop_footer_branch
    %9 = sbr.rel target = $region3
  $region8: #{transformer_decoder.11} parent=0 // loop_exit
    _

// kernel: transformer_decoder.14
$region0: #{transformer_decoder.14}
  #allocation0 [shape = 'u32[]', space=smem, size = 0x4, offset = 0x4, fixed_abs, tag = 'smem constant byte address 0x4 - core index']
  #allocation1 [shape = 'u32[144,128]{1,0:T(1,128)}', space=vmem, size = 0x12000, scoped, tag = 'internal scratch']
  #allocation2 [shape = 'f32[16,32]{1,0:T(8,128)}', space=vmem, size = 0x2000, scoped, tag = 'scratch operand']
  #allocation3 [shape = 'f32[16,32]{1,0:T(8,128)}', space=vmem, size = 0x2000, scoped, tag = 'scratch operand']
  %s0 = inlined_call_operand.vmem [shape: f32[16,32], index: 0, kind: input, shape index: {}]
  %s1 = inlined_call_operand.vmem [shape: f32[1,32], index: 1, kind: input, shape index: {}]
  %s2 = inlined_call_operand.vmem [shape: f32[1,32], index: 2, kind: input, shape index: {}]
  %s3 = inlined_call_operand.vmem [shape: f32[32,128], index: 3, kind: input, shape index: {}]
  %s4 = inlined_call_operand.vmem [shape: f32[1,128], index: 4, kind: input, shape index: {}]
  %s5 = inlined_call_operand.vmem [shape: f32[128,32], index: 5, kind: input, shape index: {}]
  %s6 = inlined_call_operand.vmem [shape: f32[1,32], index: 6, kind: input, shape index: {}]
  %s7 = inlined_call_operand.vmem [shape: f32[16,32], index: 7, kind: output, shape index: {}]
  %s8 = sld [smem:[#allocation0]]
  $region46: #{transformer_decoder.14} parent=0
    _
  %s10 = ssub.s32 1, %s8
  %s11 = scalar_select 0, %s10, %s8
  // Predicated region
  $region2: #{transformer_decoder.14} parent=0 // pred_check
    _
  $region3: #{transformer_decoder.14} parent=0 // pred_check_branch
    %13 = sbr.rel (0) target = $region5
  $region4: #{transformer_decoder.14} parent=0 // pred_region
    _
  $region5: #{transformer_decoder.14} parent=0 // pred_fallthru
    _
  // Predicated region
  $region6: #{transformer_decoder.14} parent=0 // pred_check
    _
  $region7: #{transformer_decoder.14} parent=0 // pred_check_branch
    %15 = sbr.rel (0) target = $region9
  $region8: #{transformer_decoder.14} parent=0 // pred_region
    _
  $region9: #{transformer_decoder.14} parent=0 // pred_fallthru
    _
  // Predicated region
  $region10: #{transformer_decoder.14} parent=0 // pred_check
    _
  $region11: #{transformer_decoder.14} parent=0 // pred_check_branch
    %17 = sbr.rel (0) target = $region13
  $region12: #{transformer_decoder.14} parent=0 // pred_region
    _
  $region13: #{transformer_decoder.14} parent=0 // pred_fallthru
    _
  // Predicated region
  $region14: #{transformer_decoder.14} parent=0 // pred_check
    _
  $region15: #{transformer_decoder.14} parent=0 // pred_check_branch
    %19 = sbr.rel (0) target = $region17
  $region16: #{transformer_decoder.14} parent=0 // pred_region
    _
  $region17: #{transformer_decoder.14} parent=0 // pred_fallthru
    _
  // Predicated region
  $region18: #{transformer_decoder.14} parent=0 // pred_check
    _
  $region19: #{transformer_decoder.14} parent=0 // pred_check_branch
    %21 = sbr.rel (0) target = $region21
  $region20: #{transformer_decoder.14} parent=0 // pred_region
    _
  $region21: #{transformer_decoder.14} parent=0 // pred_fallthru
    _
  // Predicated region
  $region22: #{transformer_decoder.14} parent=0 // pred_check
    _
  $region23: #{transformer_decoder.14} parent=0 // pred_check_branch
    %23 = sbr.rel (0) target = $region25
  $region24: #{transformer_decoder.14} parent=0 // pred_region
    _
  $region25: #{transformer_decoder.14} parent=0 // pred_fallthru
    _
  // Predicated region
  $region26: #{transformer_decoder.14} parent=0 // pred_check
    _
  $region27: #{transformer_decoder.14} parent=0 // pred_check_branch
    %25 = sbr.rel (0) target = $region29
  $region28: #{transformer_decoder.14} parent=0 // pred_region
    _
  $region29: #{transformer_decoder.14} parent=0 // pred_fallthru
    _
  %p26 = scmp.eq.s32.totalorder 0, 0
  // Predicated region
  $region30: #{transformer_decoder.14} parent=0 // pred_check
    %p27 = pneg %p26
  $region31: #{transformer_decoder.14} parent=0 // pred_check_branch
    %29 = sbr.rel (%p27) target = $region33
  $region32: #{transformer_decoder.14} parent=0 // pred_region
    %v30 = vld [vmem:[%s0] sm:$0xff]
    %v31 = vld [vmem:[%s0 + $0x8] sm:$0xff]
    %vm32 = vcmask 261120
    %v33 = vsel %vm32, %v30, 0.0
    %34 = vadd.xlane.f32.xlu0 %v33
    %v35 = vpop.xlane.xlu0 %34
    %v36 = vsel %vm32, %v31, 0.0
    %37 = vadd.xlane.f32.xlu0 %v36
    %v38 = vpop.xlane.xlu0 %37
    %v39 = vrcp.pop 32.0
    %v40 = vmul.f32 %v35, %v39
    %v41 = vmul.f32 %v38, %v39
    %v42 = vsub.f32 %v30, %v40
    %v43 = vsub.f32 %v31, %v41
    %v44 = vmul.f32 %v42, %v42
    %v45 = vmul.f32 %v43, %v43
    %v46 = vsel %vm32, %v44, 0.0
    %47 = vadd.xlane.f32.xlu0 %v46
    %v48 = vpop.xlane.xlu0 %47
    %v49 = vsel %vm32, %v45, 0.0
    %50 = vadd.xlane.f32.xlu0 %v49
    %v51 = vpop.xlane.xlu0 %50
    %v52 = vmul.f32 %v48, %v39
    %v53 = vmul.f32 %v51, %v39
    %v54 = vadd.f32 %v52, 1e-05
    %v55 = vadd.f32 %v53, 1e-05
    %v56 = vrsqrt.pop %v54
    %v57 = vrsqrt.pop %v55
    %v58 = vmul.f32 %v42, %v56
    %v59 = vmul.f32 %v43, %v57
    %v60 = vld [vmem:[%s1] sm:$0x1]
    %v62 = vlaneseq
    %v63 = vshrl.u32 %v62, 7
    %v64 = vsub.s32 0, %v63
    %v65 = vrot.slane %v60, %v64
    %v67 = vmul.f32 %v58, %v65
    %v68 = vmul.f32 %v59, %v65
    %v69 = vld [vmem:[%s2] sm:$0x1]
    %v71 = vlaneseq
    %v72 = vshrl.u32 %v71, 7
    %v73 = vsub.s32 0, %v72
    %v74 = vrot.slane %v69, %v73
    %v76 = vadd.f32 %v67, %v74
    %v77 = vadd.f32 %v68, %v74
    %78 = vst.msk [vmem:[#allocation2] sm:$0xff] %vm32, %v76
    %79 = vst.msk [vmem:[#allocation2 + $0x8] sm:$0xff] %vm32, %v77
    %v80 = vld [vmem:[%s6] sm:$0x1]
    %v82 = vlaneseq
    %v83 = vshrl.u32 %v82, 7
    %v84 = vsub.s32 0, %v83
    %v85 = vrot.slane %v80, %v84
    %v87 = vadd.f32 %v30, %v85
    %v88 = vadd.f32 %v31, %v85
    %89 = vst.msk [vmem:[#allocation3] sm:$0xff] %vm32, %v87
    %90 = vst.msk [vmem:[#allocation3 + $0x8] sm:$0xff] %vm32, %v88
  $region33: #{transformer_decoder.14} parent=0 // pred_fallthru
    _
  %v91 = vld [vmem:[#allocation2] sm:$0xff]
  %v92 = vld [vmem:[#allocation2 + $0x8] sm:$0xff]
  %v93 = vld [vmem:[%s3] sm:$0xff]
  %v94 = vld [vmem:[%s3 + $0x8] sm:$0xff]
  %v95 = vld [vmem:[%s3 + $0x10] sm:$0xff]
  %v96 = vld [vmem:[%s3 + $0x18] sm:$0xff]
  %v97 = vld [vmem:[%s4] sm:$0x1]
  %v99 = vlaneseq
  %v100 = vshrl.u32 %v99, 7
  %v101 = vsub.s32 0, %v100
  %v102 = vrot.slane %v97, %v101
  %vm104 = vcmask 261120
  %v106 = vsel %vm104, %v91, 0
  %v109 = vsel %vm104, %v92, 0
  %111 = vmatprep.subr.mxu0 0.0
  %112 = vmatpush1.msra.mxu0 %v93
  %113 = vmatprep.subr.mxu0 0.0
  %114 = vmatpush1.msra.mxu0 %v94
  %115 = vmatprep.subr.mxu0 0.0
  %116 = vmatpush1.msra.mxu0 %v95
  %117 = vmatprep.subr.mxu0 0.0
  %118 = vmatpush1.msra.mxu0 %v96
  %119 = vmatprep.subr.mxu0 0.0
  %120 = vmatpush1.msra.mxu0 0.0
  %121 = vmatprep.subr.mxu0 0.0
  %122 = vmatpush1.msra.mxu0 0.0
  %123 = vmatprep.subr.mxu0 0.0
  %124 = vmatpush1.msra.mxu0 0.0
  %125 = vmatprep.subr.mxu0 0.0
  %126 = vmatpush1.msra.mxu0 0.0
  %127 = vmatprep.subr.mxu0 0.0
  %128 = vmatpush1.msra.mxu0 0.0
  %129 = vmatprep.subr.mxu0 0.0
  %130 = vmatpush1.msra.mxu0 0.0
  %131 = vmatprep.subr.mxu0 0.0
  %132 = vmatpush1.msra.mxu0 0.0
  %133 = vmatprep.subr.mxu0 0.0
  %134 = vmatpush1.msra.mxu0 0.0
  %135 = vmatprep.subr.mxu0 0.0
  %136 = vmatpush1.msra.mxu0 0.0
  %137 = vmatprep.subr.mxu0 0.0
  %138 = vmatpush1.msra.mxu0 0.0
  %139 = vmatprep.subr.mxu0 0.0
  %140 = vmatpush1.msra.mxu0 0.0
  %141 = vmatprep.subr.mxu0 0.0
  %142 = vmatpush1.msra.mxu0 0.0
  %143 = vmatprep.subr.mxu0 0.0
  %144 = vmatpush1.msra.mxu0 0.0
  %145 = vmatprep.subr.mxu0 0.0
  %146 = vmatpush1.msra.mxu0 0.0
  %147 = vmatprep.subr.mxu0 0.0
  %148 = vmatpush1.msra.mxu0 0.0
  %149 = vmatprep.subr.mxu0 0.0
  %150 = vmatpush1.msra.mxu0 0.0
  %151 = vmatprep.subr.mxu0 0.0
  %152 = vmatpush1.msra.mxu0 0.0
  %153 = vmatprep.subr.mxu0 0.0
  %154 = vmatpush1.msra.mxu0 0.0
  %155 = vmatprep.subr.mxu0 0.0
  %156 = vmatpush1.msra.mxu0 0.0
  %157 = vmatprep.subr.mxu0 0.0
  %158 = vmatpush1.msra.mxu0 0.0
  %159 = vmatprep.subr.mxu0 0.0
  %160 = vmatpush1.msra.mxu0 0.0
  %161 = vmatprep.subr.mxu0 0.0
  %162 = vmatpush1.msra.mxu0 0.0
  %163 = vmatprep.subr.mxu0 0.0
  %164 = vmatpush1.msra.mxu0 0.0
  %165 = vmatprep.subr.mxu0 0.0
  %166 = vmatpush1.msra.mxu0 0.0
  %167 = vmatprep.subr.mxu0 0.0
  %168 = vmatpush1.msra.mxu0 0.0
  %169 = vmatprep.subr.mxu0 0.0
  %170 = vmatpush1.msra.mxu0 0.0
  %171 = vmatprep.subr.mxu0 0.0
  %172 = vmatpush1.msra.mxu0 0.0
  %173 = vmatprep.subr.mxu0 0.0
  %174 = vmatpush1.msra.mxu0 0.0
  %175 = vmatprep.mubr.f32.mxu0 0.0
  %176 = vmatmul.mubr.f32.gmra.mrb[0].mxu0 %v106
  %v177 = vpop.f32.mrb[0].mxu0
  %v178 = vadd.f32 %v102, %v177
  %v179 = vpop.f32.mrb[0].mxu0
  %180 = vmatprep.mubr.f32.mxu0 0.0
  %181 = vmatmul.mubr.f32.gmra.mrb[0].mxu0 %v109
  %v182 = vpop.f32.mrb[0].mxu0
  %v183 = vadd.f32 %v102, %v182
  %v184 = vpop.f32.mrb[0].mxu0
  %185 = vdwg.mxu0
  %v186 = vmul.f32 %v178, 1.702
  %v187 = vmul.f32 %v183, 1.702
  %v188 = vxor.u32 %v186, 2147483648
  %v189 = vxor.u32 %v187, 2147483648
  %v190 = vmul.f32 %v188, 1.442695
  %v191 = vpow.pop %v190
  %v192 = vmul.f32 %v189, 1.442695
  %v193 = vpow.pop %v192
  %v194 = vadd.f32 %v191, 1.0
  %v195 = vadd.f32 %v193, 1.0
  %v196 = vrcp.pop %v194
  %v197 = vmul.f32 1.0, %v196
  %v198 = vrcp.pop %v195
  %v199 = vmul.f32 1.0, %v198
  %v200 = vmul.f32 %v178, %v197
  %v201 = vmul.f32 %v183, %v199
  %v202 = vld [vmem:[#allocation3] sm:$0xff]
  %v203 = vld [vmem:[#allocation3 + $0x8] sm:$0xff]
  %v204 = vld [vmem:[%s5] sm:$0xff]
  %v205 = vld [vmem:[%s5 + $0x8] sm:$0xff]
  %v206 = vld [vmem:[%s5 + $0x10] sm:$0xff]
  %v207 = vld [vmem:[%s5 + $0x18] sm:$0xff]
  %v208 = vld [vmem:[%s5 + $0x20] sm:$0xff]
  %v209 = vld [vmem:[%s5 + $0x28] sm:$0xff]
  %v210 = vld [vmem:[%s5 + $0x30] sm:$0xff]
  %v211 = vld [vmem:[%s5 + $0x38] sm:$0xff]
  %v212 = vld [vmem:[%s5 + $0x40] sm:$0xff]
  %v213 = vld [vmem:[%s5 + $0x48] sm:$0xff]
  %v214 = vld [vmem:[%s5 + $0x50] sm:$0xff]
  %v215 = vld [vmem:[%s5 + $0x58] sm:$0xff]
  %v216 = vld [vmem:[%s5 + $0x60] sm:$0xff]
  %v217 = vld [vmem:[%s5 + $0x68] sm:$0xff]
  %v218 = vld [vmem:[%s5 + $0x70] sm:$0xff]
  %v219 = vld [vmem:[%s5 + $0x78] sm:$0xff]
  %220 = vmatprep.subr.mxu0 0.0
  %221 = vmatpush1.msra.mxu0 %v204
  %222 = vmatprep.subr.mxu0 0.0
  %223 = vmatpush1.msra.mxu0 %v205
  %224 = vmatprep.subr.mxu0 0.0
  %225 = vmatpush1.msra.mxu0 %v206
  %226 = vmatprep.subr.mxu0 0.0
  %227 = vmatpush1.msra.mxu0 %v207
  %228 = vmatprep.subr.mxu0 0.0
  %229 = vmatpush1.msra.mxu0 %v208
  %230 = vmatprep.subr.mxu0 0.0
  %231 = vmatpush1.msra.mxu0 %v209
  %232 = vmatprep.subr.mxu0 0.0
  %233 = vmatpush1.msra.mxu0 %v210
  %234 = vmatprep.subr.mxu0 0.0
  %235 = vmatpush1.msra.mxu0 %v211
  %236 = vmatprep.subr.mxu0 0.0
  %237 = vmatpush1.msra.mxu0 %v212
  %238 = vmatprep.subr.mxu0 0.0
  %239 = vmatpush1.msra.mxu0 %v213
  %240 = vmatprep.subr.mxu0 0.0
  %241 = vmatpush1.msra.mxu0 %v214
  %242 = vmatprep.subr.mxu0 0.0
  %243 = vmatpush1.msra.mxu0 %v215
  %244 = vmatprep.subr.mxu0 0.0
  %245 = vmatpush1.msra.mxu0 %v216
  %246 = vmatprep.subr.mxu0 0.0
  %247 = vmatpush1.msra.mxu0 %v217
  %248 = vmatprep.subr.mxu0 0.0
  %249 = vmatpush1.msra.mxu0 %v218
  %250 = vmatprep.subr.mxu0 0.0
  %251 = vmatpush1.msra.mxu0 %v219
  %252 = vmatprep.subr.mxu0 0.0
  %253 = vmatpush1.msra.mxu0 0.0
  %254 = vmatprep.subr.mxu0 0.0
  %255 = vmatpush1.msra.mxu0 0.0
  %256 = vmatprep.subr.mxu0 0.0
  %257 = vmatpush1.msra.mxu0 0.0
  %258 = vmatprep.subr.mxu0 0.0
  %259 = vmatpush1.msra.mxu0 0.0
  %260 = vmatprep.subr.mxu0 0.0
  %261 = vmatpush1.msra.mxu0 0.0
  %262 = vmatprep.subr.mxu0 0.0
  %263 = vmatpush1.msra.mxu0 0.0
  %264 = vmatprep.subr.mxu0 0.0
  %265 = vmatpush1.msra.mxu0 0.0
  %266 = vmatprep.subr.mxu0 0.0
  %267 = vmatpush1.msra.mxu0 0.0
  %268 = vmatprep.subr.mxu0 0.0
  %269 = vmatpush1.msra.mxu0 0.0
  %270 = vmatprep.subr.mxu0 0.0
  %271 = vmatpush1.msra.mxu0 0.0
  %272 = vmatprep.subr.mxu0 0.0
  %273 = vmatpush1.msra.mxu0 0.0
  %274 = vmatprep.subr.mxu0 0.0
  %275 = vmatpush1.msra.mxu0 0.0
  %276 = vmatprep.subr.mxu0 0.0
  %277 = vmatpush1.msra.mxu0 0.0
  %278 = vmatprep.subr.mxu0 0.0
  %279 = vmatpush1.msra.mxu0 0.0
  %280 = vmatprep.subr.mxu0 0.0
  %281 = vmatpush1.msra.mxu0 0.0
  %282 = vmatprep.subr.mxu0 0.0
  %283 = vmatpush1.msra.mxu0 0.0
  %284 = vmatprep.mubr.f32.mxu0 0.0
  %285 = vmatmul.mubr.f32.gmra.mrb[0].mxu0 %v200
  %v286 = vpop.f32.mrb[0].mxu0
  %v287 = vadd.f32 0.0, %v286
  %v288 = vpop.f32.mrb[0].mxu0
  %289 = vmatprep.mubr.f32.mxu0 0.0
  %290 = vmatmul.mubr.f32.gmra.mrb[0].mxu0 %v201
  %v291 = vpop.f32.mrb[0].mxu0
  %v292 = vadd.f32 0.0, %v291
  %v293 = vpop.f32.mrb[0].mxu0
  %294 = vdwg.mxu0
  %v295 = vadd.f32 %v202, %v287
  %v296 = vadd.f32 %v203, %v292
  %297 = vst.msk [vmem:[#allocation3] sm:$0xff] %vm104, %v295
  %298 = vst.msk [vmem:[#allocation3 + $0x8] sm:$0xff] %vm104, %v296
  // Predicated region
  $region34: #{transformer_decoder.14} parent=0 // pred_check
    %p299 = pneg %p26
  $region35: #{transformer_decoder.14} parent=0 // pred_check_branch
    %301 = sbr.rel (%p299) target = $region37
  $region36: #{transformer_decoder.14} parent=0 // pred_region
    %v302 = vld [vmem:[#allocation3] sm:$0xff]
    %v303 = vld [vmem:[#allocation3 + $0x8] sm:$0xff]
    %304 = vst.msk [vmem:[%s7] sm:$0xff] %vm104, %v302
    %305 = vst.msk [vmem:[%s7 + $0x8] sm:$0xff] %vm104, %v303
  $region37: #{transformer_decoder.14} parent=0 // pred_fallthru
    _
  // Predicated region
  $region38: #{transformer_decoder.14} parent=0 // pred_check
    _
  $region39: #{transformer_decoder.14} parent=0 // pred_check_branch
    %307 = sbr.rel (0) target = $region41
  $region40: #{transformer_decoder.14} parent=0 // pred_region
    _
  $region41: #{transformer_decoder.14} parent=0 // pred_fallthru
    _
  // Predicated region
  $region42: #{transformer_decoder.14} parent=0 // pred_check
    _
  $region43: #{transformer_decoder.14} parent=0 // pred_check_branch
    %309 = sbr.rel (0) target = $region45
  $region44: #{transformer_decoder.14} parent=0 // pred_region
    _
  $region45: #{transformer_decoder.14} parent=0 // pred_fallthru
    _

</llo_original>
